<compile_context>
chip_gen: v7x
topology: tpu7x:2x2x1
jax: 0.10.0
libtpu: 0.0.40
codegen_flags: <defaults>
</compile_context>

<pallas_src>
import functools

import jax
import jax.numpy as jnp
from jax.experimental import pallas as pl
from jax.experimental.pallas import tpu as pltpu


def optical_kernel(steep_ref, phase_ref, src_re_ref, src_im_ref,
                   f_re_ref, f_im_ref, f_sum_ref,
                   out_re_ref, out_im_ref):
    """Fused SLM modulation + centered 2D DFT (FT lens) for one (N, N) field."""
    steep = steep_ref[0]

    # --- SLM sigmoid phase modulation (num_terms=1, spacing=1, mode_parity='odd') ---
    # sigmoid(x) = 0.5*(1 + tanh(x/2)) -> single EUP transcendental.
    phase = phase_ref[...]
    mod = (0.5 * jnp.pi) * (1.0 + jnp.tanh((0.5 * steep) * (phase - 0.5)))
    c = jnp.cos(mod)
    s = jnp.sin(mod)
    sr = src_re_ref[...]
    si = src_im_ref[...]
    m_re = sr * c - si * s          # (sr + i*si) * exp(i*mod)
    m_im = sr * s + si * c
    m_re_b = m_re.astype(jnp.bfloat16)
    m_im_b = m_im.astype(jnp.bfloat16)
    m_sum_b = (m_re + m_im).astype(jnp.bfloat16)

    Fr = f_re_ref[...]              # bf16, scaled by sqrt(dx^2/(lambda*f))
    Fi = f_im_ref[...]
    Fs = f_sum_ref[...]             # Fr + Fi (precomputed in f32, cast once at setup)

    # --- Stage 1: T = F @ M  (Gauss 3-mult complex matmul, bf16 in / f32 acc) ---
    t1 = jnp.dot(Fr, m_re_b, preferred_element_type=jnp.float32)
    t2 = jnp.dot(Fi, m_im_b, preferred_element_type=jnp.float32)
    t3 = jnp.dot(Fs, m_sum_b, preferred_element_type=jnp.float32)
    t_re = t1 - t2
    t_im = t3 - t1 - t2

    t_re_b = t_re.astype(jnp.bfloat16)
    t_im_b = t_im.astype(jnp.bfloat16)
    t_sum_b = (t_re + t_im).astype(jnp.bfloat16)

    # --- Stage 2: Y = T @ F  (F symmetric) ---
    u1 = jnp.dot(t_re_b, Fr, preferred_element_type=jnp.float32)
    u2 = jnp.dot(t_im_b, Fi, preferred_element_type=jnp.float32)
    u3 = jnp.dot(t_sum_b, Fs, preferred_element_type=jnp.float32)
    y_re = u1 - u2
    y_im = u3 - u1 - u2

    # --- prefactor dx^2/(i*lambda*f) = -i * mag; |mag| already folded into F, so
    #     out = -i * Y  ->  out_re = y_im, out_im = -y_re (no extra VPU scaling pass).
    out_re_ref[...] = y_im
    out_im_ref[...] = -y_re


@functools.partial(jax.jit, static_argnames=("n",))
def optical_forward(source_re, source_im, slm_phase, f_re_b, f_im_b, f_sum_b, steep, *, n):
    b = source_re.shape[0]
    field_spec = pl.BlockSpec((None, n, n), lambda i: (i, 0, 0))   # per-batch tile
    const_spec = pl.BlockSpec((n, n), lambda i: (0, 0))            # resident across grid
    out_re, out_im = pl.pallas_call(
        optical_kernel,
        out_shape=(jax.ShapeDtypeStruct((b, n, n), jnp.float32),
                   jax.ShapeDtypeStruct((b, n, n), jnp.float32)),
        grid=(b,),
        in_specs=[
            pl.BlockSpec(memory_space=pltpu.MemorySpace.SMEM),  # steepness scalar
            const_spec,   # shared SLM phase
            field_spec,   # source real
            field_spec,   # source imag
            const_spec,   # DFT matrix real (bf16, prefactor-folded)
            const_spec,   # DFT matrix imag (bf16, prefactor-folded)
            const_spec,   # DFT matrix re+im (bf16, for Gauss trick)
        ],
        out_specs=(field_spec, field_spec),
        compiler_params=pltpu.CompilerParams(dimension_semantics=("parallel",)),
    )(steep, slm_phase, source_re, source_im, f_re_b, f_im_b, f_sum_b)
    return jax.lax.complex(out_re, out_im)


def make_optical_system(n, wavelength, delta_x, focal_length):
    """Deterministic parameter / constant setup (plain JAX glue)."""
    # Centered DFT matrix: F[k, m] = exp(-2*pi*i*(k - n/2)*(m - n/2)/n) (symmetric).
    # Equals fftshift(fft2(ifftshift(.))) exactly when n % 4 == 0.
    assert n % 4 == 0, "centered-DFT construction requires n % 4 == 0"
    idx = jnp.arange(n, dtype=jnp.float32) - n // 2
    ang = -2.0 * jnp.pi * jnp.outer(idx, idx) / n

    # FT-lens prefactor magnitude dx^2/(lambda*f); sqrt folded into each DFT stage
    # so no per-element output scaling is needed in the kernel.
    mag = (delta_x ** 2) / (wavelength * focal_length)
    root = jnp.sqrt(jnp.float32(mag))
    f_re = root * jnp.cos(ang)
    f_im = root * jnp.sin(ang)
    f_re_b = f_re.astype(jnp.bfloat16)
    f_im_b = f_im.astype(jnp.bfloat16)
    f_sum_b = (f_re + f_im).astype(jnp.bfloat16)

    # SLM learnable phase, deterministic init (blazed-grating-like pattern + noise)
    key = jax.random.PRNGKey(0)
    x = jnp.arange(n, dtype=jnp.float32) / n
    grating = jnp.tile(x[None, :], (n, 1))
    noise = 0.05 * jax.random.uniform(key, (n, n), dtype=jnp.float32)
    slm_phase = (grating + noise).astype(jnp.float32)

    return f_re_b, f_im_b, f_sum_b, slm_phase


if __name__ == "__main__":
    N = 128                       # simulation grid (tile-aligned)
    B = 2                         # batch of source fields processed per pallas_call
    wavelength = 1.55e-6
    delta_x = 1.0e-5
    focal_length = 0.1
    epoch = 0
    steepness = 2.0 + epoch / 200.0

    f_re_b, f_im_b, f_sum_b, slm_phase = make_optical_system(
        N, wavelength, delta_x, focal_length)

    # Two deterministic Gaussian source beams (complex, zero imaginary part).
    coords = (jnp.arange(N, dtype=jnp.float32) - N // 2) * delta_x
    X, Y = jnp.meshgrid(coords, coords, indexing="xy")
    w0 = 30 * delta_x
    g1 = jnp.exp(-(X ** 2 + Y ** 2) / (w0 ** 2))
    g2 = jnp.exp(-(((X - 10 * delta_x) ** 2) + Y ** 2) / (w0 ** 2))
    source_re = jnp.stack([g1, g2]).astype(jnp.float32)
    source_im = jnp.zeros((B, N, N), dtype=jnp.float32)

    steep = jnp.array([steepness], dtype=jnp.float32)

    out_field = optical_forward(source_re, source_im, slm_phase,
                                f_re_b, f_im_b, f_sum_b, steep, n=N)
    out_field = jax.block_until_ready(out_field)

    assert out_field.shape == (B, N, N) and out_field.dtype == jnp.complex64
    assert bool(jnp.all(jnp.isfinite(jnp.abs(out_field))))
    print("KERNEL_OK")
</pallas_src>

<mosaic_0001>
module attributes {stable_mosaic.version = 11 : i64} {
  func.func @optical_kernel(%arg0: i32, %arg1: memref<1xf32, #tpu.memory_space<smem>>, %arg2: memref<128x128xf32, #tpu.memory_space<vmem>>, %arg3: memref<1x128x128xf32, #tpu.memory_space<vmem>>, %arg4: memref<1x128x128xf32, #tpu.memory_space<vmem>>, %arg5: memref<128x128xbf16, #tpu.memory_space<vmem>>, %arg6: memref<128x128xbf16, #tpu.memory_space<vmem>>, %arg7: memref<128x128xbf16, #tpu.memory_space<vmem>>, %arg8: memref<1x128x128xf32, #tpu.memory_space<vmem>>, %arg9: memref<1x128x128xf32, #tpu.memory_space<vmem>>) attributes {dimension_semantics = [#tpu.dimension_semantics<parallel>], iteration_bounds = array<i64: 2>, scalar_prefetch = 0 : i64, scratch_operands = 0 : i64, tpu.core_type = #tpu.core_type<tc>, window_params = [{transform_indices = @transform_0, window_bounds = array<i64: 1>}, {pipeline_mode = #tpu.pipeline_mode<synchronous>, transform_indices = @transform_1, window_bounds = array<i64: 128, 128>}, {transform_indices = @transform_2, window_bounds = array<i64: 1, 128, 128>}, {transform_indices = @transform_3, window_bounds = array<i64: 1, 128, 128>}, {pipeline_mode = #tpu.pipeline_mode<synchronous>, transform_indices = @transform_4, window_bounds = array<i64: 128, 128>}, {pipeline_mode = #tpu.pipeline_mode<synchronous>, transform_indices = @transform_5, window_bounds = array<i64: 128, 128>}, {pipeline_mode = #tpu.pipeline_mode<synchronous>, transform_indices = @transform_6, window_bounds = array<i64: 128, 128>}, {transform_indices = @transform_7, window_bounds = array<i64: 1, 128, 128>}, {transform_indices = @transform_8, window_bounds = array<i64: 1, 128, 128>}]} {
    %c0 = arith.constant 0 : index
    %0 = memref.load %arg1[%c0] : memref<1xf32, #tpu.memory_space<smem>>
    %c0_0 = arith.constant 0 : index
    %c0_1 = arith.constant 0 : index
    %1 = vector.load %arg2[%c0_0, %c0_1] : memref<128x128xf32, #tpu.memory_space<vmem>>, vector<128x128xf32>
    %cst = arith.constant 5.000000e-01 : f32
    %2 = arith.mulf %cst, %0 : f32
    %cst_2 = arith.constant 5.000000e-01 : f32
    %3 = vector.broadcast %cst_2 : f32 to vector<128x128xf32>
    %4 = arith.subf %1, %3 : vector<128x128xf32>
    %5 = vector.broadcast %2 : f32 to vector<128x128xf32>
    %6 = arith.mulf %5, %4 : vector<128x128xf32>
    %7 = math.tanh %6 : vector<128x128xf32>
    %cst_3 = arith.constant 1.000000e+00 : f32
    %8 = vector.broadcast %cst_3 : f32 to vector<128x128xf32>
    %9 = arith.addf %8, %7 : vector<128x128xf32>
    %cst_4 = arith.constant 1.57079637 : f32
    %10 = vector.broadcast %cst_4 : f32 to vector<128x128xf32>
    %11 = arith.mulf %10, %9 : vector<128x128xf32>
    %12 = math.cos %11 : vector<128x128xf32>
    %13 = math.sin %11 : vector<128x128xf32>
    %c0_5 = arith.constant 0 : index
    %c0_6 = arith.constant 0 : index
    %c0_7 = arith.constant 0 : index
    %14 = vector.load %arg3[%c0_5, %c0_6, %c0_7] : memref<1x128x128xf32, #tpu.memory_space<vmem>>, vector<1x128x128xf32>
    %15 = vector.shape_cast %14 : vector<1x128x128xf32> to vector<128x128xf32>
    %c0_8 = arith.constant 0 : index
    %c0_9 = arith.constant 0 : index
    %c0_10 = arith.constant 0 : index
    %16 = vector.load %arg4[%c0_8, %c0_9, %c0_10] : memref<1x128x128xf32, #tpu.memory_space<vmem>>, vector<1x128x128xf32>
    %17 = vector.shape_cast %16 : vector<1x128x128xf32> to vector<128x128xf32>
    %18 = arith.mulf %15, %12 : vector<128x128xf32>
    %19 = arith.mulf %17, %13 : vector<128x128xf32>
    %20 = arith.subf %18, %19 : vector<128x128xf32>
    %21 = arith.mulf %15, %13 : vector<128x128xf32>
    %22 = arith.mulf %17, %12 : vector<128x128xf32>
    %23 = arith.addf %21, %22 : vector<128x128xf32>
    %24 = arith.truncf %20 : vector<128x128xf32> to vector<128x128xbf16>
    %25 = arith.truncf %23 : vector<128x128xf32> to vector<128x128xbf16>
    %26 = arith.addf %20, %23 : vector<128x128xf32>
    %27 = arith.truncf %26 : vector<128x128xf32> to vector<128x128xbf16>
    %c0_11 = arith.constant 0 : index
    %c0_12 = arith.constant 0 : index
    %28 = vector.load %arg5[%c0_11, %c0_12] : memref<128x128xbf16, #tpu.memory_space<vmem>>, vector<128x128xbf16>
    %c0_13 = arith.constant 0 : index
    %c0_14 = arith.constant 0 : index
    %29 = vector.load %arg6[%c0_13, %c0_14] : memref<128x128xbf16, #tpu.memory_space<vmem>>, vector<128x128xbf16>
    %c0_15 = arith.constant 0 : index
    %c0_16 = arith.constant 0 : index
    %30 = vector.load %arg7[%c0_15, %c0_16] : memref<128x128xbf16, #tpu.memory_space<vmem>>, vector<128x128xbf16>
    %cst_17 = arith.constant dense<0.000000e+00> : vector<128x128xf32>
    %31 = tpu.matmul %28, %24, %cst_17 {dimension_numbers = #tpu.dot_dimension_numbers<[1], [0], [0], [1], [0, 0, 1, 1], [], []>} : vector<128x128xbf16>, vector<128x128xbf16>, vector<128x128xf32> -> vector<128x128xf32>
    %cst_18 = arith.constant dense<0.000000e+00> : vector<128x128xf32>
    %32 = tpu.matmul %29, %25, %cst_18 {dimension_numbers = #tpu.dot_dimension_numbers<[1], [0], [0], [1], [0, 0, 1, 1], [], []>} : vector<128x128xbf16>, vector<128x128xbf16>, vector<128x128xf32> -> vector<128x128xf32>
    %cst_19 = arith.constant dense<0.000000e+00> : vector<128x128xf32>
    %33 = tpu.matmul %30, %27, %cst_19 {dimension_numbers = #tpu.dot_dimension_numbers<[1], [0], [0], [1], [0, 0, 1, 1], [], []>} : vector<128x128xbf16>, vector<128x128xbf16>, vector<128x128xf32> -> vector<128x128xf32>
    %34 = arith.subf %31, %32 : vector<128x128xf32>
    %35 = arith.subf %33, %31 : vector<128x128xf32>
    %36 = arith.subf %35, %32 : vector<128x128xf32>
    %37 = arith.truncf %34 : vector<128x128xf32> to vector<128x128xbf16>
    %38 = arith.truncf %36 : vector<128x128xf32> to vector<128x128xbf16>
    %39 = arith.addf %34, %36 : vector<128x128xf32>
    %40 = arith.truncf %39 : vector<128x128xf32> to vector<128x128xbf16>
    %cst_20 = arith.constant dense<0.000000e+00> : vector<128x128xf32>
    %41 = tpu.matmul %37, %28, %cst_20 {dimension_numbers = #tpu.dot_dimension_numbers<[1], [0], [0], [1], [0, 0, 1, 1], [], []>} : vector<128x128xbf16>, vector<128x128xbf16>, vector<128x128xf32> -> vector<128x128xf32>
    %cst_21 = arith.constant dense<0.000000e+00> : vector<128x128xf32>
    %42 = tpu.matmul %38, %29, %cst_21 {dimension_numbers = #tpu.dot_dimension_numbers<[1], [0], [0], [1], [0, 0, 1, 1], [], []>} : vector<128x128xbf16>, vector<128x128xbf16>, vector<128x128xf32> -> vector<128x128xf32>
    %cst_22 = arith.constant dense<0.000000e+00> : vector<128x128xf32>
    %43 = tpu.matmul %40, %30, %cst_22 {dimension_numbers = #tpu.dot_dimension_numbers<[1], [0], [0], [1], [0, 0, 1, 1], [], []>} : vector<128x128xbf16>, vector<128x128xbf16>, vector<128x128xf32> -> vector<128x128xf32>
    %44 = arith.subf %41, %42 : vector<128x128xf32>
    %45 = arith.subf %43, %41 : vector<128x128xf32>
    %46 = arith.subf %45, %42 : vector<128x128xf32>
    %c0_23 = arith.constant 0 : index
    %c0_24 = arith.constant 0 : index
    %c0_25 = arith.constant 0 : index
    %47 = vector.load %arg8[%c0_23, %c0_24, %c0_25] : memref<1x128x128xf32, #tpu.memory_space<vmem>>, vector<1x128x128xf32>
    %48 = vector.shape_cast %47 : vector<1x128x128xf32> to vector<128x128xf32>
    %49 = vector.shape_cast %46 : vector<128x128xf32> to vector<1x128x128xf32>
    tpu.vector_store %arg8[%c0_23, %c0_24, %c0_25], %49 {strides = array<i32>} : memref<1x128x128xf32, #tpu.memory_space<vmem>>, vector<1x128x128xf32>,
    %cst_26 = arith.constant 0.000000e+00 : f32
    %50 = vector.broadcast %cst_26 : f32 to vector<128x128xf32>
    %51 = arith.subf %50, %44 : vector<128x128xf32>
    %c0_27 = arith.constant 0 : index
    %c0_28 = arith.constant 0 : index
    %c0_29 = arith.constant 0 : index
    %52 = vector.load %arg9[%c0_27, %c0_28, %c0_29] : memref<1x128x128xf32, #tpu.memory_space<vmem>>, vector<1x128x128xf32>
    %53 = vector.shape_cast %52 : vector<1x128x128xf32> to vector<128x128xf32>
    %54 = vector.shape_cast %51 : vector<128x128xf32> to vector<1x128x128xf32>
    tpu.vector_store %arg9[%c0_27, %c0_28, %c0_29], %54 {strides = array<i32>} : memref<1x128x128xf32, #tpu.memory_space<vmem>>, vector<1x128x128xf32>,
    return
  }
  func.func @transform_0(%arg0: i32) -> i32 {
    %c0_i32 = arith.constant 0 : i32
    %c0_i32_0 = arith.constant 0 : i32
    return %c0_i32 : i32
  }
  func.func @transform_1(%arg0: i32) -> (i32, i32) {
    %c0_i32 = arith.constant 0 : i32
    %c0_i32_0 = arith.constant 0 : i32
    %c0_i32_1 = arith.constant 0 : i32
    return %c0_i32, %c0_i32_0 : i32, i32
  }
  func.func @transform_2(%arg0: i32) -> (i32, i32, i32) {
    %c0_i32 = arith.constant 0 : i32
    %c0_i32_0 = arith.constant 0 : i32
    %c0_i32_1 = arith.constant 0 : i32
    return %arg0, %c0_i32, %c0_i32_0 : i32, i32, i32
  }
  func.func @transform_3(%arg0: i32) -> (i32, i32, i32) {
    %c0_i32 = arith.constant 0 : i32
    %c0_i32_0 = arith.constant 0 : i32
    %c0_i32_1 = arith.constant 0 : i32
    return %arg0, %c0_i32, %c0_i32_0 : i32, i32, i32
  }
  func.func @transform_4(%arg0: i32) -> (i32, i32) {
    %c0_i32 = arith.constant 0 : i32
    %c0_i32_0 = arith.constant 0 : i32
    %c0_i32_1 = arith.constant 0 : i32
    return %c0_i32, %c0_i32_0 : i32, i32
  }
  func.func @transform_5(%arg0: i32) -> (i32, i32) {
    %c0_i32 = arith.constant 0 : i32
    %c0_i32_0 = arith.constant 0 : i32
    %c0_i32_1 = arith.constant 0 : i32
    return %c0_i32, %c0_i32_0 : i32, i32
  }
  func.func @transform_6(%arg0: i32) -> (i32, i32) {
    %c0_i32 = arith.constant 0 : i32
    %c0_i32_0 = arith.constant 0 : i32
    %c0_i32_1 = arith.constant 0 : i32
    return %c0_i32, %c0_i32_0 : i32, i32
  }
  func.func @transform_7(%arg0: i32) -> (i32, i32, i32) {
    %c0_i32 = arith.constant 0 : i32
    %c0_i32_0 = arith.constant 0 : i32
    %c0_i32_1 = arith.constant 0 : i32
    return %arg0, %c0_i32, %c0_i32_0 : i32, i32, i32
  }
  func.func @transform_8(%arg0: i32) -> (i32, i32, i32) {
    %c0_i32 = arith.constant 0 : i32
    %c0_i32_0 = arith.constant 0 : i32
    %c0_i32_1 = arith.constant 0 : i32
    return %arg0, %c0_i32, %c0_i32_0 : i32, i32, i32
  }
}

</mosaic_0001>

<llo_original>
// kernel: custom-call
$region0: #{custom-call}
  %s0 = inlined_call_operand.vmem [shape: f32[2,128,128], index: 0, kind: input, shape index: {}]
  %s1 = inlined_call_operand.vmem [shape: f32[2,128,128], index: 1, kind: input, shape index: {}]
  %s2 = inlined_call_operand.hbm [shape: c64[2,128,128], index: 2, kind: output, shape index: {}]
  %s3 = scalar_lea.hbm %s2, 4096
  $region1: #{custom-call} parent=0
    #allocation0 [shape = 's32[1]{0}', space=sflag, size = 0x4, scoped, tag = 'scoped memory for custom-call']
    %4 = vsyncpa [#allocation0], 0
    %s5 = sshll.u32 %s0, 4
    %s6 = int_to_ptr.vmem [resolvable:$true] %s5
    %8 = dma.vmem_to_hbm [thread:$0]  %s6, 4096, %s2, [#allocation0]
    %9 = dma.done [#allocation0], 4096
    %10 = vsyncpa [#allocation0], 1
  $region2: #{custom-call} parent=0
    #allocation1 [shape = 's32[1]{0}', space=sflag, size = 0x4, scoped, tag = 'scoped memory for custom-call']
    %11 = vsyncpa [#allocation1], 0
    %s12 = sshll.u32 %s1, 4
    %s13 = int_to_ptr.vmem [resolvable:$true] %s12
    %15 = dma.vmem_to_hbm [thread:$0]  %s13, 4096, %s3, [#allocation1]
    %16 = dma.done [#allocation1], 4096
    %17 = vsyncpa [#allocation1], 1

// kernel: optical_forward.1
$region0: #{optical_forward.1}
  #allocation0 [shape = 'u32[]', space=smem, size = 0x4, offset = 0x4, fixed_abs, tag = 'smem constant byte address 0x4 - core index']
  #allocation1 [shape = 'u32[144,128]{1,0:T(1,128)}', space=vmem, size = 0x12000, scoped, tag = 'internal scratch']
  #allocation2 [shape = 'f32[1]{0:T(128)S(6)}', space=smem, size = 0x200, scoped, tag = 'scoped memory for optical_forward.1']
  %s0 = inlined_call_operand.<no memory space> [shape: f32[1], index: 0, kind: input, shape index: {}]
  %s1 = inlined_call_operand.hbm [shape: f32[128,128], index: 1, kind: input, shape index: {}]
  %s2 = inlined_call_operand.hbm [shape: f32[2,128,128], index: 2, kind: input, shape index: {}]
  %s3 = inlined_call_operand.hbm [shape: f32[2,128,128], index: 3, kind: input, shape index: {}]
  %s4 = inlined_call_operand.hbm [shape: bf16[128,128], index: 4, kind: input, shape index: {}]
  %s5 = inlined_call_operand.hbm [shape: bf16[128,128], index: 5, kind: input, shape index: {}]
  %s6 = inlined_call_operand.hbm [shape: bf16[128,128], index: 6, kind: input, shape index: {}]
  %s7 = inlined_call_operand.vmem [shape: f32[2,128,128], index: 7, kind: output, shape index: {0}]
  %s8 = inlined_call_operand.vmem [shape: f32[2,128,128], index: 8, kind: output, shape index: {1}]
  %9 = xla_tuple %s7, %s8
  %s10 = sld [smem:[#allocation0]]
  $region93: #{optical_forward.1} parent=0
    _
  %s12 = ssub.s32 1, %s10
  %s13 = scalar_select 0, %s12, %s10
  %14 = sst [smem:[#allocation2]] %s0
  $region1: #{optical_forward.1} parent=0
    #allocation3 [shape = 'u8[65536]{0}', space=vmem, size = 0x10000, scoped, tag = 'input window, operand 1, single buffered']
    #allocation4 [shape = 's32[2]{0}', space=sflag, size = 0x8, scoped, tag = 'scoped memory for optical_forward.1']
    #allocation5 [shape = 'u8[131072]{0}', space=vmem, size = 0x20000, scoped, tag = 'input window, operand 2']
    #allocation6 [shape = 's32[2]{0}', space=sflag, size = 0x8, scoped, tag = 'scoped memory for optical_forward.1']
    #allocation7 [shape = 'u8[131072]{0}', space=vmem, size = 0x20000, scoped, tag = 'input window, operand 3']
    #allocation8 [shape = 'u8[32768]{0}', space=vmem, size = 0x8000, scoped, tag = 'input window, operand 4, single buffered']
    #allocation9 [shape = 's32[1]{0}', space=sflag, size = 0x4, scoped, tag = 'scoped memory for optical_forward.1']
    #allocation10 [shape = 'u8[32768]{0}', space=vmem, size = 0x8000, scoped, tag = 'input window, operand 5, single buffered']
    #allocation11 [shape = 'u8[32768]{0}', space=vmem, size = 0x8000, scoped, tag = 'input window, operand 6, single buffered']
    #allocation12 [shape = 's32[1]{0}', space=sflag, size = 0x4, scoped, tag = 'scoped memory for optical_forward.1']
    %15 = vsyncpa [#allocation4], 0
    %16 = vsyncpa [#allocation6], 0
    %s17 = scalar_lea.sflag [#allocation6], 1
    %18 = vsyncpa %s17, 0
    %19 = vsyncpa [#allocation9], 0
    %20 = vsyncpa [#allocation12], 0
    loop: start=0, step=1, limit=4
    $region2: #{optical_forward.1} parent=1 // loop_pre_header
      _
    $region3: #{optical_forward.1} parent=1 // loop_header
      %s22 = sphi 0, %s26
      %p23 = scmp.ge.s32.totalorder %s22, 4
      %s30 = sphi 0, %s30
      %s32 = sphi 0, %s30
      %s33 = sphi 0, %s32
      %s47 = sphi 0, %s33
      %s51 = sphi 0, %s51
      %s53 = sphi 0, %s51
      %s54 = sphi 0, %s53
      %s68 = sphi 0, %s54
      %s74 = sphi 0, %s76
      %s77 = sphi 0, %s74
      %s78 = sphi 0, %s77
      %s94 = sphi 0, %s78
      %s100 = sphi 0, %s102
      %s103 = sphi 0, %s100
      %s104 = sphi 0, %s103
      %s120 = sphi 0, %s104
      %s124 = sphi 0, %s124
      %s126 = sphi 0, %s124
      %s127 = sphi 0, %s126
      %s141 = sphi 0, %s127
      %s145 = sphi 0, %s145
      %s147 = sphi 0, %s145
      %s148 = sphi 0, %s147
      %s162 = sphi 0, %s148
      %s166 = sphi 0, %s166
      %s168 = sphi 0, %s166
      %s169 = sphi 0, %s168
      %s183 = sphi 0, %s169
      %s189 = sphi 0, %s191
      %s192 = sphi 0, %s189
      %s193 = sphi 0, %s192
      %s209 = sphi 0, %s193
      %s215 = sphi 0, %s217
      %s218 = sphi 0, %s215
      %s219 = sphi 0, %s218
      %s235 = sphi 0, %s219
    $region4: #{optical_forward.1} parent=1 // loop_header_branch
      %25 = sbr.rel (%p23) target = $region8
    $region5: #{optical_forward.1} parent=1 // loop_body
      %s27 = ssub.s32 %s22, 1
      %s28 = ssub.s32 %s22, 2
      %s29 = sadd.s32 %s22, 1
      %s31 = sadd.s32 %s30, 1
      %p34 = scmp.eq.s32.totalorder %s22, 1
      %p35 = scmp.ne.s32.totalorder %s30, %s32
      %p36 = scmp.eq.s32.totalorder %s22, 0
      %p37 = por %p35, %p36
      %p38 = scmp.ne.s32.totalorder %s30, %s32
      %p39 = scmp.eq.s32.totalorder %s27, 1
      %p40 = por %p38, %p39
      %p41 = scmp.ne.s32.totalorder %s32, %s33
      %p42 = scmp.eq.s32.totalorder %s27, 0
      %p43 = por %p41, %p42
      %p44 = scmp.ne.s32.totalorder %s32, %s33
      %p45 = scmp.eq.s32.totalorder %s28, 1
      %p46 = por %p44, %p45
      %p48 = scmp.ne.s32.totalorder %s33, %s47
      %p49 = scmp.eq.s32.totalorder %s28, 0
      %p50 = por %p48, %p49
      %s52 = sadd.s32 %s51, 1
      %p55 = scmp.eq.s32.totalorder %s22, 1
      %p56 = scmp.ne.s32.totalorder %s51, %s53
      %p57 = scmp.eq.s32.totalorder %s22, 0
      %p58 = por %p56, %p57
      %p59 = scmp.ne.s32.totalorder %s51, %s53
      %p60 = scmp.eq.s32.totalorder %s27, 1
      %p61 = por %p59, %p60
      %p62 = scmp.ne.s32.totalorder %s53, %s54
      %p63 = scmp.eq.s32.totalorder %s27, 0
      %p64 = por %p62, %p63
      %p65 = scmp.ne.s32.totalorder %s53, %s54
      %p66 = scmp.eq.s32.totalorder %s28, 1
      %p67 = por %p65, %p66
      %p69 = scmp.ne.s32.totalorder %s54, %s68
      %p70 = scmp.eq.s32.totalorder %s28, 0
      %p71 = por %p69, %p70
      %s72 = ssub.s32 %s22, %s29
      %p73 = scmp.eq.s32.totalorder %s72, 0
      %s75 = sadd.s32 %s74, 1
      %s76 = scalar_select %p73, %s74, %s75
      %p79 = pneg %p73
      %p80 = scmp.eq.s32.totalorder %s22, 1
      %p81 = por %p79, %p80
      %p82 = scmp.ne.s32.totalorder %s74, %s77
      %p83 = scmp.eq.s32.totalorder %s22, 0
      %p84 = por %p82, %p83
      %p85 = scmp.ne.s32.totalorder %s74, %s77
      %p86 = scmp.eq.s32.totalorder %s27, 1
      %p87 = por %p85, %p86
      %p88 = scmp.ne.s32.totalorder %s77, %s78
      %p89 = scmp.eq.s32.totalorder %s27, 0
      %p90 = por %p88, %p89
      %p91 = scmp.ne.s32.totalorder %s77, %s78
      %p92 = scmp.eq.s32.totalorder %s28, 1
      %p93 = por %p91, %p92
      %p95 = scmp.ne.s32.totalorder %s78, %s94
      %p96 = scmp.eq.s32.totalorder %s28, 0
      %p97 = por %p95, %p96
      %s98 = ssub.s32 %s22, %s29
      %p99 = scmp.eq.s32.totalorder %s98, 0
      %s101 = sadd.s32 %s100, 1
      %s102 = scalar_select %p99, %s100, %s101
      %p105 = pneg %p99
      %p106 = scmp.eq.s32.totalorder %s22, 1
      %p107 = por %p105, %p106
      %p108 = scmp.ne.s32.totalorder %s100, %s103
      %p109 = scmp.eq.s32.totalorder %s22, 0
      %p110 = por %p108, %p109
      %p111 = scmp.ne.s32.totalorder %s100, %s103
      %p112 = scmp.eq.s32.totalorder %s27, 1
      %p113 = por %p111, %p112
      %p114 = scmp.ne.s32.totalorder %s103, %s104
      %p115 = scmp.eq.s32.totalorder %s27, 0
      %p116 = por %p114, %p115
      %p117 = scmp.ne.s32.totalorder %s103, %s104
      %p118 = scmp.eq.s32.totalorder %s28, 1
      %p119 = por %p117, %p118
      %p121 = scmp.ne.s32.totalorder %s104, %s120
      %p122 = scmp.eq.s32.totalorder %s28, 0
      %p123 = por %p121, %p122
      %s125 = sadd.s32 %s124, 1
      %p128 = scmp.eq.s32.totalorder %s22, 1
      %p129 = scmp.ne.s32.totalorder %s124, %s126
      %p130 = scmp.eq.s32.totalorder %s22, 0
      %p131 = por %p129, %p130
      %p132 = scmp.ne.s32.totalorder %s124, %s126
      %p133 = scmp.eq.s32.totalorder %s27, 1
      %p134 = por %p132, %p133
      %p135 = scmp.ne.s32.totalorder %s126, %s127
      %p136 = scmp.eq.s32.totalorder %s27, 0
      %p137 = por %p135, %p136
      %p138 = scmp.ne.s32.totalorder %s126, %s127
      %p139 = scmp.eq.s32.totalorder %s28, 1
      %p140 = por %p138, %p139
      %p142 = scmp.ne.s32.totalorder %s127, %s141
      %p143 = scmp.eq.s32.totalorder %s28, 0
      %p144 = por %p142, %p143
      %s146 = sadd.s32 %s145, 1
      %p149 = scmp.eq.s32.totalorder %s22, 1
      %p150 = scmp.ne.s32.totalorder %s145, %s147
      %p151 = scmp.eq.s32.totalorder %s22, 0
      %p152 = por %p150, %p151
      %p153 = scmp.ne.s32.totalorder %s145, %s147
      %p154 = scmp.eq.s32.totalorder %s27, 1
      %p155 = por %p153, %p154
      %p156 = scmp.ne.s32.totalorder %s147, %s148
      %p157 = scmp.eq.s32.totalorder %s27, 0
      %p158 = por %p156, %p157
      %p159 = scmp.ne.s32.totalorder %s147, %s148
      %p160 = scmp.eq.s32.totalorder %s28, 1
      %p161 = por %p159, %p160
      %p163 = scmp.ne.s32.totalorder %s148, %s162
      %p164 = scmp.eq.s32.totalorder %s28, 0
      %p165 = por %p163, %p164
      %s167 = sadd.s32 %s166, 1
      %p170 = scmp.eq.s32.totalorder %s22, 1
      %p171 = scmp.ne.s32.totalorder %s166, %s168
      %p172 = scmp.eq.s32.totalorder %s22, 0
      %p173 = por %p171, %p172
      %p174 = scmp.ne.s32.totalorder %s166, %s168
      %p175 = scmp.eq.s32.totalorder %s27, 1
      %p176 = por %p174, %p175
      %p177 = scmp.ne.s32.totalorder %s168, %s169
      %p178 = scmp.eq.s32.totalorder %s27, 0
      %p179 = por %p177, %p178
      %p180 = scmp.ne.s32.totalorder %s168, %s169
      %p181 = scmp.eq.s32.totalorder %s28, 1
      %p182 = por %p180, %p181
      %p184 = scmp.ne.s32.totalorder %s169, %s183
      %p185 = scmp.eq.s32.totalorder %s28, 0
      %p186 = por %p184, %p185
      %s187 = ssub.s32 %s22, %s29
      %p188 = scmp.eq.s32.totalorder %s187, 0
      %s190 = sadd.s32 %s189, 1
      %s191 = scalar_select %p188, %s189, %s190
      %p194 = pneg %p188
      %p195 = scmp.eq.s32.totalorder %s22, 1
      %p196 = por %p194, %p195
      %p197 = scmp.ne.s32.totalorder %s189, %s192
      %p198 = scmp.eq.s32.totalorder %s22, 0
      %p199 = por %p197, %p198
      %p200 = scmp.ne.s32.totalorder %s189, %s192
      %p201 = scmp.eq.s32.totalorder %s27, 1
      %p202 = por %p200, %p201
      %p203 = scmp.ne.s32.totalorder %s192, %s193
      %p204 = scmp.eq.s32.totalorder %s27, 0
      %p205 = por %p203, %p204
      %p206 = scmp.ne.s32.totalorder %s192, %s193
      %p207 = scmp.eq.s32.totalorder %s28, 1
      %p208 = por %p206, %p207
      %p210 = scmp.ne.s32.totalorder %s193, %s209
      %p211 = scmp.eq.s32.totalorder %s28, 0
      %p212 = por %p210, %p211
      %s213 = ssub.s32 %s22, %s29
      %p214 = scmp.eq.s32.totalorder %s213, 0
      %s216 = sadd.s32 %s215, 1
      %s217 = scalar_select %p214, %s215, %s216
      %p220 = pneg %p214
      %p221 = scmp.eq.s32.totalorder %s22, 1
      %p222 = por %p220, %p221
      %p223 = scmp.ne.s32.totalorder %s215, %s218
      %p224 = scmp.eq.s32.totalorder %s22, 0
      %p225 = por %p223, %p224
      %p226 = scmp.ne.s32.totalorder %s215, %s218
      %p227 = scmp.eq.s32.totalorder %s27, 1
      %p228 = por %p226, %p227
      %p229 = scmp.ne.s32.totalorder %s218, %s219
      %p230 = scmp.eq.s32.totalorder %s27, 0
      %p231 = por %p229, %p230
      %p232 = scmp.ne.s32.totalorder %s218, %s219
      %p233 = scmp.eq.s32.totalorder %s28, 1
      %p234 = por %p232, %p233
      %p236 = scmp.ne.s32.totalorder %s219, %s235
      %p237 = scmp.eq.s32.totalorder %s28, 0
      %p238 = por %p236, %p237
      %p239 = scmp.le.s32.totalorder 1, %s22
      %p240 = scmp.lt.s32.totalorder %s22, 3
      %p241 = pnand %p239, %p240
      %p242 = pneg %p241
      // Predicated region
      $region9: #{optical_forward.1} parent=5 // pred_check
        _
      $region10: #{optical_forward.1} parent=5 // pred_check_branch
        %244 = sbr.rel (%p241) target = $region12
      $region11: #{optical_forward.1} parent=5 // pred_region
        %s245 = ssub.s32 %s22, 1
        // Predicated region
        $region13: #{optical_forward.1} parent=11 // pred_check
          %p246 = pneg %p43
        $region14: #{optical_forward.1} parent=11 // pred_check_branch
          %248 = sbr.rel (%p246) target = $region16
        $region15: #{optical_forward.1} parent=11 // pred_region
          _
        $region16: #{optical_forward.1} parent=11 // pred_fallthru
          _
        // Predicated region
        $region17: #{optical_forward.1} parent=11 // pred_check
          %p249 = pneg %p64
        $region18: #{optical_forward.1} parent=11 // pred_check_branch
          %251 = sbr.rel (%p249) target = $region20
        $region19: #{optical_forward.1} parent=11 // pred_region
          %s253 = ssub.s32 2048, 2048
          %254 = vsyncadd [#allocation4], %s253
          %s255 = sshll.u32 [#allocation3], 4
          %s256 = int_to_ptr.vmem [resolvable:$true] %s255
          %261 = dma.hbm_to_vmem [thread:$0]  %s1, 2048, %s256, [#allocation4], 128, 128, 8
        $region20: #{optical_forward.1} parent=11 // pred_fallthru
          _
        // Predicated region
        $region21: #{optical_forward.1} parent=11 // pred_check
          %p262 = pneg %p137
        $region22: #{optical_forward.1} parent=11 // pred_check_branch
          %264 = sbr.rel (%p262) target = $region24
        $region23: #{optical_forward.1} parent=11 // pred_region
          %s266 = ssub.s32 1024, 1024
          %267 = vsyncadd [#allocation9], %s266
          %s268 = sshll.u32 [#allocation8], 4
          %s269 = int_to_ptr.vmem [resolvable:$true] %s268
          %274 = dma.hbm_to_vmem [thread:$0]  %s4, 1024, %s269, [#allocation9], 64, 64, 4
        $region24: #{optical_forward.1} parent=11 // pred_fallthru
          _
        // Predicated region
        $region25: #{optical_forward.1} parent=11 // pred_check
          %p275 = pneg %p158
        $region26: #{optical_forward.1} parent=11 // pred_check_branch
          %277 = sbr.rel (%p275) target = $region28
        $region27: #{optical_forward.1} parent=11 // pred_region
          %s279 = ssub.s32 1024, 1024
          %280 = vsyncadd [#allocation9], %s279
          %s281 = sshll.u32 [#allocation10], 4
          %s282 = int_to_ptr.vmem [resolvable:$true] %s281
          %287 = dma.hbm_to_vmem [thread:$0]  %s5, 1024, %s282, [#allocation9], 64, 64, 4
        $region28: #{optical_forward.1} parent=11 // pred_fallthru
          _
        // Predicated region
        $region29: #{optical_forward.1} parent=11 // pred_check
          %p288 = pneg %p179
        $region30: #{optical_forward.1} parent=11 // pred_check_branch
          %290 = sbr.rel (%p288) target = $region32
        $region31: #{optical_forward.1} parent=11 // pred_region
          %s292 = ssub.s32 1024, 1024
          %293 = vsyncadd [#allocation12], %s292
          %s294 = sshll.u32 [#allocation11], 4
          %s295 = int_to_ptr.vmem [resolvable:$true] %s294
          %300 = dma.hbm_to_vmem [thread:$0]  %s6, 1024, %s295, [#allocation12], 64, 64, 4
        $region32: #{optical_forward.1} parent=11 // pred_fallthru
          _
      $region12: #{optical_forward.1} parent=5 // pred_fallthru
        _
      %p301 = scmp.lt.s32.totalorder %s22, 2
      // Predicated region
      $region33: #{optical_forward.1} parent=5 // pred_check
        %p302 = pneg %p301
      $region34: #{optical_forward.1} parent=5 // pred_check_branch
        %304 = sbr.rel (%p302) target = $region36
      $region35: #{optical_forward.1} parent=5 // pred_region
        // Predicated region
        $region37: #{optical_forward.1} parent=35 // pred_check
          %p305 = pneg %p84
        $region38: #{optical_forward.1} parent=35 // pred_check_branch
          %307 = sbr.rel (%p305) target = $region40
        $region39: #{optical_forward.1} parent=35 // pred_region
          %s308 = sand.u32 %s22, 1
          %s309 = scalar_lea.sflag [#allocation6], %s308
          %s310 = sand.u32 %s74, 1
          %s311 = smul.addr %s310, 128
          %s312 = scalar_lea.vmem [#allocation5], %s311
          %s314 = ssub.s32 2048, 2048
          %315 = vsyncadd %s309, %s314
          %s316 = smul.addr %s22, 16
          %s317 = smul.addr %s316, 128
          %s318 = scalar_lea.hbm %s2, %s317
          %s319 = sshll.u32 %s312, 4
          %s320 = int_to_ptr.vmem [resolvable:$true] %s319
          %325 = dma.hbm_to_vmem [thread:$0]  %s318, 2048, %s320, %s309, 128, 128, 8
        $region40: #{optical_forward.1} parent=35 // pred_fallthru
          _
        // Predicated region
        $region41: #{optical_forward.1} parent=35 // pred_check
          %p326 = pneg %p110
        $region42: #{optical_forward.1} parent=35 // pred_check_branch
          %328 = sbr.rel (%p326) target = $region44
        $region43: #{optical_forward.1} parent=35 // pred_region
          %s329 = sand.u32 %s22, 1
          %s330 = scalar_lea.sflag [#allocation6], %s329
          %s331 = sand.u32 %s100, 1
          %s332 = smul.addr %s331, 128
          %s333 = scalar_lea.vmem [#allocation7], %s332
          %s335 = ssub.s32 2048, 2048
          %336 = vsyncadd %s330, %s335
          %s337 = smul.addr %s22, 16
          %s338 = smul.addr %s337, 128
          %s339 = scalar_lea.hbm %s3, %s338
          %s340 = sshll.u32 %s333, 4
          %s341 = int_to_ptr.vmem [resolvable:$true] %s340
          %346 = dma.hbm_to_vmem [thread:$0]  %s339, 2048, %s341, %s330, 128, 128, 8
        $region44: #{optical_forward.1} parent=35 // pred_fallthru
          _
      $region36: #{optical_forward.1} parent=5 // pred_fallthru
        _
      %p347 = scmp.le.s32.totalorder 1, %s22
      %p348 = scmp.lt.s32.totalorder %s22, 3
      %p349 = pnand %p347, %p348
      %p350 = pneg %p349
      // Predicated region
      $region45: #{optical_forward.1} parent=5 // pred_check
        _
      $region46: #{optical_forward.1} parent=5 // pred_check_branch
        %352 = sbr.rel (%p349) target = $region48
      $region47: #{optical_forward.1} parent=5 // pred_region
        %s353 = ssub.s32 %s22, 1
        // Predicated region
        $region49: #{optical_forward.1} parent=47 // pred_check
          %p354 = pneg %p64
        $region50: #{optical_forward.1} parent=47 // pred_check_branch
          %356 = sbr.rel (%p354) target = $region52
        $region51: #{optical_forward.1} parent=47 // pred_region
          %357 = dma.done [#allocation4], 2048
        $region52: #{optical_forward.1} parent=47 // pred_fallthru
          _
        %s358 = sand.u32 %s27, 1
        %s359 = scalar_lea.sflag [#allocation6], %s358
        %s360 = sand.u32 %s77, 1
        %s361 = smul.addr %s360, 128
        %s362 = scalar_lea.vmem [#allocation5], %s361
        // Predicated region
        $region53: #{optical_forward.1} parent=47 // pred_check
          %p363 = pneg %p90
        $region54: #{optical_forward.1} parent=47 // pred_check_branch
          %365 = sbr.rel (%p363) target = $region56
        $region55: #{optical_forward.1} parent=47 // pred_region
          %366 = dma.done %s359, 2048
        $region56: #{optical_forward.1} parent=47 // pred_fallthru
          _
        %s367 = sand.u32 %s27, 1
        %s368 = scalar_lea.sflag [#allocation6], %s367
        %s369 = sand.u32 %s103, 1
        %s370 = smul.addr %s369, 128
        %s371 = scalar_lea.vmem [#allocation7], %s370
        // Predicated region
        $region57: #{optical_forward.1} parent=47 // pred_check
          %p372 = pneg %p116
        $region58: #{optical_forward.1} parent=47 // pred_check_branch
          %374 = sbr.rel (%p372) target = $region60
        $region59: #{optical_forward.1} parent=47 // pred_region
          %375 = dma.done %s368, 2048
        $region60: #{optical_forward.1} parent=47 // pred_fallthru
          _
        // Predicated region
        $region61: #{optical_forward.1} parent=47 // pred_check
          %p376 = pneg %p137
        $region62: #{optical_forward.1} parent=47 // pred_check_branch
          %378 = sbr.rel (%p376) target = $region64
        $region63: #{optical_forward.1} parent=47 // pred_region
          %379 = dma.done [#allocation9], 1024
        $region64: #{optical_forward.1} parent=47 // pred_fallthru
          _
        // Predicated region
        $region65: #{optical_forward.1} parent=47 // pred_check
          %p380 = pneg %p158
        $region66: #{optical_forward.1} parent=47 // pred_check_branch
          %382 = sbr.rel (%p380) target = $region68
        $region67: #{optical_forward.1} parent=47 // pred_region
          %383 = dma.done [#allocation9], 1024
        $region68: #{optical_forward.1} parent=47 // pred_fallthru
          _
        // Predicated region
        $region69: #{optical_forward.1} parent=47 // pred_check
          %p384 = pneg %p179
        $region70: #{optical_forward.1} parent=47 // pred_check_branch
          %386 = sbr.rel (%p384) target = $region72
        $region71: #{optical_forward.1} parent=47 // pred_region
          %387 = dma.done [#allocation12], 1024
        $region72: #{optical_forward.1} parent=47 // pred_fallthru
          _
        %p388 = pneg %p43
        %p389 = pneg %p40
        %p390 = pneg %p64
        %p391 = pneg %p61
        %s392 = sand.u32 %s27, 1
        %s393 = scalar_lea.sflag [#allocation6], %s392
        %s394 = sand.u32 %s77, 1
        %s395 = smul.addr %s394, 128
        %s396 = scalar_lea.vmem [#allocation5], %s395
        %p397 = pneg %p90
        %p398 = pneg %p87
        %s399 = sand.u32 %s27, 1
        %s400 = scalar_lea.sflag [#allocation6], %s399
        %s401 = sand.u32 %s103, 1
        %s402 = smul.addr %s401, 128
        %s403 = scalar_lea.vmem [#allocation7], %s402
        %p404 = pneg %p116
        %p405 = pneg %p113
        %p406 = pneg %p137
        %p407 = pneg %p134
        %p408 = pneg %p158
        %p409 = pneg %p155
        %p410 = pneg %p179
        %p411 = pneg %p176
        %p412 = pneg %p205
        %p413 = pneg %p202
        %p414 = scmp.lt.s32.totalorder %s27, 1
        %s415 = scalar_select %p414, %s27, 1
        %s416 = smul.addr %s415, 16
        %s417 = smul.addr %s416, 8
        %s418 = scalar_lea.vmem %s7, %s417
        %p419 = pneg %p231
        %p420 = pneg %p228
        %p421 = scmp.lt.s32.totalorder %s27, 1
        %s422 = scalar_select %p421, %s27, 1
        %s423 = smul.addr %s422, 16
        %s424 = smul.addr %s423, 8
        %s425 = scalar_lea.vmem %s8, %s424
        %p426 = scmp.lt.s32.totalorder %s27, 1
        %s427 = scalar_select %p426, %s27, 1
        %s428 = smul.addr %s427, 16
        %s429 = smul.addr %s428, 8
        %s430 = scalar_lea.vmem %s7, %s429
        %p431 = scmp.lt.s32.totalorder %s27, 1
        %s432 = scalar_select %p431, %s27, 1
        %s433 = smul.addr %s432, 16
        %s434 = smul.addr %s433, 8
        %s435 = scalar_lea.vmem %s8, %s434
        %s437 = sld [smem:[#allocation2]]
        %v438 = vld [vmem:[#allocation3] sm:$0xff]
        %v439 = vld [vmem:[#allocation3 + $0x8] sm:$0xff]
        %v440 = vld [vmem:[#allocation3 + $0x10] sm:$0xff]
        %v441 = vld [vmem:[#allocation3 + $0x18] sm:$0xff]
        %v442 = vld [vmem:[#allocation3 + $0x20] sm:$0xff]
        %v443 = vld [vmem:[#allocation3 + $0x28] sm:$0xff]
        %v444 = vld [vmem:[#allocation3 + $0x30] sm:$0xff]
        %v445 = vld [vmem:[#allocation3 + $0x38] sm:$0xff]
        %v446 = vld [vmem:[#allocation3 + $0x40] sm:$0xff]
        %v447 = vld [vmem:[#allocation3 + $0x48] sm:$0xff]
        %v448 = vld [vmem:[#allocation3 + $0x50] sm:$0xff]
        %v449 = vld [vmem:[#allocation3 + $0x58] sm:$0xff]
        %v450 = vld [vmem:[#allocation3 + $0x60] sm:$0xff]
        %v451 = vld [vmem:[#allocation3 + $0x68] sm:$0xff]
        %v452 = vld [vmem:[#allocation3 + $0x70] sm:$0xff]
        %v453 = vld [vmem:[#allocation3 + $0x78] sm:$0xff]
        %s454 = smul.f32 %s437, 0.5
        %v455 = vsub.f32 %v438, 0.5
        %v456 = vsub.f32 %v439, 0.5
        %v457 = vsub.f32 %v440, 0.5
        %v458 = vsub.f32 %v441, 0.5
        %v459 = vsub.f32 %v442, 0.5
        %v460 = vsub.f32 %v443, 0.5
        %v461 = vsub.f32 %v444, 0.5
        %v462 = vsub.f32 %v445, 0.5
        %v463 = vsub.f32 %v446, 0.5
        %v464 = vsub.f32 %v447, 0.5
        %v465 = vsub.f32 %v448, 0.5
        %v466 = vsub.f32 %v449, 0.5
        %v467 = vsub.f32 %v450, 0.5
        %v468 = vsub.f32 %v451, 0.5
        %v469 = vsub.f32 %v452, 0.5
        %v470 = vsub.f32 %v453, 0.5
        %v471 = vstv %s454
        %v472 = vmul.f32 %v471, %v455
        %v473 = vmul.f32 %v471, %v456
        %v474 = vmul.f32 %v471, %v457
        %v475 = vmul.f32 %v471, %v458
        %v476 = vmul.f32 %v471, %v459
        %v477 = vmul.f32 %v471, %v460
        %v478 = vmul.f32 %v471, %v461
        %v479 = vmul.f32 %v471, %v462
        %v480 = vmul.f32 %v471, %v463
        %v481 = vmul.f32 %v471, %v464
        %v482 = vmul.f32 %v471, %v465
        %v483 = vmul.f32 %v471, %v466
        %v484 = vmul.f32 %v471, %v467
        %v485 = vmul.f32 %v471, %v468
        %v486 = vmul.f32 %v471, %v469
        %v487 = vmul.f32 %v471, %v470
        %v488 = vtanh.pop %v472
        %v489 = vtanh.pop %v473
        %v490 = vtanh.pop %v474
        %v491 = vtanh.pop %v475
        %v492 = vtanh.pop %v476
        %v493 = vtanh.pop %v477
        %v494 = vtanh.pop %v478
        %v495 = vtanh.pop %v479
        %v496 = vtanh.pop %v480
        %v497 = vtanh.pop %v481
        %v498 = vtanh.pop %v482
        %v499 = vtanh.pop %v483
        %v500 = vtanh.pop %v484
        %v501 = vtanh.pop %v485
        %v502 = vtanh.pop %v486
        %v503 = vtanh.pop %v487
        %v504 = vadd.f32 %v488, 1.0
        %v505 = vadd.f32 %v489, 1.0
        %v506 = vadd.f32 %v490, 1.0
        %v507 = vadd.f32 %v491, 1.0
        %v508 = vadd.f32 %v492, 1.0
        %v509 = vadd.f32 %v493, 1.0
        %v510 = vadd.f32 %v494, 1.0
        %v511 = vadd.f32 %v495, 1.0
        %v512 = vadd.f32 %v496, 1.0
        %v513 = vadd.f32 %v497, 1.0
        %v514 = vadd.f32 %v498, 1.0
        %v515 = vadd.f32 %v499, 1.0
        %v516 = vadd.f32 %v500, 1.0
        %v517 = vadd.f32 %v501, 1.0
        %v518 = vadd.f32 %v502, 1.0
        %v519 = vadd.f32 %v503, 1.0
        %v520 = vmul.f32 %v504, 1.5707964
        %v521 = vmul.f32 %v505, 1.5707964
        %v522 = vmul.f32 %v506, 1.5707964
        %v523 = vmul.f32 %v507, 1.5707964
        %v524 = vmul.f32 %v508, 1.5707964
        %v525 = vmul.f32 %v509, 1.5707964
        %v526 = vmul.f32 %v510, 1.5707964
        %v527 = vmul.f32 %v511, 1.5707964
        %v528 = vmul.f32 %v512, 1.5707964
        %v529 = vmul.f32 %v513, 1.5707964
        %v530 = vmul.f32 %v514, 1.5707964
        %v531 = vmul.f32 %v515, 1.5707964
        %v532 = vmul.f32 %v516, 1.5707964
        %v533 = vmul.f32 %v517, 1.5707964
        %v534 = vmul.f32 %v518, 1.5707964
        %v535 = vmul.f32 %v519, 1.5707964
        %v536 = vand.u32 2147483647, %v520
        %vm537 = vcmp.le.f32.partialorder %v536, 0.7853982
        %vm538 = vcmp.lt.s32.totalorder %v520, 0
        %v539 = vand.u32 %v520, 2139095040
        %v540 = vshrl.u32 %v539, 23
        %v541 = vsub.s32 %v540, 127
        %v542 = vand.u32 2147483647, %v520
        %v543 = vand.u32 %v542, 8388607
        %v544 = vor.u32 %v543, 8388608
        %v545 = vsub.s32 0, %v544
        %v546 = vadd.s32 %v541, 1
        %vm547 = vcmp.gt.s32.totalorder %v546, 0
        %v548 = vsel %vm547, %v546, 0
        %v549 = vshrl.u32 %v548, 5
        %v550 = vand.u32 %v548, 31
        %v551 = vsub.s32 32, %v550
        %v552 = vshrl.u32 683565275, %v551
        %v553 = vshll.u32 683565275, %v550
        %v554 = vshrl.u32 2475754826, %v551
        %v555 = vor.u32 %v553, %v554
        %v556 = vshll.u32 2475754826, %v550
        %v557 = vshrl.u32 2131351028, %v551
        %v558 = vor.u32 %v556, %v557
        %v559 = vshll.u32 2131351028, %v550
        %v560 = vshrl.u32 2102212464, %v551
        %v561 = vor.u32 %v559, %v560
        %v562 = vshll.u32 2102212464, %v550
        %v563 = vshrl.u32 920167782, %v551
        %v564 = vor.u32 %v562, %v563
        %v565 = vshll.u32 920167782, %v550
        %v566 = vshrl.u32 1326507024, %v551
        %v567 = vor.u32 %v565, %v566
        %vm568 = vcmp.lt.s32.totalorder %v549, 1
        %vm569 = vcmp.lt.s32.totalorder %v549, 2
        %vm570 = vcmp.lt.s32.totalorder %v549, 3
        %vm571 = vcmp.lt.s32.totalorder %v549, 4
        %v572 = vsel %vm568, %v552, %v555
        %v573 = vsel %vm571, %v561, 2102212464
        %v574 = vsel %vm570, %v558, %v573
        %v575 = vsel %vm569, %v572, %v574
        %v576 = vsel %vm568, %v555, %v558
        %v577 = vsel %vm571, %v564, 920167782
        %v578 = vsel %vm570, %v561, %v577
        %v579 = vsel %vm569, %v576, %v578
        %v580 = vsel %vm568, %v558, %v561
        %v581 = vsel %vm571, %v567, 1326507024
        %v582 = vsel %vm570, %v564, %v581
        %v583 = vsel %vm569, %v580, %v582
        %v584 = vshll.u32 %v544, 8
        %v585 = vmul.u32.u64.compose %v584, %v583
        %v586 = vextract.low.u32 %v585
        %v587 = vextract.high.u32 %v585
        %v588 = vmul.u32.u64.compose %v584, %v579
        %v589 = vextract.low.u32 %v588
        %v590 = vextract.high.u32 %v588
        %v591 = vmul.u32 %v584, %v575
        %v592 = vadd.s32 %v587, %v589
        %vm593 = vc.u32 %v587, %v589
        %v594 = vadd.s32 %v590, 1
        %v595 = vsel %vm593, %v594, %v590
        %v596 = vadd.s32 %v591, %v595
        %v597 = vadd.s32 %v596, 536870912
        %v598 = vshrl.u32 %v597, 30
        %v599 = vshll.u32 %v598, 30
        %v600 = vsub.s32 %v596, %v599
        %vm601 = vcmp.lt.s32.totalorder %v600, 0
        %v602 = vsub.s32 0, %v600
        %v603 = vsel %vm601, %v602, %v600
        %v604 = vclz %v603
        %v605 = vsub.s32 %v604, 2
        %vm606 = vcmp.gt.s32.totalorder 0, %v605
        %v607 = vsel %vm606, 0, %v605
        %v608 = vsub.s32 32, %v607
        %v609 = vshll.u32 %v600, %v607
        %v610 = vshrl.u32 %v592, %v608
        %v611 = vor.u32 %v609, %v610
        %v612 = vsub.s32 4294967266, %v607
        %v613 = vadd.s32 %v612, 127
        %v614 = vshll.u32 %v613, 23
        %v615 = vor.u32 4788187, %v614
        %v616 = vand.u32 2147483647, %v615
        %v618 = vcvt.s32.f32 %v611
        %v619 = vmul.f32 %v618, %v616
        %v620 = vxor.u32 %v619, 2147483648
        %v621 = vsel %vm538, %v620, %v619
        %v622 = vsub.s32 4, %v598
        %v623 = vsel %vm538, %v622, %v598
        %v624 = vsel %vm537, %v520, %v621
        %v625 = vsel %vm537, 0, %v623
        %v626 = vcosq.f32.pop %v624
        %v627 = vsinq.f32.pop %v624
        %vm628 = vweird.f32 %v520
        %v629 = vand.u32 %v625, 3
        %vm630 = vcmp.lt.s32.totalorder %v629, 2
        %vm631 = vcmp.eq.s32.totalorder %v629, 0
        %v632 = vxor.u32 %v627, 2147483648
        %v633 = vsel %vm631, %v626, %v632
        %vm634 = vcmp.eq.s32.totalorder %v629, 2
        %v635 = vxor.u32 %v626, 2147483648
        %v636 = vsel %vm634, %v635, %v627
        %v637 = vsel %vm630, %v633, %v636
        %v638 = vsel %vm628, nan, %v637
        %v639 = vand.u32 2147483647, %v521
        %vm640 = vcmp.le.f32.partialorder %v639, 0.7853982
        %vm641 = vcmp.lt.s32.totalorder %v521, 0
        %v642 = vand.u32 %v521, 2139095040
        %v643 = vshrl.u32 %v642, 23
        %v644 = vsub.s32 %v643, 127
        %v645 = vand.u32 2147483647, %v521
        %v646 = vand.u32 %v645, 8388607
        %v647 = vor.u32 %v646, 8388608
        %v648 = vsub.s32 0, %v647
        %v649 = vadd.s32 %v644, 1
        %vm650 = vcmp.gt.s32.totalorder %v649, 0
        %v651 = vsel %vm650, %v649, 0
        %v652 = vshrl.u32 %v651, 5
        %v653 = vand.u32 %v651, 31
        %v654 = vsub.s32 32, %v653
        %v655 = vshrl.u32 683565275, %v654
        %v656 = vshll.u32 683565275, %v653
        %v657 = vshrl.u32 2475754826, %v654
        %v658 = vor.u32 %v656, %v657
        %v659 = vshll.u32 2475754826, %v653
        %v660 = vshrl.u32 2131351028, %v654
        %v661 = vor.u32 %v659, %v660
        %v662 = vshll.u32 2131351028, %v653
        %v663 = vshrl.u32 2102212464, %v654
        %v664 = vor.u32 %v662, %v663
        %v665 = vshll.u32 2102212464, %v653
        %v666 = vshrl.u32 920167782, %v654
        %v667 = vor.u32 %v665, %v666
        %v668 = vshll.u32 920167782, %v653
        %v669 = vshrl.u32 1326507024, %v654
        %v670 = vor.u32 %v668, %v669
        %vm671 = vcmp.lt.s32.totalorder %v652, 1
        %vm672 = vcmp.lt.s32.totalorder %v652, 2
        %vm673 = vcmp.lt.s32.totalorder %v652, 3
        %vm674 = vcmp.lt.s32.totalorder %v652, 4
        %v675 = vsel %vm671, %v655, %v658
        %v676 = vsel %vm674, %v664, 2102212464
        %v677 = vsel %vm673, %v661, %v676
        %v678 = vsel %vm672, %v675, %v677
        %v679 = vsel %vm671, %v658, %v661
        %v680 = vsel %vm674, %v667, 920167782
        %v681 = vsel %vm673, %v664, %v680
        %v682 = vsel %vm672, %v679, %v681
        %v683 = vsel %vm671, %v661, %v664
        %v684 = vsel %vm674, %v670, 1326507024
        %v685 = vsel %vm673, %v667, %v684
        %v686 = vsel %vm672, %v683, %v685
        %v687 = vshll.u32 %v647, 8
        %v688 = vmul.u32.u64.compose %v687, %v686
        %v689 = vextract.low.u32 %v688
        %v690 = vextract.high.u32 %v688
        %v691 = vmul.u32.u64.compose %v687, %v682
        %v692 = vextract.low.u32 %v691
        %v693 = vextract.high.u32 %v691
        %v694 = vmul.u32 %v687, %v678
        %v695 = vadd.s32 %v690, %v692
        %vm696 = vc.u32 %v690, %v692
        %v697 = vadd.s32 %v693, 1
        %v698 = vsel %vm696, %v697, %v693
        %v699 = vadd.s32 %v694, %v698
        %v700 = vadd.s32 %v699, 536870912
        %v701 = vshrl.u32 %v700, 30
        %v702 = vshll.u32 %v701, 30
        %v703 = vsub.s32 %v699, %v702
        %vm704 = vcmp.lt.s32.totalorder %v703, 0
        %v705 = vsub.s32 0, %v703
        %v706 = vsel %vm704, %v705, %v703
        %v707 = vclz %v706
        %v708 = vsub.s32 %v707, 2
        %vm709 = vcmp.gt.s32.totalorder 0, %v708
        %v710 = vsel %vm709, 0, %v708
        %v711 = vsub.s32 32, %v710
        %v712 = vshll.u32 %v703, %v710
        %v713 = vshrl.u32 %v695, %v711
        %v714 = vor.u32 %v712, %v713
        %v715 = vsub.s32 4294967266, %v710
        %v716 = vadd.s32 %v715, 127
        %v717 = vshll.u32 %v716, 23
        %v718 = vor.u32 4788187, %v717
        %v719 = vand.u32 2147483647, %v718
        %v721 = vcvt.s32.f32 %v714
        %v722 = vmul.f32 %v721, %v719
        %v723 = vxor.u32 %v722, 2147483648
        %v724 = vsel %vm641, %v723, %v722
        %v725 = vsub.s32 4, %v701
        %v726 = vsel %vm641, %v725, %v701
        %v727 = vsel %vm640, %v521, %v724
        %v728 = vsel %vm640, 0, %v726
        %v729 = vcosq.f32.pop %v727
        %v730 = vsinq.f32.pop %v727
        %vm731 = vweird.f32 %v521
        %v732 = vand.u32 %v728, 3
        %vm733 = vcmp.lt.s32.totalorder %v732, 2
        %vm734 = vcmp.eq.s32.totalorder %v732, 0
        %v735 = vxor.u32 %v730, 2147483648
        %v736 = vsel %vm734, %v729, %v735
        %vm737 = vcmp.eq.s32.totalorder %v732, 2
        %v738 = vxor.u32 %v729, 2147483648
        %v739 = vsel %vm737, %v738, %v730
        %v740 = vsel %vm733, %v736, %v739
        %v741 = vsel %vm731, nan, %v740
        %v742 = vand.u32 2147483647, %v522
        %vm743 = vcmp.le.f32.partialorder %v742, 0.7853982
        %vm744 = vcmp.lt.s32.totalorder %v522, 0
        %v745 = vand.u32 %v522, 2139095040
        %v746 = vshrl.u32 %v745, 23
        %v747 = vsub.s32 %v746, 127
        %v748 = vand.u32 2147483647, %v522
        %v749 = vand.u32 %v748, 8388607
        %v750 = vor.u32 %v749, 8388608
        %v751 = vsub.s32 0, %v750
        %v752 = vadd.s32 %v747, 1
        %vm753 = vcmp.gt.s32.totalorder %v752, 0
        %v754 = vsel %vm753, %v752, 0
        %v755 = vshrl.u32 %v754, 5
        %v756 = vand.u32 %v754, 31
        %v757 = vsub.s32 32, %v756
        %v758 = vshrl.u32 683565275, %v757
        %v759 = vshll.u32 683565275, %v756
        %v760 = vshrl.u32 2475754826, %v757
        %v761 = vor.u32 %v759, %v760
        %v762 = vshll.u32 2475754826, %v756
        %v763 = vshrl.u32 2131351028, %v757
        %v764 = vor.u32 %v762, %v763
        %v765 = vshll.u32 2131351028, %v756
        %v766 = vshrl.u32 2102212464, %v757
        %v767 = vor.u32 %v765, %v766
        %v768 = vshll.u32 2102212464, %v756
        %v769 = vshrl.u32 920167782, %v757
        %v770 = vor.u32 %v768, %v769
        %v771 = vshll.u32 920167782, %v756
        %v772 = vshrl.u32 1326507024, %v757
        %v773 = vor.u32 %v771, %v772
        %vm774 = vcmp.lt.s32.totalorder %v755, 1
        %vm775 = vcmp.lt.s32.totalorder %v755, 2
        %vm776 = vcmp.lt.s32.totalorder %v755, 3
        %vm777 = vcmp.lt.s32.totalorder %v755, 4
        %v778 = vsel %vm774, %v758, %v761
        %v779 = vsel %vm777, %v767, 2102212464
        %v780 = vsel %vm776, %v764, %v779
        %v781 = vsel %vm775, %v778, %v780
        %v782 = vsel %vm774, %v761, %v764
        %v783 = vsel %vm777, %v770, 920167782
        %v784 = vsel %vm776, %v767, %v783
        %v785 = vsel %vm775, %v782, %v784
        %v786 = vsel %vm774, %v764, %v767
        %v787 = vsel %vm777, %v773, 1326507024
        %v788 = vsel %vm776, %v770, %v787
        %v789 = vsel %vm775, %v786, %v788
        %v790 = vshll.u32 %v750, 8
        %v791 = vmul.u32.u64.compose %v790, %v789
        %v792 = vextract.low.u32 %v791
        %v793 = vextract.high.u32 %v791
        %v794 = vmul.u32.u64.compose %v790, %v785
        %v795 = vextract.low.u32 %v794
        %v796 = vextract.high.u32 %v794
        %v797 = vmul.u32 %v790, %v781
        %v798 = vadd.s32 %v793, %v795
        %vm799 = vc.u32 %v793, %v795
        %v800 = vadd.s32 %v796, 1
        %v801 = vsel %vm799, %v800, %v796
        %v802 = vadd.s32 %v797, %v801
        %v803 = vadd.s32 %v802, 536870912
        %v804 = vshrl.u32 %v803, 30
        %v805 = vshll.u32 %v804, 30
        %v806 = vsub.s32 %v802, %v805
        %vm807 = vcmp.lt.s32.totalorder %v806, 0
        %v808 = vsub.s32 0, %v806
        %v809 = vsel %vm807, %v808, %v806
        %v810 = vclz %v809
        %v811 = vsub.s32 %v810, 2
        %vm812 = vcmp.gt.s32.totalorder 0, %v811
        %v813 = vsel %vm812, 0, %v811
        %v814 = vsub.s32 32, %v813
        %v815 = vshll.u32 %v806, %v813
        %v816 = vshrl.u32 %v798, %v814
        %v817 = vor.u32 %v815, %v816
        %v818 = vsub.s32 4294967266, %v813
        %v819 = vadd.s32 %v818, 127
        %v820 = vshll.u32 %v819, 23
        %v821 = vor.u32 4788187, %v820
        %v822 = vand.u32 2147483647, %v821
        %v824 = vcvt.s32.f32 %v817
        %v825 = vmul.f32 %v824, %v822
        %v826 = vxor.u32 %v825, 2147483648
        %v827 = vsel %vm744, %v826, %v825
        %v828 = vsub.s32 4, %v804
        %v829 = vsel %vm744, %v828, %v804
        %v830 = vsel %vm743, %v522, %v827
        %v831 = vsel %vm743, 0, %v829
        %v832 = vcosq.f32.pop %v830
        %v833 = vsinq.f32.pop %v830
        %vm834 = vweird.f32 %v522
        %v835 = vand.u32 %v831, 3
        %vm836 = vcmp.lt.s32.totalorder %v835, 2
        %vm837 = vcmp.eq.s32.totalorder %v835, 0
        %v838 = vxor.u32 %v833, 2147483648
        %v839 = vsel %vm837, %v832, %v838
        %vm840 = vcmp.eq.s32.totalorder %v835, 2
        %v841 = vxor.u32 %v832, 2147483648
        %v842 = vsel %vm840, %v841, %v833
        %v843 = vsel %vm836, %v839, %v842
        %v844 = vsel %vm834, nan, %v843
        %v845 = vand.u32 2147483647, %v523
        %vm846 = vcmp.le.f32.partialorder %v845, 0.7853982
        %vm847 = vcmp.lt.s32.totalorder %v523, 0
        %v848 = vand.u32 %v523, 2139095040
        %v849 = vshrl.u32 %v848, 23
        %v850 = vsub.s32 %v849, 127
        %v851 = vand.u32 2147483647, %v523
        %v852 = vand.u32 %v851, 8388607
        %v853 = vor.u32 %v852, 8388608
        %v854 = vsub.s32 0, %v853
        %v855 = vadd.s32 %v850, 1
        %vm856 = vcmp.gt.s32.totalorder %v855, 0
        %v857 = vsel %vm856, %v855, 0
        %v858 = vshrl.u32 %v857, 5
        %v859 = vand.u32 %v857, 31
        %v860 = vsub.s32 32, %v859
        %v861 = vshrl.u32 683565275, %v860
        %v862 = vshll.u32 683565275, %v859
        %v863 = vshrl.u32 2475754826, %v860
        %v864 = vor.u32 %v862, %v863
        %v865 = vshll.u32 2475754826, %v859
        %v866 = vshrl.u32 2131351028, %v860
        %v867 = vor.u32 %v865, %v866
        %v868 = vshll.u32 2131351028, %v859
        %v869 = vshrl.u32 2102212464, %v860
        %v870 = vor.u32 %v868, %v869
        %v871 = vshll.u32 2102212464, %v859
        %v872 = vshrl.u32 920167782, %v860
        %v873 = vor.u32 %v871, %v872
        %v874 = vshll.u32 920167782, %v859
        %v875 = vshrl.u32 1326507024, %v860
        %v876 = vor.u32 %v874, %v875
        %vm877 = vcmp.lt.s32.totalorder %v858, 1
        %vm878 = vcmp.lt.s32.totalorder %v858, 2
        %vm879 = vcmp.lt.s32.totalorder %v858, 3
        %vm880 = vcmp.lt.s32.totalorder %v858, 4
        %v881 = vsel %vm877, %v861, %v864
        %v882 = vsel %vm880, %v870, 2102212464
        %v883 = vsel %vm879, %v867, %v882
        %v884 = vsel %vm878, %v881, %v883
        %v885 = vsel %vm877, %v864, %v867
        %v886 = vsel %vm880, %v873, 920167782
        %v887 = vsel %vm879, %v870, %v886
        %v888 = vsel %vm878, %v885, %v887
        %v889 = vsel %vm877, %v867, %v870
        %v890 = vsel %vm880, %v876, 1326507024
        %v891 = vsel %vm879, %v873, %v890
        %v892 = vsel %vm878, %v889, %v891
        %v893 = vshll.u32 %v853, 8
        %v894 = vmul.u32.u64.compose %v893, %v892
        %v895 = vextract.low.u32 %v894
        %v896 = vextract.high.u32 %v894
        %v897 = vmul.u32.u64.compose %v893, %v888
        %v898 = vextract.low.u32 %v897
        %v899 = vextract.high.u32 %v897
        %v900 = vmul.u32 %v893, %v884
        %v901 = vadd.s32 %v896, %v898
        %vm902 = vc.u32 %v896, %v898
        %v903 = vadd.s32 %v899, 1
        %v904 = vsel %vm902, %v903, %v899
        %v905 = vadd.s32 %v900, %v904
        %v906 = vadd.s32 %v905, 536870912
        %v907 = vshrl.u32 %v906, 30
        %v908 = vshll.u32 %v907, 30
        %v909 = vsub.s32 %v905, %v908
        %vm910 = vcmp.lt.s32.totalorder %v909, 0
        %v911 = vsub.s32 0, %v909
        %v912 = vsel %vm910, %v911, %v909
        %v913 = vclz %v912
        %v914 = vsub.s32 %v913, 2
        %vm915 = vcmp.gt.s32.totalorder 0, %v914
        %v916 = vsel %vm915, 0, %v914
        %v917 = vsub.s32 32, %v916
        %v918 = vshll.u32 %v909, %v916
        %v919 = vshrl.u32 %v901, %v917
        %v920 = vor.u32 %v918, %v919
        %v921 = vsub.s32 4294967266, %v916
        %v922 = vadd.s32 %v921, 127
        %v923 = vshll.u32 %v922, 23
        %v924 = vor.u32 4788187, %v923
        %v925 = vand.u32 2147483647, %v924
        %v927 = vcvt.s32.f32 %v920
        %v928 = vmul.f32 %v927, %v925
        %v929 = vxor.u32 %v928, 2147483648
        %v930 = vsel %vm847, %v929, %v928
        %v931 = vsub.s32 4, %v907
        %v932 = vsel %vm847, %v931, %v907
        %v933 = vsel %vm846, %v523, %v930
        %v934 = vsel %vm846, 0, %v932
        %v935 = vcosq.f32.pop %v933
        %v936 = vsinq.f32.pop %v933
        %vm937 = vweird.f32 %v523
        %v938 = vand.u32 %v934, 3
        %vm939 = vcmp.lt.s32.totalorder %v938, 2
        %vm940 = vcmp.eq.s32.totalorder %v938, 0
        %v941 = vxor.u32 %v936, 2147483648
        %v942 = vsel %vm940, %v935, %v941
        %vm943 = vcmp.eq.s32.totalorder %v938, 2
        %v944 = vxor.u32 %v935, 2147483648
        %v945 = vsel %vm943, %v944, %v936
        %v946 = vsel %vm939, %v942, %v945
        %v947 = vsel %vm937, nan, %v946
        %v948 = vand.u32 2147483647, %v524
        %vm949 = vcmp.le.f32.partialorder %v948, 0.7853982
        %vm950 = vcmp.lt.s32.totalorder %v524, 0
        %v951 = vand.u32 %v524, 2139095040
        %v952 = vshrl.u32 %v951, 23
        %v953 = vsub.s32 %v952, 127
        %v954 = vand.u32 2147483647, %v524
        %v955 = vand.u32 %v954, 8388607
        %v956 = vor.u32 %v955, 8388608
        %v957 = vsub.s32 0, %v956
        %v958 = vadd.s32 %v953, 1
        %vm959 = vcmp.gt.s32.totalorder %v958, 0
        %v960 = vsel %vm959, %v958, 0
        %v961 = vshrl.u32 %v960, 5
        %v962 = vand.u32 %v960, 31
        %v963 = vsub.s32 32, %v962
        %v964 = vshrl.u32 683565275, %v963
        %v965 = vshll.u32 683565275, %v962
        %v966 = vshrl.u32 2475754826, %v963
        %v967 = vor.u32 %v965, %v966
        %v968 = vshll.u32 2475754826, %v962
        %v969 = vshrl.u32 2131351028, %v963
        %v970 = vor.u32 %v968, %v969
        %v971 = vshll.u32 2131351028, %v962
        %v972 = vshrl.u32 2102212464, %v963
        %v973 = vor.u32 %v971, %v972
        %v974 = vshll.u32 2102212464, %v962
        %v975 = vshrl.u32 920167782, %v963
        %v976 = vor.u32 %v974, %v975
        %v977 = vshll.u32 920167782, %v962
        %v978 = vshrl.u32 1326507024, %v963
        %v979 = vor.u32 %v977, %v978
        %vm980 = vcmp.lt.s32.totalorder %v961, 1
        %vm981 = vcmp.lt.s32.totalorder %v961, 2
        %vm982 = vcmp.lt.s32.totalorder %v961, 3
        %vm983 = vcmp.lt.s32.totalorder %v961, 4
        %v984 = vsel %vm980, %v964, %v967
        %v985 = vsel %vm983, %v973, 2102212464
        %v986 = vsel %vm982, %v970, %v985
        %v987 = vsel %vm981, %v984, %v986
        %v988 = vsel %vm980, %v967, %v970
        %v989 = vsel %vm983, %v976, 920167782
        %v990 = vsel %vm982, %v973, %v989
        %v991 = vsel %vm981, %v988, %v990
        %v992 = vsel %vm980, %v970, %v973
        %v993 = vsel %vm983, %v979, 1326507024
        %v994 = vsel %vm982, %v976, %v993
        %v995 = vsel %vm981, %v992, %v994
        %v996 = vshll.u32 %v956, 8
        %v997 = vmul.u32.u64.compose %v996, %v995
        %v998 = vextract.low.u32 %v997
        %v999 = vextract.high.u32 %v997
        %v1000 = vmul.u32.u64.compose %v996, %v991
        %v1001 = vextract.low.u32 %v1000
        %v1002 = vextract.high.u32 %v1000
        %v1003 = vmul.u32 %v996, %v987
        %v1004 = vadd.s32 %v999, %v1001
        %vm1005 = vc.u32 %v999, %v1001
        %v1006 = vadd.s32 %v1002, 1
        %v1007 = vsel %vm1005, %v1006, %v1002
        %v1008 = vadd.s32 %v1003, %v1007
        %v1009 = vadd.s32 %v1008, 536870912
        %v1010 = vshrl.u32 %v1009, 30
        %v1011 = vshll.u32 %v1010, 30
        %v1012 = vsub.s32 %v1008, %v1011
        %vm1013 = vcmp.lt.s32.totalorder %v1012, 0
        %v1014 = vsub.s32 0, %v1012
        %v1015 = vsel %vm1013, %v1014, %v1012
        %v1016 = vclz %v1015
        %v1017 = vsub.s32 %v1016, 2
        %vm1018 = vcmp.gt.s32.totalorder 0, %v1017
        %v1019 = vsel %vm1018, 0, %v1017
        %v1020 = vsub.s32 32, %v1019
        %v1021 = vshll.u32 %v1012, %v1019
        %v1022 = vshrl.u32 %v1004, %v1020
        %v1023 = vor.u32 %v1021, %v1022
        %v1024 = vsub.s32 4294967266, %v1019
        %v1025 = vadd.s32 %v1024, 127
        %v1026 = vshll.u32 %v1025, 23
        %v1027 = vor.u32 4788187, %v1026
        %v1028 = vand.u32 2147483647, %v1027
        %v1030 = vcvt.s32.f32 %v1023
        %v1031 = vmul.f32 %v1030, %v1028
        %v1032 = vxor.u32 %v1031, 2147483648
        %v1033 = vsel %vm950, %v1032, %v1031
        %v1034 = vsub.s32 4, %v1010
        %v1035 = vsel %vm950, %v1034, %v1010
        %v1036 = vsel %vm949, %v524, %v1033
        %v1037 = vsel %vm949, 0, %v1035
        %v1038 = vcosq.f32.pop %v1036
        %v1039 = vsinq.f32.pop %v1036
        %vm1040 = vweird.f32 %v524
        %v1041 = vand.u32 %v1037, 3
        %vm1042 = vcmp.lt.s32.totalorder %v1041, 2
        %vm1043 = vcmp.eq.s32.totalorder %v1041, 0
        %v1044 = vxor.u32 %v1039, 2147483648
        %v1045 = vsel %vm1043, %v1038, %v1044
        %vm1046 = vcmp.eq.s32.totalorder %v1041, 2
        %v1047 = vxor.u32 %v1038, 2147483648
        %v1048 = vsel %vm1046, %v1047, %v1039
        %v1049 = vsel %vm1042, %v1045, %v1048
        %v1050 = vsel %vm1040, nan, %v1049
        %v1051 = vand.u32 2147483647, %v525
        %vm1052 = vcmp.le.f32.partialorder %v1051, 0.7853982
        %vm1053 = vcmp.lt.s32.totalorder %v525, 0
        %v1054 = vand.u32 %v525, 2139095040
        %v1055 = vshrl.u32 %v1054, 23
        %v1056 = vsub.s32 %v1055, 127
        %v1057 = vand.u32 2147483647, %v525
        %v1058 = vand.u32 %v1057, 8388607
        %v1059 = vor.u32 %v1058, 8388608
        %v1060 = vsub.s32 0, %v1059
        %v1061 = vadd.s32 %v1056, 1
        %vm1062 = vcmp.gt.s32.totalorder %v1061, 0
        %v1063 = vsel %vm1062, %v1061, 0
        %v1064 = vshrl.u32 %v1063, 5
        %v1065 = vand.u32 %v1063, 31
        %v1066 = vsub.s32 32, %v1065
        %v1067 = vshrl.u32 683565275, %v1066
        %v1068 = vshll.u32 683565275, %v1065
        %v1069 = vshrl.u32 2475754826, %v1066
        %v1070 = vor.u32 %v1068, %v1069
        %v1071 = vshll.u32 2475754826, %v1065
        %v1072 = vshrl.u32 2131351028, %v1066
        %v1073 = vor.u32 %v1071, %v1072
        %v1074 = vshll.u32 2131351028, %v1065
        %v1075 = vshrl.u32 2102212464, %v1066
        %v1076 = vor.u32 %v1074, %v1075
        %v1077 = vshll.u32 2102212464, %v1065
        %v1078 = vshrl.u32 920167782, %v1066
        %v1079 = vor.u32 %v1077, %v1078
        %v1080 = vshll.u32 920167782, %v1065
        %v1081 = vshrl.u32 1326507024, %v1066
        %v1082 = vor.u32 %v1080, %v1081
        %vm1083 = vcmp.lt.s32.totalorder %v1064, 1
        %vm1084 = vcmp.lt.s32.totalorder %v1064, 2
        %vm1085 = vcmp.lt.s32.totalorder %v1064, 3
        %vm1086 = vcmp.lt.s32.totalorder %v1064, 4
        %v1087 = vsel %vm1083, %v1067, %v1070
        %v1088 = vsel %vm1086, %v1076, 2102212464
        %v1089 = vsel %vm1085, %v1073, %v1088
        %v1090 = vsel %vm1084, %v1087, %v1089
        %v1091 = vsel %vm1083, %v1070, %v1073
        %v1092 = vsel %vm1086, %v1079, 920167782
        %v1093 = vsel %vm1085, %v1076, %v1092
        %v1094 = vsel %vm1084, %v1091, %v1093
        %v1095 = vsel %vm1083, %v1073, %v1076
        %v1096 = vsel %vm1086, %v1082, 1326507024
        %v1097 = vsel %vm1085, %v1079, %v1096
        %v1098 = vsel %vm1084, %v1095, %v1097
        %v1099 = vshll.u32 %v1059, 8
        %v1100 = vmul.u32.u64.compose %v1099, %v1098
        %v1101 = vextract.low.u32 %v1100
        %v1102 = vextract.high.u32 %v1100
        %v1103 = vmul.u32.u64.compose %v1099, %v1094
        %v1104 = vextract.low.u32 %v1103
        %v1105 = vextract.high.u32 %v1103
        %v1106 = vmul.u32 %v1099, %v1090
        %v1107 = vadd.s32 %v1102, %v1104
        %vm1108 = vc.u32 %v1102, %v1104
        %v1109 = vadd.s32 %v1105, 1
        %v1110 = vsel %vm1108, %v1109, %v1105
        %v1111 = vadd.s32 %v1106, %v1110
        %v1112 = vadd.s32 %v1111, 536870912
        %v1113 = vshrl.u32 %v1112, 30
        %v1114 = vshll.u32 %v1113, 30
        %v1115 = vsub.s32 %v1111, %v1114
        %vm1116 = vcmp.lt.s32.totalorder %v1115, 0
        %v1117 = vsub.s32 0, %v1115
        %v1118 = vsel %vm1116, %v1117, %v1115
        %v1119 = vclz %v1118
        %v1120 = vsub.s32 %v1119, 2
        %vm1121 = vcmp.gt.s32.totalorder 0, %v1120
        %v1122 = vsel %vm1121, 0, %v1120
        %v1123 = vsub.s32 32, %v1122
        %v1124 = vshll.u32 %v1115, %v1122
        %v1125 = vshrl.u32 %v1107, %v1123
        %v1126 = vor.u32 %v1124, %v1125
        %v1127 = vsub.s32 4294967266, %v1122
        %v1128 = vadd.s32 %v1127, 127
        %v1129 = vshll.u32 %v1128, 23
        %v1130 = vor.u32 4788187, %v1129
        %v1131 = vand.u32 2147483647, %v1130
        %v1133 = vcvt.s32.f32 %v1126
        %v1134 = vmul.f32 %v1133, %v1131
        %v1135 = vxor.u32 %v1134, 2147483648
        %v1136 = vsel %vm1053, %v1135, %v1134
        %v1137 = vsub.s32 4, %v1113
        %v1138 = vsel %vm1053, %v1137, %v1113
        %v1139 = vsel %vm1052, %v525, %v1136
        %v1140 = vsel %vm1052, 0, %v1138
        %v1141 = vcosq.f32.pop %v1139
        %v1142 = vsinq.f32.pop %v1139
        %vm1143 = vweird.f32 %v525
        %v1144 = vand.u32 %v1140, 3
        %vm1145 = vcmp.lt.s32.totalorder %v1144, 2
        %vm1146 = vcmp.eq.s32.totalorder %v1144, 0
        %v1147 = vxor.u32 %v1142, 2147483648
        %v1148 = vsel %vm1146, %v1141, %v1147
        %vm1149 = vcmp.eq.s32.totalorder %v1144, 2
        %v1150 = vxor.u32 %v1141, 2147483648
        %v1151 = vsel %vm1149, %v1150, %v1142
        %v1152 = vsel %vm1145, %v1148, %v1151
        %v1153 = vsel %vm1143, nan, %v1152
        %v1154 = vand.u32 2147483647, %v526
        %vm1155 = vcmp.le.f32.partialorder %v1154, 0.7853982
        %vm1156 = vcmp.lt.s32.totalorder %v526, 0
        %v1157 = vand.u32 %v526, 2139095040
        %v1158 = vshrl.u32 %v1157, 23
        %v1159 = vsub.s32 %v1158, 127
        %v1160 = vand.u32 2147483647, %v526
        %v1161 = vand.u32 %v1160, 8388607
        %v1162 = vor.u32 %v1161, 8388608
        %v1163 = vsub.s32 0, %v1162
        %v1164 = vadd.s32 %v1159, 1
        %vm1165 = vcmp.gt.s32.totalorder %v1164, 0
        %v1166 = vsel %vm1165, %v1164, 0
        %v1167 = vshrl.u32 %v1166, 5
        %v1168 = vand.u32 %v1166, 31
        %v1169 = vsub.s32 32, %v1168
        %v1170 = vshrl.u32 683565275, %v1169
        %v1171 = vshll.u32 683565275, %v1168
        %v1172 = vshrl.u32 2475754826, %v1169
        %v1173 = vor.u32 %v1171, %v1172
        %v1174 = vshll.u32 2475754826, %v1168
        %v1175 = vshrl.u32 2131351028, %v1169
        %v1176 = vor.u32 %v1174, %v1175
        %v1177 = vshll.u32 2131351028, %v1168
        %v1178 = vshrl.u32 2102212464, %v1169
        %v1179 = vor.u32 %v1177, %v1178
        %v1180 = vshll.u32 2102212464, %v1168
        %v1181 = vshrl.u32 920167782, %v1169
        %v1182 = vor.u32 %v1180, %v1181
        %v1183 = vshll.u32 920167782, %v1168
        %v1184 = vshrl.u32 1326507024, %v1169
        %v1185 = vor.u32 %v1183, %v1184
        %vm1186 = vcmp.lt.s32.totalorder %v1167, 1
        %vm1187 = vcmp.lt.s32.totalorder %v1167, 2
        %vm1188 = vcmp.lt.s32.totalorder %v1167, 3
        %vm1189 = vcmp.lt.s32.totalorder %v1167, 4
        %v1190 = vsel %vm1186, %v1170, %v1173
        %v1191 = vsel %vm1189, %v1179, 2102212464
        %v1192 = vsel %vm1188, %v1176, %v1191
        %v1193 = vsel %vm1187, %v1190, %v1192
        %v1194 = vsel %vm1186, %v1173, %v1176
        %v1195 = vsel %vm1189, %v1182, 920167782
        %v1196 = vsel %vm1188, %v1179, %v1195
        %v1197 = vsel %vm1187, %v1194, %v1196
        %v1198 = vsel %vm1186, %v1176, %v1179
        %v1199 = vsel %vm1189, %v1185, 1326507024
        %v1200 = vsel %vm1188, %v1182, %v1199
        %v1201 = vsel %vm1187, %v1198, %v1200
        %v1202 = vshll.u32 %v1162, 8
        %v1203 = vmul.u32.u64.compose %v1202, %v1201
        %v1204 = vextract.low.u32 %v1203
        %v1205 = vextract.high.u32 %v1203
        %v1206 = vmul.u32.u64.compose %v1202, %v1197
        %v1207 = vextract.low.u32 %v1206
        %v1208 = vextract.high.u32 %v1206
        %v1209 = vmul.u32 %v1202, %v1193
        %v1210 = vadd.s32 %v1205, %v1207
        %vm1211 = vc.u32 %v1205, %v1207
        %v1212 = vadd.s32 %v1208, 1
        %v1213 = vsel %vm1211, %v1212, %v1208
        %v1214 = vadd.s32 %v1209, %v1213
        %v1215 = vadd.s32 %v1214, 536870912
        %v1216 = vshrl.u32 %v1215, 30
        %v1217 = vshll.u32 %v1216, 30
        %v1218 = vsub.s32 %v1214, %v1217
        %vm1219 = vcmp.lt.s32.totalorder %v1218, 0
        %v1220 = vsub.s32 0, %v1218
        %v1221 = vsel %vm1219, %v1220, %v1218
        %v1222 = vclz %v1221
        %v1223 = vsub.s32 %v1222, 2
        %vm1224 = vcmp.gt.s32.totalorder 0, %v1223
        %v1225 = vsel %vm1224, 0, %v1223
        %v1226 = vsub.s32 32, %v1225
        %v1227 = vshll.u32 %v1218, %v1225
        %v1228 = vshrl.u32 %v1210, %v1226
        %v1229 = vor.u32 %v1227, %v1228
        %v1230 = vsub.s32 4294967266, %v1225
        %v1231 = vadd.s32 %v1230, 127
        %v1232 = vshll.u32 %v1231, 23
        %v1233 = vor.u32 4788187, %v1232
        %v1234 = vand.u32 2147483647, %v1233
        %v1236 = vcvt.s32.f32 %v1229
        %v1237 = vmul.f32 %v1236, %v1234
        %v1238 = vxor.u32 %v1237, 2147483648
        %v1239 = vsel %vm1156, %v1238, %v1237
        %v1240 = vsub.s32 4, %v1216
        %v1241 = vsel %vm1156, %v1240, %v1216
        %v1242 = vsel %vm1155, %v526, %v1239
        %v1243 = vsel %vm1155, 0, %v1241
        %v1244 = vcosq.f32.pop %v1242
        %v1245 = vsinq.f32.pop %v1242
        %vm1246 = vweird.f32 %v526
        %v1247 = vand.u32 %v1243, 3
        %vm1248 = vcmp.lt.s32.totalorder %v1247, 2
        %vm1249 = vcmp.eq.s32.totalorder %v1247, 0
        %v1250 = vxor.u32 %v1245, 2147483648
        %v1251 = vsel %vm1249, %v1244, %v1250
        %vm1252 = vcmp.eq.s32.totalorder %v1247, 2
        %v1253 = vxor.u32 %v1244, 2147483648
        %v1254 = vsel %vm1252, %v1253, %v1245
        %v1255 = vsel %vm1248, %v1251, %v1254
        %v1256 = vsel %vm1246, nan, %v1255
        %v1257 = vand.u32 2147483647, %v527
        %vm1258 = vcmp.le.f32.partialorder %v1257, 0.7853982
        %vm1259 = vcmp.lt.s32.totalorder %v527, 0
        %v1260 = vand.u32 %v527, 2139095040
        %v1261 = vshrl.u32 %v1260, 23
        %v1262 = vsub.s32 %v1261, 127
        %v1263 = vand.u32 2147483647, %v527
        %v1264 = vand.u32 %v1263, 8388607
        %v1265 = vor.u32 %v1264, 8388608
        %v1266 = vsub.s32 0, %v1265
        %v1267 = vadd.s32 %v1262, 1
        %vm1268 = vcmp.gt.s32.totalorder %v1267, 0
        %v1269 = vsel %vm1268, %v1267, 0
        %v1270 = vshrl.u32 %v1269, 5
        %v1271 = vand.u32 %v1269, 31
        %v1272 = vsub.s32 32, %v1271
        %v1273 = vshrl.u32 683565275, %v1272
        %v1274 = vshll.u32 683565275, %v1271
        %v1275 = vshrl.u32 2475754826, %v1272
        %v1276 = vor.u32 %v1274, %v1275
        %v1277 = vshll.u32 2475754826, %v1271
        %v1278 = vshrl.u32 2131351028, %v1272
        %v1279 = vor.u32 %v1277, %v1278
        %v1280 = vshll.u32 2131351028, %v1271
        %v1281 = vshrl.u32 2102212464, %v1272
        %v1282 = vor.u32 %v1280, %v1281
        %v1283 = vshll.u32 2102212464, %v1271
        %v1284 = vshrl.u32 920167782, %v1272
        %v1285 = vor.u32 %v1283, %v1284
        %v1286 = vshll.u32 920167782, %v1271
        %v1287 = vshrl.u32 1326507024, %v1272
        %v1288 = vor.u32 %v1286, %v1287
        %vm1289 = vcmp.lt.s32.totalorder %v1270, 1
        %vm1290 = vcmp.lt.s32.totalorder %v1270, 2
        %vm1291 = vcmp.lt.s32.totalorder %v1270, 3
        %vm1292 = vcmp.lt.s32.totalorder %v1270, 4
        %v1293 = vsel %vm1289, %v1273, %v1276
        %v1294 = vsel %vm1292, %v1282, 2102212464
        %v1295 = vsel %vm1291, %v1279, %v1294
        %v1296 = vsel %vm1290, %v1293, %v1295
        %v1297 = vsel %vm1289, %v1276, %v1279
        %v1298 = vsel %vm1292, %v1285, 920167782
        %v1299 = vsel %vm1291, %v1282, %v1298
        %v1300 = vsel %vm1290, %v1297, %v1299
        %v1301 = vsel %vm1289, %v1279, %v1282
        %v1302 = vsel %vm1292, %v1288, 1326507024
        %v1303 = vsel %vm1291, %v1285, %v1302
        %v1304 = vsel %vm1290, %v1301, %v1303
        %v1305 = vshll.u32 %v1265, 8
        %v1306 = vmul.u32.u64.compose %v1305, %v1304
        %v1307 = vextract.low.u32 %v1306
        %v1308 = vextract.high.u32 %v1306
        %v1309 = vmul.u32.u64.compose %v1305, %v1300
        %v1310 = vextract.low.u32 %v1309
        %v1311 = vextract.high.u32 %v1309
        %v1312 = vmul.u32 %v1305, %v1296
        %v1313 = vadd.s32 %v1308, %v1310
        %vm1314 = vc.u32 %v1308, %v1310
        %v1315 = vadd.s32 %v1311, 1
        %v1316 = vsel %vm1314, %v1315, %v1311
        %v1317 = vadd.s32 %v1312, %v1316
        %v1318 = vadd.s32 %v1317, 536870912
        %v1319 = vshrl.u32 %v1318, 30
        %v1320 = vshll.u32 %v1319, 30
        %v1321 = vsub.s32 %v1317, %v1320
        %vm1322 = vcmp.lt.s32.totalorder %v1321, 0
        %v1323 = vsub.s32 0, %v1321
        %v1324 = vsel %vm1322, %v1323, %v1321
        %v1325 = vclz %v1324
        %v1326 = vsub.s32 %v1325, 2
        %vm1327 = vcmp.gt.s32.totalorder 0, %v1326
        %v1328 = vsel %vm1327, 0, %v1326
        %v1329 = vsub.s32 32, %v1328
        %v1330 = vshll.u32 %v1321, %v1328
        %v1331 = vshrl.u32 %v1313, %v1329
        %v1332 = vor.u32 %v1330, %v1331
        %v1333 = vsub.s32 4294967266, %v1328
        %v1334 = vadd.s32 %v1333, 127
        %v1335 = vshll.u32 %v1334, 23
        %v1336 = vor.u32 4788187, %v1335
        %v1337 = vand.u32 2147483647, %v1336
        %v1339 = vcvt.s32.f32 %v1332
        %v1340 = vmul.f32 %v1339, %v1337
        %v1341 = vxor.u32 %v1340, 2147483648
        %v1342 = vsel %vm1259, %v1341, %v1340
        %v1343 = vsub.s32 4, %v1319
        %v1344 = vsel %vm1259, %v1343, %v1319
        %v1345 = vsel %vm1258, %v527, %v1342
        %v1346 = vsel %vm1258, 0, %v1344
        %v1347 = vcosq.f32.pop %v1345
        %v1348 = vsinq.f32.pop %v1345
        %vm1349 = vweird.f32 %v527
        %v1350 = vand.u32 %v1346, 3
        %vm1351 = vcmp.lt.s32.totalorder %v1350, 2
        %vm1352 = vcmp.eq.s32.totalorder %v1350, 0
        %v1353 = vxor.u32 %v1348, 2147483648
        %v1354 = vsel %vm1352, %v1347, %v1353
        %vm1355 = vcmp.eq.s32.totalorder %v1350, 2
        %v1356 = vxor.u32 %v1347, 2147483648
        %v1357 = vsel %vm1355, %v1356, %v1348
        %v1358 = vsel %vm1351, %v1354, %v1357
        %v1359 = vsel %vm1349, nan, %v1358
        %v1360 = vand.u32 2147483647, %v528
        %vm1361 = vcmp.le.f32.partialorder %v1360, 0.7853982
        %vm1362 = vcmp.lt.s32.totalorder %v528, 0
        %v1363 = vand.u32 %v528, 2139095040
        %v1364 = vshrl.u32 %v1363, 23
        %v1365 = vsub.s32 %v1364, 127
        %v1366 = vand.u32 2147483647, %v528
        %v1367 = vand.u32 %v1366, 8388607
        %v1368 = vor.u32 %v1367, 8388608
        %v1369 = vsub.s32 0, %v1368
        %v1370 = vadd.s32 %v1365, 1
        %vm1371 = vcmp.gt.s32.totalorder %v1370, 0
        %v1372 = vsel %vm1371, %v1370, 0
        %v1373 = vshrl.u32 %v1372, 5
        %v1374 = vand.u32 %v1372, 31
        %v1375 = vsub.s32 32, %v1374
        %v1376 = vshrl.u32 683565275, %v1375
        %v1377 = vshll.u32 683565275, %v1374
        %v1378 = vshrl.u32 2475754826, %v1375
        %v1379 = vor.u32 %v1377, %v1378
        %v1380 = vshll.u32 2475754826, %v1374
        %v1381 = vshrl.u32 2131351028, %v1375
        %v1382 = vor.u32 %v1380, %v1381
        %v1383 = vshll.u32 2131351028, %v1374
        %v1384 = vshrl.u32 2102212464, %v1375
        %v1385 = vor.u32 %v1383, %v1384
        %v1386 = vshll.u32 2102212464, %v1374
        %v1387 = vshrl.u32 920167782, %v1375
        %v1388 = vor.u32 %v1386, %v1387
        %v1389 = vshll.u32 920167782, %v1374
        %v1390 = vshrl.u32 1326507024, %v1375
        %v1391 = vor.u32 %v1389, %v1390
        %vm1392 = vcmp.lt.s32.totalorder %v1373, 1
        %vm1393 = vcmp.lt.s32.totalorder %v1373, 2
        %vm1394 = vcmp.lt.s32.totalorder %v1373, 3
        %vm1395 = vcmp.lt.s32.totalorder %v1373, 4
        %v1396 = vsel %vm1392, %v1376, %v1379
        %v1397 = vsel %vm1395, %v1385, 2102212464
        %v1398 = vsel %vm1394, %v1382, %v1397
        %v1399 = vsel %vm1393, %v1396, %v1398
        %v1400 = vsel %vm1392, %v1379, %v1382
        %v1401 = vsel %vm1395, %v1388, 920167782
        %v1402 = vsel %vm1394, %v1385, %v1401
        %v1403 = vsel %vm1393, %v1400, %v1402
        %v1404 = vsel %vm1392, %v1382, %v1385
        %v1405 = vsel %vm1395, %v1391, 1326507024
        %v1406 = vsel %vm1394, %v1388, %v1405
        %v1407 = vsel %vm1393, %v1404, %v1406
        %v1408 = vshll.u32 %v1368, 8
        %v1409 = vmul.u32.u64.compose %v1408, %v1407
        %v1410 = vextract.low.u32 %v1409
        %v1411 = vextract.high.u32 %v1409
        %v1412 = vmul.u32.u64.compose %v1408, %v1403
        %v1413 = vextract.low.u32 %v1412
        %v1414 = vextract.high.u32 %v1412
        %v1415 = vmul.u32 %v1408, %v1399
        %v1416 = vadd.s32 %v1411, %v1413
        %vm1417 = vc.u32 %v1411, %v1413
        %v1418 = vadd.s32 %v1414, 1
        %v1419 = vsel %vm1417, %v1418, %v1414
        %v1420 = vadd.s32 %v1415, %v1419
        %v1421 = vadd.s32 %v1420, 536870912
        %v1422 = vshrl.u32 %v1421, 30
        %v1423 = vshll.u32 %v1422, 30
        %v1424 = vsub.s32 %v1420, %v1423
        %vm1425 = vcmp.lt.s32.totalorder %v1424, 0
        %v1426 = vsub.s32 0, %v1424
        %v1427 = vsel %vm1425, %v1426, %v1424
        %v1428 = vclz %v1427
        %v1429 = vsub.s32 %v1428, 2
        %vm1430 = vcmp.gt.s32.totalorder 0, %v1429
        %v1431 = vsel %vm1430, 0, %v1429
        %v1432 = vsub.s32 32, %v1431
        %v1433 = vshll.u32 %v1424, %v1431
        %v1434 = vshrl.u32 %v1416, %v1432
        %v1435 = vor.u32 %v1433, %v1434
        %v1436 = vsub.s32 4294967266, %v1431
        %v1437 = vadd.s32 %v1436, 127
        %v1438 = vshll.u32 %v1437, 23
        %v1439 = vor.u32 4788187, %v1438
        %v1440 = vand.u32 2147483647, %v1439
        %v1442 = vcvt.s32.f32 %v1435
        %v1443 = vmul.f32 %v1442, %v1440
        %v1444 = vxor.u32 %v1443, 2147483648
        %v1445 = vsel %vm1362, %v1444, %v1443
        %v1446 = vsub.s32 4, %v1422
        %v1447 = vsel %vm1362, %v1446, %v1422
        %v1448 = vsel %vm1361, %v528, %v1445
        %v1449 = vsel %vm1361, 0, %v1447
        %v1450 = vcosq.f32.pop %v1448
        %v1451 = vsinq.f32.pop %v1448
        %vm1452 = vweird.f32 %v528
        %v1453 = vand.u32 %v1449, 3
        %vm1454 = vcmp.lt.s32.totalorder %v1453, 2
        %vm1455 = vcmp.eq.s32.totalorder %v1453, 0
        %v1456 = vxor.u32 %v1451, 2147483648
        %v1457 = vsel %vm1455, %v1450, %v1456
        %vm1458 = vcmp.eq.s32.totalorder %v1453, 2
        %v1459 = vxor.u32 %v1450, 2147483648
        %v1460 = vsel %vm1458, %v1459, %v1451
        %v1461 = vsel %vm1454, %v1457, %v1460
        %v1462 = vsel %vm1452, nan, %v1461
        %v1463 = vand.u32 2147483647, %v529
        %vm1464 = vcmp.le.f32.partialorder %v1463, 0.7853982
        %vm1465 = vcmp.lt.s32.totalorder %v529, 0
        %v1466 = vand.u32 %v529, 2139095040
        %v1467 = vshrl.u32 %v1466, 23
        %v1468 = vsub.s32 %v1467, 127
        %v1469 = vand.u32 2147483647, %v529
        %v1470 = vand.u32 %v1469, 8388607
        %v1471 = vor.u32 %v1470, 8388608
        %v1472 = vsub.s32 0, %v1471
        %v1473 = vadd.s32 %v1468, 1
        %vm1474 = vcmp.gt.s32.totalorder %v1473, 0
        %v1475 = vsel %vm1474, %v1473, 0
        %v1476 = vshrl.u32 %v1475, 5
        %v1477 = vand.u32 %v1475, 31
        %v1478 = vsub.s32 32, %v1477
        %v1479 = vshrl.u32 683565275, %v1478
        %v1480 = vshll.u32 683565275, %v1477
        %v1481 = vshrl.u32 2475754826, %v1478
        %v1482 = vor.u32 %v1480, %v1481
        %v1483 = vshll.u32 2475754826, %v1477
        %v1484 = vshrl.u32 2131351028, %v1478
        %v1485 = vor.u32 %v1483, %v1484
        %v1486 = vshll.u32 2131351028, %v1477
        %v1487 = vshrl.u32 2102212464, %v1478
        %v1488 = vor.u32 %v1486, %v1487
        %v1489 = vshll.u32 2102212464, %v1477
        %v1490 = vshrl.u32 920167782, %v1478
        %v1491 = vor.u32 %v1489, %v1490
        %v1492 = vshll.u32 920167782, %v1477
        %v1493 = vshrl.u32 1326507024, %v1478
        %v1494 = vor.u32 %v1492, %v1493
        %vm1495 = vcmp.lt.s32.totalorder %v1476, 1
        %vm1496 = vcmp.lt.s32.totalorder %v1476, 2
        %vm1497 = vcmp.lt.s32.totalorder %v1476, 3
        %vm1498 = vcmp.lt.s32.totalorder %v1476, 4
        %v1499 = vsel %vm1495, %v1479, %v1482
        %v1500 = vsel %vm1498, %v1488, 2102212464
        %v1501 = vsel %vm1497, %v1485, %v1500
        %v1502 = vsel %vm1496, %v1499, %v1501
        %v1503 = vsel %vm1495, %v1482, %v1485
        %v1504 = vsel %vm1498, %v1491, 920167782
        %v1505 = vsel %vm1497, %v1488, %v1504
        %v1506 = vsel %vm1496, %v1503, %v1505
        %v1507 = vsel %vm1495, %v1485, %v1488
        %v1508 = vsel %vm1498, %v1494, 1326507024
        %v1509 = vsel %vm1497, %v1491, %v1508
        %v1510 = vsel %vm1496, %v1507, %v1509
        %v1511 = vshll.u32 %v1471, 8
        %v1512 = vmul.u32.u64.compose %v1511, %v1510
        %v1513 = vextract.low.u32 %v1512
        %v1514 = vextract.high.u32 %v1512
        %v1515 = vmul.u32.u64.compose %v1511, %v1506
        %v1516 = vextract.low.u32 %v1515
        %v1517 = vextract.high.u32 %v1515
        %v1518 = vmul.u32 %v1511, %v1502
        %v1519 = vadd.s32 %v1514, %v1516
        %vm1520 = vc.u32 %v1514, %v1516
        %v1521 = vadd.s32 %v1517, 1
        %v1522 = vsel %vm1520, %v1521, %v1517
        %v1523 = vadd.s32 %v1518, %v1522
        %v1524 = vadd.s32 %v1523, 536870912
        %v1525 = vshrl.u32 %v1524, 30
        %v1526 = vshll.u32 %v1525, 30
        %v1527 = vsub.s32 %v1523, %v1526
        %vm1528 = vcmp.lt.s32.totalorder %v1527, 0
        %v1529 = vsub.s32 0, %v1527
        %v1530 = vsel %vm1528, %v1529, %v1527
        %v1531 = vclz %v1530
        %v1532 = vsub.s32 %v1531, 2
        %vm1533 = vcmp.gt.s32.totalorder 0, %v1532
        %v1534 = vsel %vm1533, 0, %v1532
        %v1535 = vsub.s32 32, %v1534
        %v1536 = vshll.u32 %v1527, %v1534
        %v1537 = vshrl.u32 %v1519, %v1535
        %v1538 = vor.u32 %v1536, %v1537
        %v1539 = vsub.s32 4294967266, %v1534
        %v1540 = vadd.s32 %v1539, 127
        %v1541 = vshll.u32 %v1540, 23
        %v1542 = vor.u32 4788187, %v1541
        %v1543 = vand.u32 2147483647, %v1542
        %v1545 = vcvt.s32.f32 %v1538
        %v1546 = vmul.f32 %v1545, %v1543
        %v1547 = vxor.u32 %v1546, 2147483648
        %v1548 = vsel %vm1465, %v1547, %v1546
        %v1549 = vsub.s32 4, %v1525
        %v1550 = vsel %vm1465, %v1549, %v1525
        %v1551 = vsel %vm1464, %v529, %v1548
        %v1552 = vsel %vm1464, 0, %v1550
        %v1553 = vcosq.f32.pop %v1551
        %v1554 = vsinq.f32.pop %v1551
        %vm1555 = vweird.f32 %v529
        %v1556 = vand.u32 %v1552, 3
        %vm1557 = vcmp.lt.s32.totalorder %v1556, 2
        %vm1558 = vcmp.eq.s32.totalorder %v1556, 0
        %v1559 = vxor.u32 %v1554, 2147483648
        %v1560 = vsel %vm1558, %v1553, %v1559
        %vm1561 = vcmp.eq.s32.totalorder %v1556, 2
        %v1562 = vxor.u32 %v1553, 2147483648
        %v1563 = vsel %vm1561, %v1562, %v1554
        %v1564 = vsel %vm1557, %v1560, %v1563
        %v1565 = vsel %vm1555, nan, %v1564
        %v1566 = vand.u32 2147483647, %v530
        %vm1567 = vcmp.le.f32.partialorder %v1566, 0.7853982
        %vm1568 = vcmp.lt.s32.totalorder %v530, 0
        %v1569 = vand.u32 %v530, 2139095040
        %v1570 = vshrl.u32 %v1569, 23
        %v1571 = vsub.s32 %v1570, 127
        %v1572 = vand.u32 2147483647, %v530
        %v1573 = vand.u32 %v1572, 8388607
        %v1574 = vor.u32 %v1573, 8388608
        %v1575 = vsub.s32 0, %v1574
        %v1576 = vadd.s32 %v1571, 1
        %vm1577 = vcmp.gt.s32.totalorder %v1576, 0
        %v1578 = vsel %vm1577, %v1576, 0
        %v1579 = vshrl.u32 %v1578, 5
        %v1580 = vand.u32 %v1578, 31
        %v1581 = vsub.s32 32, %v1580
        %v1582 = vshrl.u32 683565275, %v1581
        %v1583 = vshll.u32 683565275, %v1580
        %v1584 = vshrl.u32 2475754826, %v1581
        %v1585 = vor.u32 %v1583, %v1584
        %v1586 = vshll.u32 2475754826, %v1580
        %v1587 = vshrl.u32 2131351028, %v1581
        %v1588 = vor.u32 %v1586, %v1587
        %v1589 = vshll.u32 2131351028, %v1580
        %v1590 = vshrl.u32 2102212464, %v1581
        %v1591 = vor.u32 %v1589, %v1590
        %v1592 = vshll.u32 2102212464, %v1580
        %v1593 = vshrl.u32 920167782, %v1581
        %v1594 = vor.u32 %v1592, %v1593
        %v1595 = vshll.u32 920167782, %v1580
        %v1596 = vshrl.u32 1326507024, %v1581
        %v1597 = vor.u32 %v1595, %v1596
        %vm1598 = vcmp.lt.s32.totalorder %v1579, 1
        %vm1599 = vcmp.lt.s32.totalorder %v1579, 2
        %vm1600 = vcmp.lt.s32.totalorder %v1579, 3
        %vm1601 = vcmp.lt.s32.totalorder %v1579, 4
        %v1602 = vsel %vm1598, %v1582, %v1585
        %v1603 = vsel %vm1601, %v1591, 2102212464
        %v1604 = vsel %vm1600, %v1588, %v1603
        %v1605 = vsel %vm1599, %v1602, %v1604
        %v1606 = vsel %vm1598, %v1585, %v1588
        %v1607 = vsel %vm1601, %v1594, 920167782
        %v1608 = vsel %vm1600, %v1591, %v1607
        %v1609 = vsel %vm1599, %v1606, %v1608
        %v1610 = vsel %vm1598, %v1588, %v1591
        %v1611 = vsel %vm1601, %v1597, 1326507024
        %v1612 = vsel %vm1600, %v1594, %v1611
        %v1613 = vsel %vm1599, %v1610, %v1612
        %v1614 = vshll.u32 %v1574, 8
        %v1615 = vmul.u32.u64.compose %v1614, %v1613
        %v1616 = vextract.low.u32 %v1615
        %v1617 = vextract.high.u32 %v1615
        %v1618 = vmul.u32.u64.compose %v1614, %v1609
        %v1619 = vextract.low.u32 %v1618
        %v1620 = vextract.high.u32 %v1618
        %v1621 = vmul.u32 %v1614, %v1605
        %v1622 = vadd.s32 %v1617, %v1619
        %vm1623 = vc.u32 %v1617, %v1619
        %v1624 = vadd.s32 %v1620, 1
        %v1625 = vsel %vm1623, %v1624, %v1620
        %v1626 = vadd.s32 %v1621, %v1625
        %v1627 = vadd.s32 %v1626, 536870912
        %v1628 = vshrl.u32 %v1627, 30
        %v1629 = vshll.u32 %v1628, 30
        %v1630 = vsub.s32 %v1626, %v1629
        %vm1631 = vcmp.lt.s32.totalorder %v1630, 0
        %v1632 = vsub.s32 0, %v1630
        %v1633 = vsel %vm1631, %v1632, %v1630
        %v1634 = vclz %v1633
        %v1635 = vsub.s32 %v1634, 2
        %vm1636 = vcmp.gt.s32.totalorder 0, %v1635
        %v1637 = vsel %vm1636, 0, %v1635
        %v1638 = vsub.s32 32, %v1637
        %v1639 = vshll.u32 %v1630, %v1637
        %v1640 = vshrl.u32 %v1622, %v1638
        %v1641 = vor.u32 %v1639, %v1640
        %v1642 = vsub.s32 4294967266, %v1637
        %v1643 = vadd.s32 %v1642, 127
        %v1644 = vshll.u32 %v1643, 23
        %v1645 = vor.u32 4788187, %v1644
        %v1646 = vand.u32 2147483647, %v1645
        %v1648 = vcvt.s32.f32 %v1641
        %v1649 = vmul.f32 %v1648, %v1646
        %v1650 = vxor.u32 %v1649, 2147483648
        %v1651 = vsel %vm1568, %v1650, %v1649
        %v1652 = vsub.s32 4, %v1628
        %v1653 = vsel %vm1568, %v1652, %v1628
        %v1654 = vsel %vm1567, %v530, %v1651
        %v1655 = vsel %vm1567, 0, %v1653
        %v1656 = vcosq.f32.pop %v1654
        %v1657 = vsinq.f32.pop %v1654
        %vm1658 = vweird.f32 %v530
        %v1659 = vand.u32 %v1655, 3
        %vm1660 = vcmp.lt.s32.totalorder %v1659, 2
        %vm1661 = vcmp.eq.s32.totalorder %v1659, 0
        %v1662 = vxor.u32 %v1657, 2147483648
        %v1663 = vsel %vm1661, %v1656, %v1662
        %vm1664 = vcmp.eq.s32.totalorder %v1659, 2
        %v1665 = vxor.u32 %v1656, 2147483648
        %v1666 = vsel %vm1664, %v1665, %v1657
        %v1667 = vsel %vm1660, %v1663, %v1666
        %v1668 = vsel %vm1658, nan, %v1667
        %v1669 = vand.u32 2147483647, %v531
        %vm1670 = vcmp.le.f32.partialorder %v1669, 0.7853982
        %vm1671 = vcmp.lt.s32.totalorder %v531, 0
        %v1672 = vand.u32 %v531, 2139095040
        %v1673 = vshrl.u32 %v1672, 23
        %v1674 = vsub.s32 %v1673, 127
        %v1675 = vand.u32 2147483647, %v531
        %v1676 = vand.u32 %v1675, 8388607
        %v1677 = vor.u32 %v1676, 8388608
        %v1678 = vsub.s32 0, %v1677
        %v1679 = vadd.s32 %v1674, 1
        %vm1680 = vcmp.gt.s32.totalorder %v1679, 0
        %v1681 = vsel %vm1680, %v1679, 0
        %v1682 = vshrl.u32 %v1681, 5
        %v1683 = vand.u32 %v1681, 31
        %v1684 = vsub.s32 32, %v1683
        %v1685 = vshrl.u32 683565275, %v1684
        %v1686 = vshll.u32 683565275, %v1683
        %v1687 = vshrl.u32 2475754826, %v1684
        %v1688 = vor.u32 %v1686, %v1687
        %v1689 = vshll.u32 2475754826, %v1683
        %v1690 = vshrl.u32 2131351028, %v1684
        %v1691 = vor.u32 %v1689, %v1690
        %v1692 = vshll.u32 2131351028, %v1683
        %v1693 = vshrl.u32 2102212464, %v1684
        %v1694 = vor.u32 %v1692, %v1693
        %v1695 = vshll.u32 2102212464, %v1683
        %v1696 = vshrl.u32 920167782, %v1684
        %v1697 = vor.u32 %v1695, %v1696
        %v1698 = vshll.u32 920167782, %v1683
        %v1699 = vshrl.u32 1326507024, %v1684
        %v1700 = vor.u32 %v1698, %v1699
        %vm1701 = vcmp.lt.s32.totalorder %v1682, 1
        %vm1702 = vcmp.lt.s32.totalorder %v1682, 2
        %vm1703 = vcmp.lt.s32.totalorder %v1682, 3
        %vm1704 = vcmp.lt.s32.totalorder %v1682, 4
        %v1705 = vsel %vm1701, %v1685, %v1688
        %v1706 = vsel %vm1704, %v1694, 2102212464
        %v1707 = vsel %vm1703, %v1691, %v1706
        %v1708 = vsel %vm1702, %v1705, %v1707
        %v1709 = vsel %vm1701, %v1688, %v1691
        %v1710 = vsel %vm1704, %v1697, 920167782
        %v1711 = vsel %vm1703, %v1694, %v1710
        %v1712 = vsel %vm1702, %v1709, %v1711
        %v1713 = vsel %vm1701, %v1691, %v1694
        %v1714 = vsel %vm1704, %v1700, 1326507024
        %v1715 = vsel %vm1703, %v1697, %v1714
        %v1716 = vsel %vm1702, %v1713, %v1715
        %v1717 = vshll.u32 %v1677, 8
        %v1718 = vmul.u32.u64.compose %v1717, %v1716
        %v1719 = vextract.low.u32 %v1718
        %v1720 = vextract.high.u32 %v1718
        %v1721 = vmul.u32.u64.compose %v1717, %v1712
        %v1722 = vextract.low.u32 %v1721
        %v1723 = vextract.high.u32 %v1721
        %v1724 = vmul.u32 %v1717, %v1708
        %v1725 = vadd.s32 %v1720, %v1722
        %vm1726 = vc.u32 %v1720, %v1722
        %v1727 = vadd.s32 %v1723, 1
        %v1728 = vsel %vm1726, %v1727, %v1723
        %v1729 = vadd.s32 %v1724, %v1728
        %v1730 = vadd.s32 %v1729, 536870912
        %v1731 = vshrl.u32 %v1730, 30
        %v1732 = vshll.u32 %v1731, 30
        %v1733 = vsub.s32 %v1729, %v1732
        %vm1734 = vcmp.lt.s32.totalorder %v1733, 0
        %v1735 = vsub.s32 0, %v1733
        %v1736 = vsel %vm1734, %v1735, %v1733
        %v1737 = vclz %v1736
        %v1738 = vsub.s32 %v1737, 2
        %vm1739 = vcmp.gt.s32.totalorder 0, %v1738
        %v1740 = vsel %vm1739, 0, %v1738
        %v1741 = vsub.s32 32, %v1740
        %v1742 = vshll.u32 %v1733, %v1740
        %v1743 = vshrl.u32 %v1725, %v1741
        %v1744 = vor.u32 %v1742, %v1743
        %v1745 = vsub.s32 4294967266, %v1740
        %v1746 = vadd.s32 %v1745, 127
        %v1747 = vshll.u32 %v1746, 23
        %v1748 = vor.u32 4788187, %v1747
        %v1749 = vand.u32 2147483647, %v1748
        %v1751 = vcvt.s32.f32 %v1744
        %v1752 = vmul.f32 %v1751, %v1749
        %v1753 = vxor.u32 %v1752, 2147483648
        %v1754 = vsel %vm1671, %v1753, %v1752
        %v1755 = vsub.s32 4, %v1731
        %v1756 = vsel %vm1671, %v1755, %v1731
        %v1757 = vsel %vm1670, %v531, %v1754
        %v1758 = vsel %vm1670, 0, %v1756
        %v1759 = vcosq.f32.pop %v1757
        %v1760 = vsinq.f32.pop %v1757
        %vm1761 = vweird.f32 %v531
        %v1762 = vand.u32 %v1758, 3
        %vm1763 = vcmp.lt.s32.totalorder %v1762, 2
        %vm1764 = vcmp.eq.s32.totalorder %v1762, 0
        %v1765 = vxor.u32 %v1760, 2147483648
        %v1766 = vsel %vm1764, %v1759, %v1765
        %vm1767 = vcmp.eq.s32.totalorder %v1762, 2
        %v1768 = vxor.u32 %v1759, 2147483648
        %v1769 = vsel %vm1767, %v1768, %v1760
        %v1770 = vsel %vm1763, %v1766, %v1769
        %v1771 = vsel %vm1761, nan, %v1770
        %v1772 = vand.u32 2147483647, %v532
        %vm1773 = vcmp.le.f32.partialorder %v1772, 0.7853982
        %vm1774 = vcmp.lt.s32.totalorder %v532, 0
        %v1775 = vand.u32 %v532, 2139095040
        %v1776 = vshrl.u32 %v1775, 23
        %v1777 = vsub.s32 %v1776, 127
        %v1778 = vand.u32 2147483647, %v532
        %v1779 = vand.u32 %v1778, 8388607
        %v1780 = vor.u32 %v1779, 8388608
        %v1781 = vsub.s32 0, %v1780
        %v1782 = vadd.s32 %v1777, 1
        %vm1783 = vcmp.gt.s32.totalorder %v1782, 0
        %v1784 = vsel %vm1783, %v1782, 0
        %v1785 = vshrl.u32 %v1784, 5
        %v1786 = vand.u32 %v1784, 31
        %v1787 = vsub.s32 32, %v1786
        %v1788 = vshrl.u32 683565275, %v1787
        %v1789 = vshll.u32 683565275, %v1786
        %v1790 = vshrl.u32 2475754826, %v1787
        %v1791 = vor.u32 %v1789, %v1790
        %v1792 = vshll.u32 2475754826, %v1786
        %v1793 = vshrl.u32 2131351028, %v1787
        %v1794 = vor.u32 %v1792, %v1793
        %v1795 = vshll.u32 2131351028, %v1786
        %v1796 = vshrl.u32 2102212464, %v1787
        %v1797 = vor.u32 %v1795, %v1796
        %v1798 = vshll.u32 2102212464, %v1786
        %v1799 = vshrl.u32 920167782, %v1787
        %v1800 = vor.u32 %v1798, %v1799
        %v1801 = vshll.u32 920167782, %v1786
        %v1802 = vshrl.u32 1326507024, %v1787
        %v1803 = vor.u32 %v1801, %v1802
        %vm1804 = vcmp.lt.s32.totalorder %v1785, 1
        %vm1805 = vcmp.lt.s32.totalorder %v1785, 2
        %vm1806 = vcmp.lt.s32.totalorder %v1785, 3
        %vm1807 = vcmp.lt.s32.totalorder %v1785, 4
        %v1808 = vsel %vm1804, %v1788, %v1791
        %v1809 = vsel %vm1807, %v1797, 2102212464
        %v1810 = vsel %vm1806, %v1794, %v1809
        %v1811 = vsel %vm1805, %v1808, %v1810
        %v1812 = vsel %vm1804, %v1791, %v1794
        %v1813 = vsel %vm1807, %v1800, 920167782
        %v1814 = vsel %vm1806, %v1797, %v1813
        %v1815 = vsel %vm1805, %v1812, %v1814
        %v1816 = vsel %vm1804, %v1794, %v1797
        %v1817 = vsel %vm1807, %v1803, 1326507024
        %v1818 = vsel %vm1806, %v1800, %v1817
        %v1819 = vsel %vm1805, %v1816, %v1818
        %v1820 = vshll.u32 %v1780, 8
        %v1821 = vmul.u32.u64.compose %v1820, %v1819
        %v1822 = vextract.low.u32 %v1821
        %v1823 = vextract.high.u32 %v1821
        %v1824 = vmul.u32.u64.compose %v1820, %v1815
        %v1825 = vextract.low.u32 %v1824
        %v1826 = vextract.high.u32 %v1824
        %v1827 = vmul.u32 %v1820, %v1811
        %v1828 = vadd.s32 %v1823, %v1825
        %vm1829 = vc.u32 %v1823, %v1825
        %v1830 = vadd.s32 %v1826, 1
        %v1831 = vsel %vm1829, %v1830, %v1826
        %v1832 = vadd.s32 %v1827, %v1831
        %v1833 = vadd.s32 %v1832, 536870912
        %v1834 = vshrl.u32 %v1833, 30
        %v1835 = vshll.u32 %v1834, 30
        %v1836 = vsub.s32 %v1832, %v1835
        %vm1837 = vcmp.lt.s32.totalorder %v1836, 0
        %v1838 = vsub.s32 0, %v1836
        %v1839 = vsel %vm1837, %v1838, %v1836
        %v1840 = vclz %v1839
        %v1841 = vsub.s32 %v1840, 2
        %vm1842 = vcmp.gt.s32.totalorder 0, %v1841
        %v1843 = vsel %vm1842, 0, %v1841
        %v1844 = vsub.s32 32, %v1843
        %v1845 = vshll.u32 %v1836, %v1843
        %v1846 = vshrl.u32 %v1828, %v1844
        %v1847 = vor.u32 %v1845, %v1846
        %v1848 = vsub.s32 4294967266, %v1843
        %v1849 = vadd.s32 %v1848, 127
        %v1850 = vshll.u32 %v1849, 23
        %v1851 = vor.u32 4788187, %v1850
        %v1852 = vand.u32 2147483647, %v1851
        %v1854 = vcvt.s32.f32 %v1847
        %v1855 = vmul.f32 %v1854, %v1852
        %v1856 = vxor.u32 %v1855, 2147483648
        %v1857 = vsel %vm1774, %v1856, %v1855
        %v1858 = vsub.s32 4, %v1834
        %v1859 = vsel %vm1774, %v1858, %v1834
        %v1860 = vsel %vm1773, %v532, %v1857
        %v1861 = vsel %vm1773, 0, %v1859
        %v1862 = vcosq.f32.pop %v1860
        %v1863 = vsinq.f32.pop %v1860
        %vm1864 = vweird.f32 %v532
        %v1865 = vand.u32 %v1861, 3
        %vm1866 = vcmp.lt.s32.totalorder %v1865, 2
        %vm1867 = vcmp.eq.s32.totalorder %v1865, 0
        %v1868 = vxor.u32 %v1863, 2147483648
        %v1869 = vsel %vm1867, %v1862, %v1868
        %vm1870 = vcmp.eq.s32.totalorder %v1865, 2
        %v1871 = vxor.u32 %v1862, 2147483648
        %v1872 = vsel %vm1870, %v1871, %v1863
        %v1873 = vsel %vm1866, %v1869, %v1872
        %v1874 = vsel %vm1864, nan, %v1873
        %v1875 = vand.u32 2147483647, %v533
        %vm1876 = vcmp.le.f32.partialorder %v1875, 0.7853982
        %vm1877 = vcmp.lt.s32.totalorder %v533, 0
        %v1878 = vand.u32 %v533, 2139095040
        %v1879 = vshrl.u32 %v1878, 23
        %v1880 = vsub.s32 %v1879, 127
        %v1881 = vand.u32 2147483647, %v533
        %v1882 = vand.u32 %v1881, 8388607
        %v1883 = vor.u32 %v1882, 8388608
        %v1884 = vsub.s32 0, %v1883
        %v1885 = vadd.s32 %v1880, 1
        %vm1886 = vcmp.gt.s32.totalorder %v1885, 0
        %v1887 = vsel %vm1886, %v1885, 0
        %v1888 = vshrl.u32 %v1887, 5
        %v1889 = vand.u32 %v1887, 31
        %v1890 = vsub.s32 32, %v1889
        %v1891 = vshrl.u32 683565275, %v1890
        %v1892 = vshll.u32 683565275, %v1889
        %v1893 = vshrl.u32 2475754826, %v1890
        %v1894 = vor.u32 %v1892, %v1893
        %v1895 = vshll.u32 2475754826, %v1889
        %v1896 = vshrl.u32 2131351028, %v1890
        %v1897 = vor.u32 %v1895, %v1896
        %v1898 = vshll.u32 2131351028, %v1889
        %v1899 = vshrl.u32 2102212464, %v1890
        %v1900 = vor.u32 %v1898, %v1899
        %v1901 = vshll.u32 2102212464, %v1889
        %v1902 = vshrl.u32 920167782, %v1890
        %v1903 = vor.u32 %v1901, %v1902
        %v1904 = vshll.u32 920167782, %v1889
        %v1905 = vshrl.u32 1326507024, %v1890
        %v1906 = vor.u32 %v1904, %v1905
        %vm1907 = vcmp.lt.s32.totalorder %v1888, 1
        %vm1908 = vcmp.lt.s32.totalorder %v1888, 2
        %vm1909 = vcmp.lt.s32.totalorder %v1888, 3
        %vm1910 = vcmp.lt.s32.totalorder %v1888, 4
        %v1911 = vsel %vm1907, %v1891, %v1894
        %v1912 = vsel %vm1910, %v1900, 2102212464
        %v1913 = vsel %vm1909, %v1897, %v1912
        %v1914 = vsel %vm1908, %v1911, %v1913
        %v1915 = vsel %vm1907, %v1894, %v1897
        %v1916 = vsel %vm1910, %v1903, 920167782
        %v1917 = vsel %vm1909, %v1900, %v1916
        %v1918 = vsel %vm1908, %v1915, %v1917
        %v1919 = vsel %vm1907, %v1897, %v1900
        %v1920 = vsel %vm1910, %v1906, 1326507024
        %v1921 = vsel %vm1909, %v1903, %v1920
        %v1922 = vsel %vm1908, %v1919, %v1921
        %v1923 = vshll.u32 %v1883, 8
        %v1924 = vmul.u32.u64.compose %v1923, %v1922
        %v1925 = vextract.low.u32 %v1924
        %v1926 = vextract.high.u32 %v1924
        %v1927 = vmul.u32.u64.compose %v1923, %v1918
        %v1928 = vextract.low.u32 %v1927
        %v1929 = vextract.high.u32 %v1927
        %v1930 = vmul.u32 %v1923, %v1914
        %v1931 = vadd.s32 %v1926, %v1928
        %vm1932 = vc.u32 %v1926, %v1928
        %v1933 = vadd.s32 %v1929, 1
        %v1934 = vsel %vm1932, %v1933, %v1929
        %v1935 = vadd.s32 %v1930, %v1934
        %v1936 = vadd.s32 %v1935, 536870912
        %v1937 = vshrl.u32 %v1936, 30
        %v1938 = vshll.u32 %v1937, 30
        %v1939 = vsub.s32 %v1935, %v1938
        %vm1940 = vcmp.lt.s32.totalorder %v1939, 0
        %v1941 = vsub.s32 0, %v1939
        %v1942 = vsel %vm1940, %v1941, %v1939
        %v1943 = vclz %v1942
        %v1944 = vsub.s32 %v1943, 2
        %vm1945 = vcmp.gt.s32.totalorder 0, %v1944
        %v1946 = vsel %vm1945, 0, %v1944
        %v1947 = vsub.s32 32, %v1946
        %v1948 = vshll.u32 %v1939, %v1946
        %v1949 = vshrl.u32 %v1931, %v1947
        %v1950 = vor.u32 %v1948, %v1949
        %v1951 = vsub.s32 4294967266, %v1946
        %v1952 = vadd.s32 %v1951, 127
        %v1953 = vshll.u32 %v1952, 23
        %v1954 = vor.u32 4788187, %v1953
        %v1955 = vand.u32 2147483647, %v1954
        %v1957 = vcvt.s32.f32 %v1950
        %v1958 = vmul.f32 %v1957, %v1955
        %v1959 = vxor.u32 %v1958, 2147483648
        %v1960 = vsel %vm1877, %v1959, %v1958
        %v1961 = vsub.s32 4, %v1937
        %v1962 = vsel %vm1877, %v1961, %v1937
        %v1963 = vsel %vm1876, %v533, %v1960
        %v1964 = vsel %vm1876, 0, %v1962
        %v1965 = vcosq.f32.pop %v1963
        %v1966 = vsinq.f32.pop %v1963
        %vm1967 = vweird.f32 %v533
        %v1968 = vand.u32 %v1964, 3
        %vm1969 = vcmp.lt.s32.totalorder %v1968, 2
        %vm1970 = vcmp.eq.s32.totalorder %v1968, 0
        %v1971 = vxor.u32 %v1966, 2147483648
        %v1972 = vsel %vm1970, %v1965, %v1971
        %vm1973 = vcmp.eq.s32.totalorder %v1968, 2
        %v1974 = vxor.u32 %v1965, 2147483648
        %v1975 = vsel %vm1973, %v1974, %v1966
        %v1976 = vsel %vm1969, %v1972, %v1975
        %v1977 = vsel %vm1967, nan, %v1976
        %v1978 = vand.u32 2147483647, %v534
        %vm1979 = vcmp.le.f32.partialorder %v1978, 0.7853982
        %vm1980 = vcmp.lt.s32.totalorder %v534, 0
        %v1981 = vand.u32 %v534, 2139095040
        %v1982 = vshrl.u32 %v1981, 23
        %v1983 = vsub.s32 %v1982, 127
        %v1984 = vand.u32 2147483647, %v534
        %v1985 = vand.u32 %v1984, 8388607
        %v1986 = vor.u32 %v1985, 8388608
        %v1987 = vsub.s32 0, %v1986
        %v1988 = vadd.s32 %v1983, 1
        %vm1989 = vcmp.gt.s32.totalorder %v1988, 0
        %v1990 = vsel %vm1989, %v1988, 0
        %v1991 = vshrl.u32 %v1990, 5
        %v1992 = vand.u32 %v1990, 31
        %v1993 = vsub.s32 32, %v1992
        %v1994 = vshrl.u32 683565275, %v1993
        %v1995 = vshll.u32 683565275, %v1992
        %v1996 = vshrl.u32 2475754826, %v1993
        %v1997 = vor.u32 %v1995, %v1996
        %v1998 = vshll.u32 2475754826, %v1992
        %v1999 = vshrl.u32 2131351028, %v1993
        %v2000 = vor.u32 %v1998, %v1999
        %v2001 = vshll.u32 2131351028, %v1992
        %v2002 = vshrl.u32 2102212464, %v1993
        %v2003 = vor.u32 %v2001, %v2002
        %v2004 = vshll.u32 2102212464, %v1992
        %v2005 = vshrl.u32 920167782, %v1993
        %v2006 = vor.u32 %v2004, %v2005
        %v2007 = vshll.u32 920167782, %v1992
        %v2008 = vshrl.u32 1326507024, %v1993
        %v2009 = vor.u32 %v2007, %v2008
        %vm2010 = vcmp.lt.s32.totalorder %v1991, 1
        %vm2011 = vcmp.lt.s32.totalorder %v1991, 2
        %vm2012 = vcmp.lt.s32.totalorder %v1991, 3
        %vm2013 = vcmp.lt.s32.totalorder %v1991, 4
        %v2014 = vsel %vm2010, %v1994, %v1997
        %v2015 = vsel %vm2013, %v2003, 2102212464
        %v2016 = vsel %vm2012, %v2000, %v2015
        %v2017 = vsel %vm2011, %v2014, %v2016
        %v2018 = vsel %vm2010, %v1997, %v2000
        %v2019 = vsel %vm2013, %v2006, 920167782
        %v2020 = vsel %vm2012, %v2003, %v2019
        %v2021 = vsel %vm2011, %v2018, %v2020
        %v2022 = vsel %vm2010, %v2000, %v2003
        %v2023 = vsel %vm2013, %v2009, 1326507024
        %v2024 = vsel %vm2012, %v2006, %v2023
        %v2025 = vsel %vm2011, %v2022, %v2024
        %v2026 = vshll.u32 %v1986, 8
        %v2027 = vmul.u32.u64.compose %v2026, %v2025
        %v2028 = vextract.low.u32 %v2027
        %v2029 = vextract.high.u32 %v2027
        %v2030 = vmul.u32.u64.compose %v2026, %v2021
        %v2031 = vextract.low.u32 %v2030
        %v2032 = vextract.high.u32 %v2030
        %v2033 = vmul.u32 %v2026, %v2017
        %v2034 = vadd.s32 %v2029, %v2031
        %vm2035 = vc.u32 %v2029, %v2031
        %v2036 = vadd.s32 %v2032, 1
        %v2037 = vsel %vm2035, %v2036, %v2032
        %v2038 = vadd.s32 %v2033, %v2037
        %v2039 = vadd.s32 %v2038, 536870912
        %v2040 = vshrl.u32 %v2039, 30
        %v2041 = vshll.u32 %v2040, 30
        %v2042 = vsub.s32 %v2038, %v2041
        %vm2043 = vcmp.lt.s32.totalorder %v2042, 0
        %v2044 = vsub.s32 0, %v2042
        %v2045 = vsel %vm2043, %v2044, %v2042
        %v2046 = vclz %v2045
        %v2047 = vsub.s32 %v2046, 2
        %vm2048 = vcmp.gt.s32.totalorder 0, %v2047
        %v2049 = vsel %vm2048, 0, %v2047
        %v2050 = vsub.s32 32, %v2049
        %v2051 = vshll.u32 %v2042, %v2049
        %v2052 = vshrl.u32 %v2034, %v2050
        %v2053 = vor.u32 %v2051, %v2052
        %v2054 = vsub.s32 4294967266, %v2049
        %v2055 = vadd.s32 %v2054, 127
        %v2056 = vshll.u32 %v2055, 23
        %v2057 = vor.u32 4788187, %v2056
        %v2058 = vand.u32 2147483647, %v2057
        %v2060 = vcvt.s32.f32 %v2053
        %v2061 = vmul.f32 %v2060, %v2058
        %v2062 = vxor.u32 %v2061, 2147483648
        %v2063 = vsel %vm1980, %v2062, %v2061
        %v2064 = vsub.s32 4, %v2040
        %v2065 = vsel %vm1980, %v2064, %v2040
        %v2066 = vsel %vm1979, %v534, %v2063
        %v2067 = vsel %vm1979, 0, %v2065
        %v2068 = vcosq.f32.pop %v2066
        %v2069 = vsinq.f32.pop %v2066
        %vm2070 = vweird.f32 %v534
        %v2071 = vand.u32 %v2067, 3
        %vm2072 = vcmp.lt.s32.totalorder %v2071, 2
        %vm2073 = vcmp.eq.s32.totalorder %v2071, 0
        %v2074 = vxor.u32 %v2069, 2147483648
        %v2075 = vsel %vm2073, %v2068, %v2074
        %vm2076 = vcmp.eq.s32.totalorder %v2071, 2
        %v2077 = vxor.u32 %v2068, 2147483648
        %v2078 = vsel %vm2076, %v2077, %v2069
        %v2079 = vsel %vm2072, %v2075, %v2078
        %v2080 = vsel %vm2070, nan, %v2079
        %v2081 = vand.u32 2147483647, %v535
        %vm2082 = vcmp.le.f32.partialorder %v2081, 0.7853982
        %vm2083 = vcmp.lt.s32.totalorder %v535, 0
        %v2084 = vand.u32 %v535, 2139095040
        %v2085 = vshrl.u32 %v2084, 23
        %v2086 = vsub.s32 %v2085, 127
        %v2087 = vand.u32 2147483647, %v535
        %v2088 = vand.u32 %v2087, 8388607
        %v2089 = vor.u32 %v2088, 8388608
        %v2090 = vsub.s32 0, %v2089
        %v2091 = vadd.s32 %v2086, 1
        %vm2092 = vcmp.gt.s32.totalorder %v2091, 0
        %v2093 = vsel %vm2092, %v2091, 0
        %v2094 = vshrl.u32 %v2093, 5
        %v2095 = vand.u32 %v2093, 31
        %v2096 = vsub.s32 32, %v2095
        %v2097 = vshrl.u32 683565275, %v2096
        %v2098 = vshll.u32 683565275, %v2095
        %v2099 = vshrl.u32 2475754826, %v2096
        %v2100 = vor.u32 %v2098, %v2099
        %v2101 = vshll.u32 2475754826, %v2095
        %v2102 = vshrl.u32 2131351028, %v2096
        %v2103 = vor.u32 %v2101, %v2102
        %v2104 = vshll.u32 2131351028, %v2095
        %v2105 = vshrl.u32 2102212464, %v2096
        %v2106 = vor.u32 %v2104, %v2105
        %v2107 = vshll.u32 2102212464, %v2095
        %v2108 = vshrl.u32 920167782, %v2096
        %v2109 = vor.u32 %v2107, %v2108
        %v2110 = vshll.u32 920167782, %v2095
        %v2111 = vshrl.u32 1326507024, %v2096
        %v2112 = vor.u32 %v2110, %v2111
        %vm2113 = vcmp.lt.s32.totalorder %v2094, 1
        %vm2114 = vcmp.lt.s32.totalorder %v2094, 2
        %vm2115 = vcmp.lt.s32.totalorder %v2094, 3
        %vm2116 = vcmp.lt.s32.totalorder %v2094, 4
        %v2117 = vsel %vm2113, %v2097, %v2100
        %v2118 = vsel %vm2116, %v2106, 2102212464
        %v2119 = vsel %vm2115, %v2103, %v2118
        %v2120 = vsel %vm2114, %v2117, %v2119
        %v2121 = vsel %vm2113, %v2100, %v2103
        %v2122 = vsel %vm2116, %v2109, 920167782
        %v2123 = vsel %vm2115, %v2106, %v2122
        %v2124 = vsel %vm2114, %v2121, %v2123
        %v2125 = vsel %vm2113, %v2103, %v2106
        %v2126 = vsel %vm2116, %v2112, 1326507024
        %v2127 = vsel %vm2115, %v2109, %v2126
        %v2128 = vsel %vm2114, %v2125, %v2127
        %v2129 = vshll.u32 %v2089, 8
        %v2130 = vmul.u32.u64.compose %v2129, %v2128
        %v2131 = vextract.low.u32 %v2130
        %v2132 = vextract.high.u32 %v2130
        %v2133 = vmul.u32.u64.compose %v2129, %v2124
        %v2134 = vextract.low.u32 %v2133
        %v2135 = vextract.high.u32 %v2133
        %v2136 = vmul.u32 %v2129, %v2120
        %v2137 = vadd.s32 %v2132, %v2134
        %vm2138 = vc.u32 %v2132, %v2134
        %v2139 = vadd.s32 %v2135, 1
        %v2140 = vsel %vm2138, %v2139, %v2135
        %v2141 = vadd.s32 %v2136, %v2140
        %v2142 = vadd.s32 %v2141, 536870912
        %v2143 = vshrl.u32 %v2142, 30
        %v2144 = vshll.u32 %v2143, 30
        %v2145 = vsub.s32 %v2141, %v2144
        %vm2146 = vcmp.lt.s32.totalorder %v2145, 0
        %v2147 = vsub.s32 0, %v2145
        %v2148 = vsel %vm2146, %v2147, %v2145
        %v2149 = vclz %v2148
        %v2150 = vsub.s32 %v2149, 2
        %vm2151 = vcmp.gt.s32.totalorder 0, %v2150
        %v2152 = vsel %vm2151, 0, %v2150
        %v2153 = vsub.s32 32, %v2152
        %v2154 = vshll.u32 %v2145, %v2152
        %v2155 = vshrl.u32 %v2137, %v2153
        %v2156 = vor.u32 %v2154, %v2155
        %v2157 = vsub.s32 4294967266, %v2152
        %v2158 = vadd.s32 %v2157, 127
        %v2159 = vshll.u32 %v2158, 23
        %v2160 = vor.u32 4788187, %v2159
        %v2161 = vand.u32 2147483647, %v2160
        %v2163 = vcvt.s32.f32 %v2156
        %v2164 = vmul.f32 %v2163, %v2161
        %v2165 = vxor.u32 %v2164, 2147483648
        %v2166 = vsel %vm2083, %v2165, %v2164
        %v2167 = vsub.s32 4, %v2143
        %v2168 = vsel %vm2083, %v2167, %v2143
        %v2169 = vsel %vm2082, %v535, %v2166
        %v2170 = vsel %vm2082, 0, %v2168
        %v2171 = vcosq.f32.pop %v2169
        %v2172 = vsinq.f32.pop %v2169
        %vm2173 = vweird.f32 %v535
        %v2174 = vand.u32 %v2170, 3
        %vm2175 = vcmp.lt.s32.totalorder %v2174, 2
        %vm2176 = vcmp.eq.s32.totalorder %v2174, 0
        %v2177 = vxor.u32 %v2172, 2147483648
        %v2178 = vsel %vm2176, %v2171, %v2177
        %vm2179 = vcmp.eq.s32.totalorder %v2174, 2
        %v2180 = vxor.u32 %v2171, 2147483648
        %v2181 = vsel %vm2179, %v2180, %v2172
        %v2182 = vsel %vm2175, %v2178, %v2181
        %v2183 = vsel %vm2173, nan, %v2182
        %v2184 = vand.u32 2147483647, %v520
        %vm2185 = vcmp.le.f32.partialorder %v2184, 0.7853982
        %vm2186 = vcmp.lt.s32.totalorder %v520, 0
        %v2187 = vand.u32 %v520, 2139095040
        %v2188 = vshrl.u32 %v2187, 23
        %v2189 = vsub.s32 %v2188, 127
        %v2190 = vand.u32 2147483647, %v520
        %v2191 = vand.u32 %v2190, 8388607
        %v2192 = vor.u32 %v2191, 8388608
        %v2193 = vsub.s32 0, %v2192
        %v2194 = vadd.s32 %v2189, 1
        %vm2195 = vcmp.gt.s32.totalorder %v2194, 0
        %v2196 = vsel %vm2195, %v2194, 0
        %v2197 = vshrl.u32 %v2196, 5
        %v2198 = vand.u32 %v2196, 31
        %v2199 = vsub.s32 32, %v2198
        %v2200 = vshrl.u32 683565275, %v2199
        %v2201 = vshll.u32 683565275, %v2198
        %v2202 = vshrl.u32 2475754826, %v2199
        %v2203 = vor.u32 %v2201, %v2202
        %v2204 = vshll.u32 2475754826, %v2198
        %v2205 = vshrl.u32 2131351028, %v2199
        %v2206 = vor.u32 %v2204, %v2205
        %v2207 = vshll.u32 2131351028, %v2198
        %v2208 = vshrl.u32 2102212464, %v2199
        %v2209 = vor.u32 %v2207, %v2208
        %v2210 = vshll.u32 2102212464, %v2198
        %v2211 = vshrl.u32 920167782, %v2199
        %v2212 = vor.u32 %v2210, %v2211
        %v2213 = vshll.u32 920167782, %v2198
        %v2214 = vshrl.u32 1326507024, %v2199
        %v2215 = vor.u32 %v2213, %v2214
        %vm2216 = vcmp.lt.s32.totalorder %v2197, 1
        %vm2217 = vcmp.lt.s32.totalorder %v2197, 2
        %vm2218 = vcmp.lt.s32.totalorder %v2197, 3
        %vm2219 = vcmp.lt.s32.totalorder %v2197, 4
        %v2220 = vsel %vm2216, %v2200, %v2203
        %v2221 = vsel %vm2219, %v2209, 2102212464
        %v2222 = vsel %vm2218, %v2206, %v2221
        %v2223 = vsel %vm2217, %v2220, %v2222
        %v2224 = vsel %vm2216, %v2203, %v2206
        %v2225 = vsel %vm2219, %v2212, 920167782
        %v2226 = vsel %vm2218, %v2209, %v2225
        %v2227 = vsel %vm2217, %v2224, %v2226
        %v2228 = vsel %vm2216, %v2206, %v2209
        %v2229 = vsel %vm2219, %v2215, 1326507024
        %v2230 = vsel %vm2218, %v2212, %v2229
        %v2231 = vsel %vm2217, %v2228, %v2230
        %v2232 = vshll.u32 %v2192, 8
        %v2233 = vmul.u32.u64.compose %v2232, %v2231
        %v2234 = vextract.low.u32 %v2233
        %v2235 = vextract.high.u32 %v2233
        %v2236 = vmul.u32.u64.compose %v2232, %v2227
        %v2237 = vextract.low.u32 %v2236
        %v2238 = vextract.high.u32 %v2236
        %v2239 = vmul.u32 %v2232, %v2223
        %v2240 = vadd.s32 %v2235, %v2237
        %vm2241 = vc.u32 %v2235, %v2237
        %v2242 = vadd.s32 %v2238, 1
        %v2243 = vsel %vm2241, %v2242, %v2238
        %v2244 = vadd.s32 %v2239, %v2243
        %v2245 = vadd.s32 %v2244, 536870912
        %v2246 = vshrl.u32 %v2245, 30
        %v2247 = vshll.u32 %v2246, 30
        %v2248 = vsub.s32 %v2244, %v2247
        %vm2249 = vcmp.lt.s32.totalorder %v2248, 0
        %v2250 = vsub.s32 0, %v2248
        %v2251 = vsel %vm2249, %v2250, %v2248
        %v2252 = vclz %v2251
        %v2253 = vsub.s32 %v2252, 2
        %vm2254 = vcmp.gt.s32.totalorder 0, %v2253
        %v2255 = vsel %vm2254, 0, %v2253
        %v2256 = vsub.s32 32, %v2255
        %v2257 = vshll.u32 %v2248, %v2255
        %v2258 = vshrl.u32 %v2240, %v2256
        %v2259 = vor.u32 %v2257, %v2258
        %v2260 = vsub.s32 4294967266, %v2255
        %v2261 = vadd.s32 %v2260, 127
        %v2262 = vshll.u32 %v2261, 23
        %v2263 = vor.u32 4788187, %v2262
        %v2264 = vand.u32 2147483647, %v2263
        %v2266 = vcvt.s32.f32 %v2259
        %v2267 = vmul.f32 %v2266, %v2264
        %v2268 = vxor.u32 %v2267, 2147483648
        %v2269 = vsel %vm2186, %v2268, %v2267
        %v2270 = vsub.s32 4, %v2246
        %v2271 = vsel %vm2186, %v2270, %v2246
        %v2272 = vsel %vm2185, %v520, %v2269
        %v2273 = vsel %vm2185, 0, %v2271
        %v2274 = vcosq.f32.pop %v2272
        %v2275 = vsinq.f32.pop %v2272
        %vm2276 = vweird.f32 %v520
        %v2277 = vadd.s32 %v2273, 3
        %v2278 = vand.u32 %v2277, 3
        %vm2279 = vcmp.lt.s32.totalorder %v2278, 2
        %vm2280 = vcmp.eq.s32.totalorder %v2278, 0
        %v2281 = vxor.u32 %v2275, 2147483648
        %v2282 = vsel %vm2280, %v2274, %v2281
        %vm2283 = vcmp.eq.s32.totalorder %v2278, 2
        %v2284 = vxor.u32 %v2274, 2147483648
        %v2285 = vsel %vm2283, %v2284, %v2275
        %v2286 = vsel %vm2279, %v2282, %v2285
        %v2287 = vsel %vm2276, nan, %v2286
        %v2288 = vand.u32 2147483647, %v521
        %vm2289 = vcmp.le.f32.partialorder %v2288, 0.7853982
        %vm2290 = vcmp.lt.s32.totalorder %v521, 0
        %v2291 = vand.u32 %v521, 2139095040
        %v2292 = vshrl.u32 %v2291, 23
        %v2293 = vsub.s32 %v2292, 127
        %v2294 = vand.u32 2147483647, %v521
        %v2295 = vand.u32 %v2294, 8388607
        %v2296 = vor.u32 %v2295, 8388608
        %v2297 = vsub.s32 0, %v2296
        %v2298 = vadd.s32 %v2293, 1
        %vm2299 = vcmp.gt.s32.totalorder %v2298, 0
        %v2300 = vsel %vm2299, %v2298, 0
        %v2301 = vshrl.u32 %v2300, 5
        %v2302 = vand.u32 %v2300, 31
        %v2303 = vsub.s32 32, %v2302
        %v2304 = vshrl.u32 683565275, %v2303
        %v2305 = vshll.u32 683565275, %v2302
        %v2306 = vshrl.u32 2475754826, %v2303
        %v2307 = vor.u32 %v2305, %v2306
        %v2308 = vshll.u32 2475754826, %v2302
        %v2309 = vshrl.u32 2131351028, %v2303
        %v2310 = vor.u32 %v2308, %v2309
        %v2311 = vshll.u32 2131351028, %v2302
        %v2312 = vshrl.u32 2102212464, %v2303
        %v2313 = vor.u32 %v2311, %v2312
        %v2314 = vshll.u32 2102212464, %v2302
        %v2315 = vshrl.u32 920167782, %v2303
        %v2316 = vor.u32 %v2314, %v2315
        %v2317 = vshll.u32 920167782, %v2302
        %v2318 = vshrl.u32 1326507024, %v2303
        %v2319 = vor.u32 %v2317, %v2318
        %vm2320 = vcmp.lt.s32.totalorder %v2301, 1
        %vm2321 = vcmp.lt.s32.totalorder %v2301, 2
        %vm2322 = vcmp.lt.s32.totalorder %v2301, 3
        %vm2323 = vcmp.lt.s32.totalorder %v2301, 4
        %v2324 = vsel %vm2320, %v2304, %v2307
        %v2325 = vsel %vm2323, %v2313, 2102212464
        %v2326 = vsel %vm2322, %v2310, %v2325
        %v2327 = vsel %vm2321, %v2324, %v2326
        %v2328 = vsel %vm2320, %v2307, %v2310
        %v2329 = vsel %vm2323, %v2316, 920167782
        %v2330 = vsel %vm2322, %v2313, %v2329
        %v2331 = vsel %vm2321, %v2328, %v2330
        %v2332 = vsel %vm2320, %v2310, %v2313
        %v2333 = vsel %vm2323, %v2319, 1326507024
        %v2334 = vsel %vm2322, %v2316, %v2333
        %v2335 = vsel %vm2321, %v2332, %v2334
        %v2336 = vshll.u32 %v2296, 8
        %v2337 = vmul.u32.u64.compose %v2336, %v2335
        %v2338 = vextract.low.u32 %v2337
        %v2339 = vextract.high.u32 %v2337
        %v2340 = vmul.u32.u64.compose %v2336, %v2331
        %v2341 = vextract.low.u32 %v2340
        %v2342 = vextract.high.u32 %v2340
        %v2343 = vmul.u32 %v2336, %v2327
        %v2344 = vadd.s32 %v2339, %v2341
        %vm2345 = vc.u32 %v2339, %v2341
        %v2346 = vadd.s32 %v2342, 1
        %v2347 = vsel %vm2345, %v2346, %v2342
        %v2348 = vadd.s32 %v2343, %v2347
        %v2349 = vadd.s32 %v2348, 536870912
        %v2350 = vshrl.u32 %v2349, 30
        %v2351 = vshll.u32 %v2350, 30
        %v2352 = vsub.s32 %v2348, %v2351
        %vm2353 = vcmp.lt.s32.totalorder %v2352, 0
        %v2354 = vsub.s32 0, %v2352
        %v2355 = vsel %vm2353, %v2354, %v2352
        %v2356 = vclz %v2355
        %v2357 = vsub.s32 %v2356, 2
        %vm2358 = vcmp.gt.s32.totalorder 0, %v2357
        %v2359 = vsel %vm2358, 0, %v2357
        %v2360 = vsub.s32 32, %v2359
        %v2361 = vshll.u32 %v2352, %v2359
        %v2362 = vshrl.u32 %v2344, %v2360
        %v2363 = vor.u32 %v2361, %v2362
        %v2364 = vsub.s32 4294967266, %v2359
        %v2365 = vadd.s32 %v2364, 127
        %v2366 = vshll.u32 %v2365, 23
        %v2367 = vor.u32 4788187, %v2366
        %v2368 = vand.u32 2147483647, %v2367
        %v2370 = vcvt.s32.f32 %v2363
        %v2371 = vmul.f32 %v2370, %v2368
        %v2372 = vxor.u32 %v2371, 2147483648
        %v2373 = vsel %vm2290, %v2372, %v2371
        %v2374 = vsub.s32 4, %v2350
        %v2375 = vsel %vm2290, %v2374, %v2350
        %v2376 = vsel %vm2289, %v521, %v2373
        %v2377 = vsel %vm2289, 0, %v2375
        %v2378 = vcosq.f32.pop %v2376
        %v2379 = vsinq.f32.pop %v2376
        %vm2380 = vweird.f32 %v521
        %v2381 = vadd.s32 %v2377, 3
        %v2382 = vand.u32 %v2381, 3
        %vm2383 = vcmp.lt.s32.totalorder %v2382, 2
        %vm2384 = vcmp.eq.s32.totalorder %v2382, 0
        %v2385 = vxor.u32 %v2379, 2147483648
        %v2386 = vsel %vm2384, %v2378, %v2385
        %vm2387 = vcmp.eq.s32.totalorder %v2382, 2
        %v2388 = vxor.u32 %v2378, 2147483648
        %v2389 = vsel %vm2387, %v2388, %v2379
        %v2390 = vsel %vm2383, %v2386, %v2389
        %v2391 = vsel %vm2380, nan, %v2390
        %v2392 = vand.u32 2147483647, %v522
        %vm2393 = vcmp.le.f32.partialorder %v2392, 0.7853982
        %vm2394 = vcmp.lt.s32.totalorder %v522, 0
        %v2395 = vand.u32 %v522, 2139095040
        %v2396 = vshrl.u32 %v2395, 23
        %v2397 = vsub.s32 %v2396, 127
        %v2398 = vand.u32 2147483647, %v522
        %v2399 = vand.u32 %v2398, 8388607
        %v2400 = vor.u32 %v2399, 8388608
        %v2401 = vsub.s32 0, %v2400
        %v2402 = vadd.s32 %v2397, 1
        %vm2403 = vcmp.gt.s32.totalorder %v2402, 0
        %v2404 = vsel %vm2403, %v2402, 0
        %v2405 = vshrl.u32 %v2404, 5
        %v2406 = vand.u32 %v2404, 31
        %v2407 = vsub.s32 32, %v2406
        %v2408 = vshrl.u32 683565275, %v2407
        %v2409 = vshll.u32 683565275, %v2406
        %v2410 = vshrl.u32 2475754826, %v2407
        %v2411 = vor.u32 %v2409, %v2410
        %v2412 = vshll.u32 2475754826, %v2406
        %v2413 = vshrl.u32 2131351028, %v2407
        %v2414 = vor.u32 %v2412, %v2413
        %v2415 = vshll.u32 2131351028, %v2406
        %v2416 = vshrl.u32 2102212464, %v2407
        %v2417 = vor.u32 %v2415, %v2416
        %v2418 = vshll.u32 2102212464, %v2406
        %v2419 = vshrl.u32 920167782, %v2407
        %v2420 = vor.u32 %v2418, %v2419
        %v2421 = vshll.u32 920167782, %v2406
        %v2422 = vshrl.u32 1326507024, %v2407
        %v2423 = vor.u32 %v2421, %v2422
        %vm2424 = vcmp.lt.s32.totalorder %v2405, 1
        %vm2425 = vcmp.lt.s32.totalorder %v2405, 2
        %vm2426 = vcmp.lt.s32.totalorder %v2405, 3
        %vm2427 = vcmp.lt.s32.totalorder %v2405, 4
        %v2428 = vsel %vm2424, %v2408, %v2411
        %v2429 = vsel %vm2427, %v2417, 2102212464
        %v2430 = vsel %vm2426, %v2414, %v2429
        %v2431 = vsel %vm2425, %v2428, %v2430
        %v2432 = vsel %vm2424, %v2411, %v2414
        %v2433 = vsel %vm2427, %v2420, 920167782
        %v2434 = vsel %vm2426, %v2417, %v2433
        %v2435 = vsel %vm2425, %v2432, %v2434
        %v2436 = vsel %vm2424, %v2414, %v2417
        %v2437 = vsel %vm2427, %v2423, 1326507024
        %v2438 = vsel %vm2426, %v2420, %v2437
        %v2439 = vsel %vm2425, %v2436, %v2438
        %v2440 = vshll.u32 %v2400, 8
        %v2441 = vmul.u32.u64.compose %v2440, %v2439
        %v2442 = vextract.low.u32 %v2441
        %v2443 = vextract.high.u32 %v2441
        %v2444 = vmul.u32.u64.compose %v2440, %v2435
        %v2445 = vextract.low.u32 %v2444
        %v2446 = vextract.high.u32 %v2444
        %v2447 = vmul.u32 %v2440, %v2431
        %v2448 = vadd.s32 %v2443, %v2445
        %vm2449 = vc.u32 %v2443, %v2445
        %v2450 = vadd.s32 %v2446, 1
        %v2451 = vsel %vm2449, %v2450, %v2446
        %v2452 = vadd.s32 %v2447, %v2451
        %v2453 = vadd.s32 %v2452, 536870912
        %v2454 = vshrl.u32 %v2453, 30
        %v2455 = vshll.u32 %v2454, 30
        %v2456 = vsub.s32 %v2452, %v2455
        %vm2457 = vcmp.lt.s32.totalorder %v2456, 0
        %v2458 = vsub.s32 0, %v2456
        %v2459 = vsel %vm2457, %v2458, %v2456
        %v2460 = vclz %v2459
        %v2461 = vsub.s32 %v2460, 2
        %vm2462 = vcmp.gt.s32.totalorder 0, %v2461
        %v2463 = vsel %vm2462, 0, %v2461
        %v2464 = vsub.s32 32, %v2463
        %v2465 = vshll.u32 %v2456, %v2463
        %v2466 = vshrl.u32 %v2448, %v2464
        %v2467 = vor.u32 %v2465, %v2466
        %v2468 = vsub.s32 4294967266, %v2463
        %v2469 = vadd.s32 %v2468, 127
        %v2470 = vshll.u32 %v2469, 23
        %v2471 = vor.u32 4788187, %v2470
        %v2472 = vand.u32 2147483647, %v2471
        %v2474 = vcvt.s32.f32 %v2467
        %v2475 = vmul.f32 %v2474, %v2472
        %v2476 = vxor.u32 %v2475, 2147483648
        %v2477 = vsel %vm2394, %v2476, %v2475
        %v2478 = vsub.s32 4, %v2454
        %v2479 = vsel %vm2394, %v2478, %v2454
        %v2480 = vsel %vm2393, %v522, %v2477
        %v2481 = vsel %vm2393, 0, %v2479
        %v2482 = vcosq.f32.pop %v2480
        %v2483 = vsinq.f32.pop %v2480
        %vm2484 = vweird.f32 %v522
        %v2485 = vadd.s32 %v2481, 3
        %v2486 = vand.u32 %v2485, 3
        %vm2487 = vcmp.lt.s32.totalorder %v2486, 2
        %vm2488 = vcmp.eq.s32.totalorder %v2486, 0
        %v2489 = vxor.u32 %v2483, 2147483648
        %v2490 = vsel %vm2488, %v2482, %v2489
        %vm2491 = vcmp.eq.s32.totalorder %v2486, 2
        %v2492 = vxor.u32 %v2482, 2147483648
        %v2493 = vsel %vm2491, %v2492, %v2483
        %v2494 = vsel %vm2487, %v2490, %v2493
        %v2495 = vsel %vm2484, nan, %v2494
        %v2496 = vand.u32 2147483647, %v523
        %vm2497 = vcmp.le.f32.partialorder %v2496, 0.7853982
        %vm2498 = vcmp.lt.s32.totalorder %v523, 0
        %v2499 = vand.u32 %v523, 2139095040
        %v2500 = vshrl.u32 %v2499, 23
        %v2501 = vsub.s32 %v2500, 127
        %v2502 = vand.u32 2147483647, %v523
        %v2503 = vand.u32 %v2502, 8388607
        %v2504 = vor.u32 %v2503, 8388608
        %v2505 = vsub.s32 0, %v2504
        %v2506 = vadd.s32 %v2501, 1
        %vm2507 = vcmp.gt.s32.totalorder %v2506, 0
        %v2508 = vsel %vm2507, %v2506, 0
        %v2509 = vshrl.u32 %v2508, 5
        %v2510 = vand.u32 %v2508, 31
        %v2511 = vsub.s32 32, %v2510
        %v2512 = vshrl.u32 683565275, %v2511
        %v2513 = vshll.u32 683565275, %v2510
        %v2514 = vshrl.u32 2475754826, %v2511
        %v2515 = vor.u32 %v2513, %v2514
        %v2516 = vshll.u32 2475754826, %v2510
        %v2517 = vshrl.u32 2131351028, %v2511
        %v2518 = vor.u32 %v2516, %v2517
        %v2519 = vshll.u32 2131351028, %v2510
        %v2520 = vshrl.u32 2102212464, %v2511
        %v2521 = vor.u32 %v2519, %v2520
        %v2522 = vshll.u32 2102212464, %v2510
        %v2523 = vshrl.u32 920167782, %v2511
        %v2524 = vor.u32 %v2522, %v2523
        %v2525 = vshll.u32 920167782, %v2510
        %v2526 = vshrl.u32 1326507024, %v2511
        %v2527 = vor.u32 %v2525, %v2526
        %vm2528 = vcmp.lt.s32.totalorder %v2509, 1
        %vm2529 = vcmp.lt.s32.totalorder %v2509, 2
        %vm2530 = vcmp.lt.s32.totalorder %v2509, 3
        %vm2531 = vcmp.lt.s32.totalorder %v2509, 4
        %v2532 = vsel %vm2528, %v2512, %v2515
        %v2533 = vsel %vm2531, %v2521, 2102212464
        %v2534 = vsel %vm2530, %v2518, %v2533
        %v2535 = vsel %vm2529, %v2532, %v2534
        %v2536 = vsel %vm2528, %v2515, %v2518
        %v2537 = vsel %vm2531, %v2524, 920167782
        %v2538 = vsel %vm2530, %v2521, %v2537
        %v2539 = vsel %vm2529, %v2536, %v2538
        %v2540 = vsel %vm2528, %v2518, %v2521
        %v2541 = vsel %vm2531, %v2527, 1326507024
        %v2542 = vsel %vm2530, %v2524, %v2541
        %v2543 = vsel %vm2529, %v2540, %v2542
        %v2544 = vshll.u32 %v2504, 8
        %v2545 = vmul.u32.u64.compose %v2544, %v2543
        %v2546 = vextract.low.u32 %v2545
        %v2547 = vextract.high.u32 %v2545
        %v2548 = vmul.u32.u64.compose %v2544, %v2539
        %v2549 = vextract.low.u32 %v2548
        %v2550 = vextract.high.u32 %v2548
        %v2551 = vmul.u32 %v2544, %v2535
        %v2552 = vadd.s32 %v2547, %v2549
        %vm2553 = vc.u32 %v2547, %v2549
        %v2554 = vadd.s32 %v2550, 1
        %v2555 = vsel %vm2553, %v2554, %v2550
        %v2556 = vadd.s32 %v2551, %v2555
        %v2557 = vadd.s32 %v2556, 536870912
        %v2558 = vshrl.u32 %v2557, 30
        %v2559 = vshll.u32 %v2558, 30
        %v2560 = vsub.s32 %v2556, %v2559
        %vm2561 = vcmp.lt.s32.totalorder %v2560, 0
        %v2562 = vsub.s32 0, %v2560
        %v2563 = vsel %vm2561, %v2562, %v2560
        %v2564 = vclz %v2563
        %v2565 = vsub.s32 %v2564, 2
        %vm2566 = vcmp.gt.s32.totalorder 0, %v2565
        %v2567 = vsel %vm2566, 0, %v2565
        %v2568 = vsub.s32 32, %v2567
        %v2569 = vshll.u32 %v2560, %v2567
        %v2570 = vshrl.u32 %v2552, %v2568
        %v2571 = vor.u32 %v2569, %v2570
        %v2572 = vsub.s32 4294967266, %v2567
        %v2573 = vadd.s32 %v2572, 127
        %v2574 = vshll.u32 %v2573, 23
        %v2575 = vor.u32 4788187, %v2574
        %v2576 = vand.u32 2147483647, %v2575
        %v2578 = vcvt.s32.f32 %v2571
        %v2579 = vmul.f32 %v2578, %v2576
        %v2580 = vxor.u32 %v2579, 2147483648
        %v2581 = vsel %vm2498, %v2580, %v2579
        %v2582 = vsub.s32 4, %v2558
        %v2583 = vsel %vm2498, %v2582, %v2558
        %v2584 = vsel %vm2497, %v523, %v2581
        %v2585 = vsel %vm2497, 0, %v2583
        %v2586 = vcosq.f32.pop %v2584
        %v2587 = vsinq.f32.pop %v2584
        %vm2588 = vweird.f32 %v523
        %v2589 = vadd.s32 %v2585, 3
        %v2590 = vand.u32 %v2589, 3
        %vm2591 = vcmp.lt.s32.totalorder %v2590, 2
        %vm2592 = vcmp.eq.s32.totalorder %v2590, 0
        %v2593 = vxor.u32 %v2587, 2147483648
        %v2594 = vsel %vm2592, %v2586, %v2593
        %vm2595 = vcmp.eq.s32.totalorder %v2590, 2
        %v2596 = vxor.u32 %v2586, 2147483648
        %v2597 = vsel %vm2595, %v2596, %v2587
        %v2598 = vsel %vm2591, %v2594, %v2597
        %v2599 = vsel %vm2588, nan, %v2598
        %v2600 = vand.u32 2147483647, %v524
        %vm2601 = vcmp.le.f32.partialorder %v2600, 0.7853982
        %vm2602 = vcmp.lt.s32.totalorder %v524, 0
        %v2603 = vand.u32 %v524, 2139095040
        %v2604 = vshrl.u32 %v2603, 23
        %v2605 = vsub.s32 %v2604, 127
        %v2606 = vand.u32 2147483647, %v524
        %v2607 = vand.u32 %v2606, 8388607
        %v2608 = vor.u32 %v2607, 8388608
        %v2609 = vsub.s32 0, %v2608
        %v2610 = vadd.s32 %v2605, 1
        %vm2611 = vcmp.gt.s32.totalorder %v2610, 0
        %v2612 = vsel %vm2611, %v2610, 0
        %v2613 = vshrl.u32 %v2612, 5
        %v2614 = vand.u32 %v2612, 31
        %v2615 = vsub.s32 32, %v2614
        %v2616 = vshrl.u32 683565275, %v2615
        %v2617 = vshll.u32 683565275, %v2614
        %v2618 = vshrl.u32 2475754826, %v2615
        %v2619 = vor.u32 %v2617, %v2618
        %v2620 = vshll.u32 2475754826, %v2614
        %v2621 = vshrl.u32 2131351028, %v2615
        %v2622 = vor.u32 %v2620, %v2621
        %v2623 = vshll.u32 2131351028, %v2614
        %v2624 = vshrl.u32 2102212464, %v2615
        %v2625 = vor.u32 %v2623, %v2624
        %v2626 = vshll.u32 2102212464, %v2614
        %v2627 = vshrl.u32 920167782, %v2615
        %v2628 = vor.u32 %v2626, %v2627
        %v2629 = vshll.u32 920167782, %v2614
        %v2630 = vshrl.u32 1326507024, %v2615
        %v2631 = vor.u32 %v2629, %v2630
        %vm2632 = vcmp.lt.s32.totalorder %v2613, 1
        %vm2633 = vcmp.lt.s32.totalorder %v2613, 2
        %vm2634 = vcmp.lt.s32.totalorder %v2613, 3
        %vm2635 = vcmp.lt.s32.totalorder %v2613, 4
        %v2636 = vsel %vm2632, %v2616, %v2619
        %v2637 = vsel %vm2635, %v2625, 2102212464
        %v2638 = vsel %vm2634, %v2622, %v2637
        %v2639 = vsel %vm2633, %v2636, %v2638
        %v2640 = vsel %vm2632, %v2619, %v2622
        %v2641 = vsel %vm2635, %v2628, 920167782
        %v2642 = vsel %vm2634, %v2625, %v2641
        %v2643 = vsel %vm2633, %v2640, %v2642
        %v2644 = vsel %vm2632, %v2622, %v2625
        %v2645 = vsel %vm2635, %v2631, 1326507024
        %v2646 = vsel %vm2634, %v2628, %v2645
        %v2647 = vsel %vm2633, %v2644, %v2646
        %v2648 = vshll.u32 %v2608, 8
        %v2649 = vmul.u32.u64.compose %v2648, %v2647
        %v2650 = vextract.low.u32 %v2649
        %v2651 = vextract.high.u32 %v2649
        %v2652 = vmul.u32.u64.compose %v2648, %v2643
        %v2653 = vextract.low.u32 %v2652
        %v2654 = vextract.high.u32 %v2652
        %v2655 = vmul.u32 %v2648, %v2639
        %v2656 = vadd.s32 %v2651, %v2653
        %vm2657 = vc.u32 %v2651, %v2653
        %v2658 = vadd.s32 %v2654, 1
        %v2659 = vsel %vm2657, %v2658, %v2654
        %v2660 = vadd.s32 %v2655, %v2659
        %v2661 = vadd.s32 %v2660, 536870912
        %v2662 = vshrl.u32 %v2661, 30
        %v2663 = vshll.u32 %v2662, 30
        %v2664 = vsub.s32 %v2660, %v2663
        %vm2665 = vcmp.lt.s32.totalorder %v2664, 0
        %v2666 = vsub.s32 0, %v2664
        %v2667 = vsel %vm2665, %v2666, %v2664
        %v2668 = vclz %v2667
        %v2669 = vsub.s32 %v2668, 2
        %vm2670 = vcmp.gt.s32.totalorder 0, %v2669
        %v2671 = vsel %vm2670, 0, %v2669
        %v2672 = vsub.s32 32, %v2671
        %v2673 = vshll.u32 %v2664, %v2671
        %v2674 = vshrl.u32 %v2656, %v2672
        %v2675 = vor.u32 %v2673, %v2674
        %v2676 = vsub.s32 4294967266, %v2671
        %v2677 = vadd.s32 %v2676, 127
        %v2678 = vshll.u32 %v2677, 23
        %v2679 = vor.u32 4788187, %v2678
        %v2680 = vand.u32 2147483647, %v2679
        %v2682 = vcvt.s32.f32 %v2675
        %v2683 = vmul.f32 %v2682, %v2680
        %v2684 = vxor.u32 %v2683, 2147483648
        %v2685 = vsel %vm2602, %v2684, %v2683
        %v2686 = vsub.s32 4, %v2662
        %v2687 = vsel %vm2602, %v2686, %v2662
        %v2688 = vsel %vm2601, %v524, %v2685
        %v2689 = vsel %vm2601, 0, %v2687
        %v2690 = vcosq.f32.pop %v2688
        %v2691 = vsinq.f32.pop %v2688
        %vm2692 = vweird.f32 %v524
        %v2693 = vadd.s32 %v2689, 3
        %v2694 = vand.u32 %v2693, 3
        %vm2695 = vcmp.lt.s32.totalorder %v2694, 2
        %vm2696 = vcmp.eq.s32.totalorder %v2694, 0
        %v2697 = vxor.u32 %v2691, 2147483648
        %v2698 = vsel %vm2696, %v2690, %v2697
        %vm2699 = vcmp.eq.s32.totalorder %v2694, 2
        %v2700 = vxor.u32 %v2690, 2147483648
        %v2701 = vsel %vm2699, %v2700, %v2691
        %v2702 = vsel %vm2695, %v2698, %v2701
        %v2703 = vsel %vm2692, nan, %v2702
        %v2704 = vand.u32 2147483647, %v525
        %vm2705 = vcmp.le.f32.partialorder %v2704, 0.7853982
        %vm2706 = vcmp.lt.s32.totalorder %v525, 0
        %v2707 = vand.u32 %v525, 2139095040
        %v2708 = vshrl.u32 %v2707, 23
        %v2709 = vsub.s32 %v2708, 127
        %v2710 = vand.u32 2147483647, %v525
        %v2711 = vand.u32 %v2710, 8388607
        %v2712 = vor.u32 %v2711, 8388608
        %v2713 = vsub.s32 0, %v2712
        %v2714 = vadd.s32 %v2709, 1
        %vm2715 = vcmp.gt.s32.totalorder %v2714, 0
        %v2716 = vsel %vm2715, %v2714, 0
        %v2717 = vshrl.u32 %v2716, 5
        %v2718 = vand.u32 %v2716, 31
        %v2719 = vsub.s32 32, %v2718
        %v2720 = vshrl.u32 683565275, %v2719
        %v2721 = vshll.u32 683565275, %v2718
        %v2722 = vshrl.u32 2475754826, %v2719
        %v2723 = vor.u32 %v2721, %v2722
        %v2724 = vshll.u32 2475754826, %v2718
        %v2725 = vshrl.u32 2131351028, %v2719
        %v2726 = vor.u32 %v2724, %v2725
        %v2727 = vshll.u32 2131351028, %v2718
        %v2728 = vshrl.u32 2102212464, %v2719
        %v2729 = vor.u32 %v2727, %v2728
        %v2730 = vshll.u32 2102212464, %v2718
        %v2731 = vshrl.u32 920167782, %v2719
        %v2732 = vor.u32 %v2730, %v2731
        %v2733 = vshll.u32 920167782, %v2718
        %v2734 = vshrl.u32 1326507024, %v2719
        %v2735 = vor.u32 %v2733, %v2734
        %vm2736 = vcmp.lt.s32.totalorder %v2717, 1
        %vm2737 = vcmp.lt.s32.totalorder %v2717, 2
        %vm2738 = vcmp.lt.s32.totalorder %v2717, 3
        %vm2739 = vcmp.lt.s32.totalorder %v2717, 4
        %v2740 = vsel %vm2736, %v2720, %v2723
        %v2741 = vsel %vm2739, %v2729, 2102212464
        %v2742 = vsel %vm2738, %v2726, %v2741
        %v2743 = vsel %vm2737, %v2740, %v2742
        %v2744 = vsel %vm2736, %v2723, %v2726
        %v2745 = vsel %vm2739, %v2732, 920167782
        %v2746 = vsel %vm2738, %v2729, %v2745
        %v2747 = vsel %vm2737, %v2744, %v2746
        %v2748 = vsel %vm2736, %v2726, %v2729
        %v2749 = vsel %vm2739, %v2735, 1326507024
        %v2750 = vsel %vm2738, %v2732, %v2749
        %v2751 = vsel %vm2737, %v2748, %v2750
        %v2752 = vshll.u32 %v2712, 8
        %v2753 = vmul.u32.u64.compose %v2752, %v2751
        %v2754 = vextract.low.u32 %v2753
        %v2755 = vextract.high.u32 %v2753
        %v2756 = vmul.u32.u64.compose %v2752, %v2747
        %v2757 = vextract.low.u32 %v2756
        %v2758 = vextract.high.u32 %v2756
        %v2759 = vmul.u32 %v2752, %v2743
        %v2760 = vadd.s32 %v2755, %v2757
        %vm2761 = vc.u32 %v2755, %v2757
        %v2762 = vadd.s32 %v2758, 1
        %v2763 = vsel %vm2761, %v2762, %v2758
        %v2764 = vadd.s32 %v2759, %v2763
        %v2765 = vadd.s32 %v2764, 536870912
        %v2766 = vshrl.u32 %v2765, 30
        %v2767 = vshll.u32 %v2766, 30
        %v2768 = vsub.s32 %v2764, %v2767
        %vm2769 = vcmp.lt.s32.totalorder %v2768, 0
        %v2770 = vsub.s32 0, %v2768
        %v2771 = vsel %vm2769, %v2770, %v2768
        %v2772 = vclz %v2771
        %v2773 = vsub.s32 %v2772, 2
        %vm2774 = vcmp.gt.s32.totalorder 0, %v2773
        %v2775 = vsel %vm2774, 0, %v2773
        %v2776 = vsub.s32 32, %v2775
        %v2777 = vshll.u32 %v2768, %v2775
        %v2778 = vshrl.u32 %v2760, %v2776
        %v2779 = vor.u32 %v2777, %v2778
        %v2780 = vsub.s32 4294967266, %v2775
        %v2781 = vadd.s32 %v2780, 127
        %v2782 = vshll.u32 %v2781, 23
        %v2783 = vor.u32 4788187, %v2782
        %v2784 = vand.u32 2147483647, %v2783
        %v2786 = vcvt.s32.f32 %v2779
        %v2787 = vmul.f32 %v2786, %v2784
        %v2788 = vxor.u32 %v2787, 2147483648
        %v2789 = vsel %vm2706, %v2788, %v2787
        %v2790 = vsub.s32 4, %v2766
        %v2791 = vsel %vm2706, %v2790, %v2766
        %v2792 = vsel %vm2705, %v525, %v2789
        %v2793 = vsel %vm2705, 0, %v2791
        %v2794 = vcosq.f32.pop %v2792
        %v2795 = vsinq.f32.pop %v2792
        %vm2796 = vweird.f32 %v525
        %v2797 = vadd.s32 %v2793, 3
        %v2798 = vand.u32 %v2797, 3
        %vm2799 = vcmp.lt.s32.totalorder %v2798, 2
        %vm2800 = vcmp.eq.s32.totalorder %v2798, 0
        %v2801 = vxor.u32 %v2795, 2147483648
        %v2802 = vsel %vm2800, %v2794, %v2801
        %vm2803 = vcmp.eq.s32.totalorder %v2798, 2
        %v2804 = vxor.u32 %v2794, 2147483648
        %v2805 = vsel %vm2803, %v2804, %v2795
        %v2806 = vsel %vm2799, %v2802, %v2805
        %v2807 = vsel %vm2796, nan, %v2806
        %v2808 = vand.u32 2147483647, %v526
        %vm2809 = vcmp.le.f32.partialorder %v2808, 0.7853982
        %vm2810 = vcmp.lt.s32.totalorder %v526, 0
        %v2811 = vand.u32 %v526, 2139095040
        %v2812 = vshrl.u32 %v2811, 23
        %v2813 = vsub.s32 %v2812, 127
        %v2814 = vand.u32 2147483647, %v526
        %v2815 = vand.u32 %v2814, 8388607
        %v2816 = vor.u32 %v2815, 8388608
        %v2817 = vsub.s32 0, %v2816
        %v2818 = vadd.s32 %v2813, 1
        %vm2819 = vcmp.gt.s32.totalorder %v2818, 0
        %v2820 = vsel %vm2819, %v2818, 0
        %v2821 = vshrl.u32 %v2820, 5
        %v2822 = vand.u32 %v2820, 31
        %v2823 = vsub.s32 32, %v2822
        %v2824 = vshrl.u32 683565275, %v2823
        %v2825 = vshll.u32 683565275, %v2822
        %v2826 = vshrl.u32 2475754826, %v2823
        %v2827 = vor.u32 %v2825, %v2826
        %v2828 = vshll.u32 2475754826, %v2822
        %v2829 = vshrl.u32 2131351028, %v2823
        %v2830 = vor.u32 %v2828, %v2829
        %v2831 = vshll.u32 2131351028, %v2822
        %v2832 = vshrl.u32 2102212464, %v2823
        %v2833 = vor.u32 %v2831, %v2832
        %v2834 = vshll.u32 2102212464, %v2822
        %v2835 = vshrl.u32 920167782, %v2823
        %v2836 = vor.u32 %v2834, %v2835
        %v2837 = vshll.u32 920167782, %v2822
        %v2838 = vshrl.u32 1326507024, %v2823
        %v2839 = vor.u32 %v2837, %v2838
        %vm2840 = vcmp.lt.s32.totalorder %v2821, 1
        %vm2841 = vcmp.lt.s32.totalorder %v2821, 2
        %vm2842 = vcmp.lt.s32.totalorder %v2821, 3
        %vm2843 = vcmp.lt.s32.totalorder %v2821, 4
        %v2844 = vsel %vm2840, %v2824, %v2827
        %v2845 = vsel %vm2843, %v2833, 2102212464
        %v2846 = vsel %vm2842, %v2830, %v2845
        %v2847 = vsel %vm2841, %v2844, %v2846
        %v2848 = vsel %vm2840, %v2827, %v2830
        %v2849 = vsel %vm2843, %v2836, 920167782
        %v2850 = vsel %vm2842, %v2833, %v2849
        %v2851 = vsel %vm2841, %v2848, %v2850
        %v2852 = vsel %vm2840, %v2830, %v2833
        %v2853 = vsel %vm2843, %v2839, 1326507024
        %v2854 = vsel %vm2842, %v2836, %v2853
        %v2855 = vsel %vm2841, %v2852, %v2854
        %v2856 = vshll.u32 %v2816, 8
        %v2857 = vmul.u32.u64.compose %v2856, %v2855
        %v2858 = vextract.low.u32 %v2857
        %v2859 = vextract.high.u32 %v2857
        %v2860 = vmul.u32.u64.compose %v2856, %v2851
        %v2861 = vextract.low.u32 %v2860
        %v2862 = vextract.high.u32 %v2860
        %v2863 = vmul.u32 %v2856, %v2847
        %v2864 = vadd.s32 %v2859, %v2861
        %vm2865 = vc.u32 %v2859, %v2861
        %v2866 = vadd.s32 %v2862, 1
        %v2867 = vsel %vm2865, %v2866, %v2862
        %v2868 = vadd.s32 %v2863, %v2867
        %v2869 = vadd.s32 %v2868, 536870912
        %v2870 = vshrl.u32 %v2869, 30
        %v2871 = vshll.u32 %v2870, 30
        %v2872 = vsub.s32 %v2868, %v2871
        %vm2873 = vcmp.lt.s32.totalorder %v2872, 0
        %v2874 = vsub.s32 0, %v2872
        %v2875 = vsel %vm2873, %v2874, %v2872
        %v2876 = vclz %v2875
        %v2877 = vsub.s32 %v2876, 2
        %vm2878 = vcmp.gt.s32.totalorder 0, %v2877
        %v2879 = vsel %vm2878, 0, %v2877
        %v2880 = vsub.s32 32, %v2879
        %v2881 = vshll.u32 %v2872, %v2879
        %v2882 = vshrl.u32 %v2864, %v2880
        %v2883 = vor.u32 %v2881, %v2882
        %v2884 = vsub.s32 4294967266, %v2879
        %v2885 = vadd.s32 %v2884, 127
        %v2886 = vshll.u32 %v2885, 23
        %v2887 = vor.u32 4788187, %v2886
        %v2888 = vand.u32 2147483647, %v2887
        %v2890 = vcvt.s32.f32 %v2883
        %v2891 = vmul.f32 %v2890, %v2888
        %v2892 = vxor.u32 %v2891, 2147483648
        %v2893 = vsel %vm2810, %v2892, %v2891
        %v2894 = vsub.s32 4, %v2870
        %v2895 = vsel %vm2810, %v2894, %v2870
        %v2896 = vsel %vm2809, %v526, %v2893
        %v2897 = vsel %vm2809, 0, %v2895
        %v2898 = vcosq.f32.pop %v2896
        %v2899 = vsinq.f32.pop %v2896
        %vm2900 = vweird.f32 %v526
        %v2901 = vadd.s32 %v2897, 3
        %v2902 = vand.u32 %v2901, 3
        %vm2903 = vcmp.lt.s32.totalorder %v2902, 2
        %vm2904 = vcmp.eq.s32.totalorder %v2902, 0
        %v2905 = vxor.u32 %v2899, 2147483648
        %v2906 = vsel %vm2904, %v2898, %v2905
        %vm2907 = vcmp.eq.s32.totalorder %v2902, 2
        %v2908 = vxor.u32 %v2898, 2147483648
        %v2909 = vsel %vm2907, %v2908, %v2899
        %v2910 = vsel %vm2903, %v2906, %v2909
        %v2911 = vsel %vm2900, nan, %v2910
        %v2912 = vand.u32 2147483647, %v527
        %vm2913 = vcmp.le.f32.partialorder %v2912, 0.7853982
        %vm2914 = vcmp.lt.s32.totalorder %v527, 0
        %v2915 = vand.u32 %v527, 2139095040
        %v2916 = vshrl.u32 %v2915, 23
        %v2917 = vsub.s32 %v2916, 127
        %v2918 = vand.u32 2147483647, %v527
        %v2919 = vand.u32 %v2918, 8388607
        %v2920 = vor.u32 %v2919, 8388608
        %v2921 = vsub.s32 0, %v2920
        %v2922 = vadd.s32 %v2917, 1
        %vm2923 = vcmp.gt.s32.totalorder %v2922, 0
        %v2924 = vsel %vm2923, %v2922, 0
        %v2925 = vshrl.u32 %v2924, 5
        %v2926 = vand.u32 %v2924, 31
        %v2927 = vsub.s32 32, %v2926
        %v2928 = vshrl.u32 683565275, %v2927
        %v2929 = vshll.u32 683565275, %v2926
        %v2930 = vshrl.u32 2475754826, %v2927
        %v2931 = vor.u32 %v2929, %v2930
        %v2932 = vshll.u32 2475754826, %v2926
        %v2933 = vshrl.u32 2131351028, %v2927
        %v2934 = vor.u32 %v2932, %v2933
        %v2935 = vshll.u32 2131351028, %v2926
        %v2936 = vshrl.u32 2102212464, %v2927
        %v2937 = vor.u32 %v2935, %v2936
        %v2938 = vshll.u32 2102212464, %v2926
        %v2939 = vshrl.u32 920167782, %v2927
        %v2940 = vor.u32 %v2938, %v2939
        %v2941 = vshll.u32 920167782, %v2926
        %v2942 = vshrl.u32 1326507024, %v2927
        %v2943 = vor.u32 %v2941, %v2942
        %vm2944 = vcmp.lt.s32.totalorder %v2925, 1
        %vm2945 = vcmp.lt.s32.totalorder %v2925, 2
        %vm2946 = vcmp.lt.s32.totalorder %v2925, 3
        %vm2947 = vcmp.lt.s32.totalorder %v2925, 4
        %v2948 = vsel %vm2944, %v2928, %v2931
        %v2949 = vsel %vm2947, %v2937, 2102212464
        %v2950 = vsel %vm2946, %v2934, %v2949
        %v2951 = vsel %vm2945, %v2948, %v2950
        %v2952 = vsel %vm2944, %v2931, %v2934
        %v2953 = vsel %vm2947, %v2940, 920167782
        %v2954 = vsel %vm2946, %v2937, %v2953
        %v2955 = vsel %vm2945, %v2952, %v2954
        %v2956 = vsel %vm2944, %v2934, %v2937
        %v2957 = vsel %vm2947, %v2943, 1326507024
        %v2958 = vsel %vm2946, %v2940, %v2957
        %v2959 = vsel %vm2945, %v2956, %v2958
        %v2960 = vshll.u32 %v2920, 8
        %v2961 = vmul.u32.u64.compose %v2960, %v2959
        %v2962 = vextract.low.u32 %v2961
        %v2963 = vextract.high.u32 %v2961
        %v2964 = vmul.u32.u64.compose %v2960, %v2955
        %v2965 = vextract.low.u32 %v2964
        %v2966 = vextract.high.u32 %v2964
        %v2967 = vmul.u32 %v2960, %v2951
        %v2968 = vadd.s32 %v2963, %v2965
        %vm2969 = vc.u32 %v2963, %v2965
        %v2970 = vadd.s32 %v2966, 1
        %v2971 = vsel %vm2969, %v2970, %v2966
        %v2972 = vadd.s32 %v2967, %v2971
        %v2973 = vadd.s32 %v2972, 536870912
        %v2974 = vshrl.u32 %v2973, 30
        %v2975 = vshll.u32 %v2974, 30
        %v2976 = vsub.s32 %v2972, %v2975
        %vm2977 = vcmp.lt.s32.totalorder %v2976, 0
        %v2978 = vsub.s32 0, %v2976
        %v2979 = vsel %vm2977, %v2978, %v2976
        %v2980 = vclz %v2979
        %v2981 = vsub.s32 %v2980, 2
        %vm2982 = vcmp.gt.s32.totalorder 0, %v2981
        %v2983 = vsel %vm2982, 0, %v2981
        %v2984 = vsub.s32 32, %v2983
        %v2985 = vshll.u32 %v2976, %v2983
        %v2986 = vshrl.u32 %v2968, %v2984
        %v2987 = vor.u32 %v2985, %v2986
        %v2988 = vsub.s32 4294967266, %v2983
        %v2989 = vadd.s32 %v2988, 127
        %v2990 = vshll.u32 %v2989, 23
        %v2991 = vor.u32 4788187, %v2990
        %v2992 = vand.u32 2147483647, %v2991
        %v2994 = vcvt.s32.f32 %v2987
        %v2995 = vmul.f32 %v2994, %v2992
        %v2996 = vxor.u32 %v2995, 2147483648
        %v2997 = vsel %vm2914, %v2996, %v2995
        %v2998 = vsub.s32 4, %v2974
        %v2999 = vsel %vm2914, %v2998, %v2974
        %v3000 = vsel %vm2913, %v527, %v2997
        %v3001 = vsel %vm2913, 0, %v2999
        %v3002 = vcosq.f32.pop %v3000
        %v3003 = vsinq.f32.pop %v3000
        %vm3004 = vweird.f32 %v527
        %v3005 = vadd.s32 %v3001, 3
        %v3006 = vand.u32 %v3005, 3
        %vm3007 = vcmp.lt.s32.totalorder %v3006, 2
        %vm3008 = vcmp.eq.s32.totalorder %v3006, 0
        %v3009 = vxor.u32 %v3003, 2147483648
        %v3010 = vsel %vm3008, %v3002, %v3009
        %vm3011 = vcmp.eq.s32.totalorder %v3006, 2
        %v3012 = vxor.u32 %v3002, 2147483648
        %v3013 = vsel %vm3011, %v3012, %v3003
        %v3014 = vsel %vm3007, %v3010, %v3013
        %v3015 = vsel %vm3004, nan, %v3014
        %v3016 = vand.u32 2147483647, %v528
        %vm3017 = vcmp.le.f32.partialorder %v3016, 0.7853982
        %vm3018 = vcmp.lt.s32.totalorder %v528, 0
        %v3019 = vand.u32 %v528, 2139095040
        %v3020 = vshrl.u32 %v3019, 23
        %v3021 = vsub.s32 %v3020, 127
        %v3022 = vand.u32 2147483647, %v528
        %v3023 = vand.u32 %v3022, 8388607
        %v3024 = vor.u32 %v3023, 8388608
        %v3025 = vsub.s32 0, %v3024
        %v3026 = vadd.s32 %v3021, 1
        %vm3027 = vcmp.gt.s32.totalorder %v3026, 0
        %v3028 = vsel %vm3027, %v3026, 0
        %v3029 = vshrl.u32 %v3028, 5
        %v3030 = vand.u32 %v3028, 31
        %v3031 = vsub.s32 32, %v3030
        %v3032 = vshrl.u32 683565275, %v3031
        %v3033 = vshll.u32 683565275, %v3030
        %v3034 = vshrl.u32 2475754826, %v3031
        %v3035 = vor.u32 %v3033, %v3034
        %v3036 = vshll.u32 2475754826, %v3030
        %v3037 = vshrl.u32 2131351028, %v3031
        %v3038 = vor.u32 %v3036, %v3037
        %v3039 = vshll.u32 2131351028, %v3030
        %v3040 = vshrl.u32 2102212464, %v3031
        %v3041 = vor.u32 %v3039, %v3040
        %v3042 = vshll.u32 2102212464, %v3030
        %v3043 = vshrl.u32 920167782, %v3031
        %v3044 = vor.u32 %v3042, %v3043
        %v3045 = vshll.u32 920167782, %v3030
        %v3046 = vshrl.u32 1326507024, %v3031
        %v3047 = vor.u32 %v3045, %v3046
        %vm3048 = vcmp.lt.s32.totalorder %v3029, 1
        %vm3049 = vcmp.lt.s32.totalorder %v3029, 2
        %vm3050 = vcmp.lt.s32.totalorder %v3029, 3
        %vm3051 = vcmp.lt.s32.totalorder %v3029, 4
        %v3052 = vsel %vm3048, %v3032, %v3035
        %v3053 = vsel %vm3051, %v3041, 2102212464
        %v3054 = vsel %vm3050, %v3038, %v3053
        %v3055 = vsel %vm3049, %v3052, %v3054
        %v3056 = vsel %vm3048, %v3035, %v3038
        %v3057 = vsel %vm3051, %v3044, 920167782
        %v3058 = vsel %vm3050, %v3041, %v3057
        %v3059 = vsel %vm3049, %v3056, %v3058
        %v3060 = vsel %vm3048, %v3038, %v3041
        %v3061 = vsel %vm3051, %v3047, 1326507024
        %v3062 = vsel %vm3050, %v3044, %v3061
        %v3063 = vsel %vm3049, %v3060, %v3062
        %v3064 = vshll.u32 %v3024, 8
        %v3065 = vmul.u32.u64.compose %v3064, %v3063
        %v3066 = vextract.low.u32 %v3065
        %v3067 = vextract.high.u32 %v3065
        %v3068 = vmul.u32.u64.compose %v3064, %v3059
        %v3069 = vextract.low.u32 %v3068
        %v3070 = vextract.high.u32 %v3068
        %v3071 = vmul.u32 %v3064, %v3055
        %v3072 = vadd.s32 %v3067, %v3069
        %vm3073 = vc.u32 %v3067, %v3069
        %v3074 = vadd.s32 %v3070, 1
        %v3075 = vsel %vm3073, %v3074, %v3070
        %v3076 = vadd.s32 %v3071, %v3075
        %v3077 = vadd.s32 %v3076, 536870912
        %v3078 = vshrl.u32 %v3077, 30
        %v3079 = vshll.u32 %v3078, 30
        %v3080 = vsub.s32 %v3076, %v3079
        %vm3081 = vcmp.lt.s32.totalorder %v3080, 0
        %v3082 = vsub.s32 0, %v3080
        %v3083 = vsel %vm3081, %v3082, %v3080
        %v3084 = vclz %v3083
        %v3085 = vsub.s32 %v3084, 2
        %vm3086 = vcmp.gt.s32.totalorder 0, %v3085
        %v3087 = vsel %vm3086, 0, %v3085
        %v3088 = vsub.s32 32, %v3087
        %v3089 = vshll.u32 %v3080, %v3087
        %v3090 = vshrl.u32 %v3072, %v3088
        %v3091 = vor.u32 %v3089, %v3090
        %v3092 = vsub.s32 4294967266, %v3087
        %v3093 = vadd.s32 %v3092, 127
        %v3094 = vshll.u32 %v3093, 23
        %v3095 = vor.u32 4788187, %v3094
        %v3096 = vand.u32 2147483647, %v3095
        %v3098 = vcvt.s32.f32 %v3091
        %v3099 = vmul.f32 %v3098, %v3096
        %v3100 = vxor.u32 %v3099, 2147483648
        %v3101 = vsel %vm3018, %v3100, %v3099
        %v3102 = vsub.s32 4, %v3078
        %v3103 = vsel %vm3018, %v3102, %v3078
        %v3104 = vsel %vm3017, %v528, %v3101
        %v3105 = vsel %vm3017, 0, %v3103
        %v3106 = vcosq.f32.pop %v3104
        %v3107 = vsinq.f32.pop %v3104
        %vm3108 = vweird.f32 %v528
        %v3109 = vadd.s32 %v3105, 3
        %v3110 = vand.u32 %v3109, 3
        %vm3111 = vcmp.lt.s32.totalorder %v3110, 2
        %vm3112 = vcmp.eq.s32.totalorder %v3110, 0
        %v3113 = vxor.u32 %v3107, 2147483648
        %v3114 = vsel %vm3112, %v3106, %v3113
        %vm3115 = vcmp.eq.s32.totalorder %v3110, 2
        %v3116 = vxor.u32 %v3106, 2147483648
        %v3117 = vsel %vm3115, %v3116, %v3107
        %v3118 = vsel %vm3111, %v3114, %v3117
        %v3119 = vsel %vm3108, nan, %v3118
        %v3120 = vand.u32 2147483647, %v529
        %vm3121 = vcmp.le.f32.partialorder %v3120, 0.7853982
        %vm3122 = vcmp.lt.s32.totalorder %v529, 0
        %v3123 = vand.u32 %v529, 2139095040
        %v3124 = vshrl.u32 %v3123, 23
        %v3125 = vsub.s32 %v3124, 127
        %v3126 = vand.u32 2147483647, %v529
        %v3127 = vand.u32 %v3126, 8388607
        %v3128 = vor.u32 %v3127, 8388608
        %v3129 = vsub.s32 0, %v3128
        %v3130 = vadd.s32 %v3125, 1
        %vm3131 = vcmp.gt.s32.totalorder %v3130, 0
        %v3132 = vsel %vm3131, %v3130, 0
        %v3133 = vshrl.u32 %v3132, 5
        %v3134 = vand.u32 %v3132, 31
        %v3135 = vsub.s32 32, %v3134
        %v3136 = vshrl.u32 683565275, %v3135
        %v3137 = vshll.u32 683565275, %v3134
        %v3138 = vshrl.u32 2475754826, %v3135
        %v3139 = vor.u32 %v3137, %v3138
        %v3140 = vshll.u32 2475754826, %v3134
        %v3141 = vshrl.u32 2131351028, %v3135
        %v3142 = vor.u32 %v3140, %v3141
        %v3143 = vshll.u32 2131351028, %v3134
        %v3144 = vshrl.u32 2102212464, %v3135
        %v3145 = vor.u32 %v3143, %v3144
        %v3146 = vshll.u32 2102212464, %v3134
        %v3147 = vshrl.u32 920167782, %v3135
        %v3148 = vor.u32 %v3146, %v3147
        %v3149 = vshll.u32 920167782, %v3134
        %v3150 = vshrl.u32 1326507024, %v3135
        %v3151 = vor.u32 %v3149, %v3150
        %vm3152 = vcmp.lt.s32.totalorder %v3133, 1
        %vm3153 = vcmp.lt.s32.totalorder %v3133, 2
        %vm3154 = vcmp.lt.s32.totalorder %v3133, 3
        %vm3155 = vcmp.lt.s32.totalorder %v3133, 4
        %v3156 = vsel %vm3152, %v3136, %v3139
        %v3157 = vsel %vm3155, %v3145, 2102212464
        %v3158 = vsel %vm3154, %v3142, %v3157
        %v3159 = vsel %vm3153, %v3156, %v3158
        %v3160 = vsel %vm3152, %v3139, %v3142
        %v3161 = vsel %vm3155, %v3148, 920167782
        %v3162 = vsel %vm3154, %v3145, %v3161
        %v3163 = vsel %vm3153, %v3160, %v3162
        %v3164 = vsel %vm3152, %v3142, %v3145
        %v3165 = vsel %vm3155, %v3151, 1326507024
        %v3166 = vsel %vm3154, %v3148, %v3165
        %v3167 = vsel %vm3153, %v3164, %v3166
        %v3168 = vshll.u32 %v3128, 8
        %v3169 = vmul.u32.u64.compose %v3168, %v3167
        %v3170 = vextract.low.u32 %v3169
        %v3171 = vextract.high.u32 %v3169
        %v3172 = vmul.u32.u64.compose %v3168, %v3163
        %v3173 = vextract.low.u32 %v3172
        %v3174 = vextract.high.u32 %v3172
        %v3175 = vmul.u32 %v3168, %v3159
        %v3176 = vadd.s32 %v3171, %v3173
        %vm3177 = vc.u32 %v3171, %v3173
        %v3178 = vadd.s32 %v3174, 1
        %v3179 = vsel %vm3177, %v3178, %v3174
        %v3180 = vadd.s32 %v3175, %v3179
        %v3181 = vadd.s32 %v3180, 536870912
        %v3182 = vshrl.u32 %v3181, 30
        %v3183 = vshll.u32 %v3182, 30
        %v3184 = vsub.s32 %v3180, %v3183
        %vm3185 = vcmp.lt.s32.totalorder %v3184, 0
        %v3186 = vsub.s32 0, %v3184
        %v3187 = vsel %vm3185, %v3186, %v3184
        %v3188 = vclz %v3187
        %v3189 = vsub.s32 %v3188, 2
        %vm3190 = vcmp.gt.s32.totalorder 0, %v3189
        %v3191 = vsel %vm3190, 0, %v3189
        %v3192 = vsub.s32 32, %v3191
        %v3193 = vshll.u32 %v3184, %v3191
        %v3194 = vshrl.u32 %v3176, %v3192
        %v3195 = vor.u32 %v3193, %v3194
        %v3196 = vsub.s32 4294967266, %v3191
        %v3197 = vadd.s32 %v3196, 127
        %v3198 = vshll.u32 %v3197, 23
        %v3199 = vor.u32 4788187, %v3198
        %v3200 = vand.u32 2147483647, %v3199
        %v3202 = vcvt.s32.f32 %v3195
        %v3203 = vmul.f32 %v3202, %v3200
        %v3204 = vxor.u32 %v3203, 2147483648
        %v3205 = vsel %vm3122, %v3204, %v3203
        %v3206 = vsub.s32 4, %v3182
        %v3207 = vsel %vm3122, %v3206, %v3182
        %v3208 = vsel %vm3121, %v529, %v3205
        %v3209 = vsel %vm3121, 0, %v3207
        %v3210 = vcosq.f32.pop %v3208
        %v3211 = vsinq.f32.pop %v3208
        %vm3212 = vweird.f32 %v529
        %v3213 = vadd.s32 %v3209, 3
        %v3214 = vand.u32 %v3213, 3
        %vm3215 = vcmp.lt.s32.totalorder %v3214, 2
        %vm3216 = vcmp.eq.s32.totalorder %v3214, 0
        %v3217 = vxor.u32 %v3211, 2147483648
        %v3218 = vsel %vm3216, %v3210, %v3217
        %vm3219 = vcmp.eq.s32.totalorder %v3214, 2
        %v3220 = vxor.u32 %v3210, 2147483648
        %v3221 = vsel %vm3219, %v3220, %v3211
        %v3222 = vsel %vm3215, %v3218, %v3221
        %v3223 = vsel %vm3212, nan, %v3222
        %v3224 = vand.u32 2147483647, %v530
        %vm3225 = vcmp.le.f32.partialorder %v3224, 0.7853982
        %vm3226 = vcmp.lt.s32.totalorder %v530, 0
        %v3227 = vand.u32 %v530, 2139095040
        %v3228 = vshrl.u32 %v3227, 23
        %v3229 = vsub.s32 %v3228, 127
        %v3230 = vand.u32 2147483647, %v530
        %v3231 = vand.u32 %v3230, 8388607
        %v3232 = vor.u32 %v3231, 8388608
        %v3233 = vsub.s32 0, %v3232
        %v3234 = vadd.s32 %v3229, 1
        %vm3235 = vcmp.gt.s32.totalorder %v3234, 0
        %v3236 = vsel %vm3235, %v3234, 0
        %v3237 = vshrl.u32 %v3236, 5
        %v3238 = vand.u32 %v3236, 31
        %v3239 = vsub.s32 32, %v3238
        %v3240 = vshrl.u32 683565275, %v3239
        %v3241 = vshll.u32 683565275, %v3238
        %v3242 = vshrl.u32 2475754826, %v3239
        %v3243 = vor.u32 %v3241, %v3242
        %v3244 = vshll.u32 2475754826, %v3238
        %v3245 = vshrl.u32 2131351028, %v3239
        %v3246 = vor.u32 %v3244, %v3245
        %v3247 = vshll.u32 2131351028, %v3238
        %v3248 = vshrl.u32 2102212464, %v3239
        %v3249 = vor.u32 %v3247, %v3248
        %v3250 = vshll.u32 2102212464, %v3238
        %v3251 = vshrl.u32 920167782, %v3239
        %v3252 = vor.u32 %v3250, %v3251
        %v3253 = vshll.u32 920167782, %v3238
        %v3254 = vshrl.u32 1326507024, %v3239
        %v3255 = vor.u32 %v3253, %v3254
        %vm3256 = vcmp.lt.s32.totalorder %v3237, 1
        %vm3257 = vcmp.lt.s32.totalorder %v3237, 2
        %vm3258 = vcmp.lt.s32.totalorder %v3237, 3
        %vm3259 = vcmp.lt.s32.totalorder %v3237, 4
        %v3260 = vsel %vm3256, %v3240, %v3243
        %v3261 = vsel %vm3259, %v3249, 2102212464
        %v3262 = vsel %vm3258, %v3246, %v3261
        %v3263 = vsel %vm3257, %v3260, %v3262
        %v3264 = vsel %vm3256, %v3243, %v3246
        %v3265 = vsel %vm3259, %v3252, 920167782
        %v3266 = vsel %vm3258, %v3249, %v3265
        %v3267 = vsel %vm3257, %v3264, %v3266
        %v3268 = vsel %vm3256, %v3246, %v3249
        %v3269 = vsel %vm3259, %v3255, 1326507024
        %v3270 = vsel %vm3258, %v3252, %v3269
        %v3271 = vsel %vm3257, %v3268, %v3270
        %v3272 = vshll.u32 %v3232, 8
        %v3273 = vmul.u32.u64.compose %v3272, %v3271
        %v3274 = vextract.low.u32 %v3273
        %v3275 = vextract.high.u32 %v3273
        %v3276 = vmul.u32.u64.compose %v3272, %v3267
        %v3277 = vextract.low.u32 %v3276
        %v3278 = vextract.high.u32 %v3276
        %v3279 = vmul.u32 %v3272, %v3263
        %v3280 = vadd.s32 %v3275, %v3277
        %vm3281 = vc.u32 %v3275, %v3277
        %v3282 = vadd.s32 %v3278, 1
        %v3283 = vsel %vm3281, %v3282, %v3278
        %v3284 = vadd.s32 %v3279, %v3283
        %v3285 = vadd.s32 %v3284, 536870912
        %v3286 = vshrl.u32 %v3285, 30
        %v3287 = vshll.u32 %v3286, 30
        %v3288 = vsub.s32 %v3284, %v3287
        %vm3289 = vcmp.lt.s32.totalorder %v3288, 0
        %v3290 = vsub.s32 0, %v3288
        %v3291 = vsel %vm3289, %v3290, %v3288
        %v3292 = vclz %v3291
        %v3293 = vsub.s32 %v3292, 2
        %vm3294 = vcmp.gt.s32.totalorder 0, %v3293
        %v3295 = vsel %vm3294, 0, %v3293
        %v3296 = vsub.s32 32, %v3295
        %v3297 = vshll.u32 %v3288, %v3295
        %v3298 = vshrl.u32 %v3280, %v3296
        %v3299 = vor.u32 %v3297, %v3298
        %v3300 = vsub.s32 4294967266, %v3295
        %v3301 = vadd.s32 %v3300, 127
        %v3302 = vshll.u32 %v3301, 23
        %v3303 = vor.u32 4788187, %v3302
        %v3304 = vand.u32 2147483647, %v3303
        %v3306 = vcvt.s32.f32 %v3299
        %v3307 = vmul.f32 %v3306, %v3304
        %v3308 = vxor.u32 %v3307, 2147483648
        %v3309 = vsel %vm3226, %v3308, %v3307
        %v3310 = vsub.s32 4, %v3286
        %v3311 = vsel %vm3226, %v3310, %v3286
        %v3312 = vsel %vm3225, %v530, %v3309
        %v3313 = vsel %vm3225, 0, %v3311
        %v3314 = vcosq.f32.pop %v3312
        %v3315 = vsinq.f32.pop %v3312
        %vm3316 = vweird.f32 %v530
        %v3317 = vadd.s32 %v3313, 3
        %v3318 = vand.u32 %v3317, 3
        %vm3319 = vcmp.lt.s32.totalorder %v3318, 2
        %vm3320 = vcmp.eq.s32.totalorder %v3318, 0
        %v3321 = vxor.u32 %v3315, 2147483648
        %v3322 = vsel %vm3320, %v3314, %v3321
        %vm3323 = vcmp.eq.s32.totalorder %v3318, 2
        %v3324 = vxor.u32 %v3314, 2147483648
        %v3325 = vsel %vm3323, %v3324, %v3315
        %v3326 = vsel %vm3319, %v3322, %v3325
        %v3327 = vsel %vm3316, nan, %v3326
        %v3328 = vand.u32 2147483647, %v531
        %vm3329 = vcmp.le.f32.partialorder %v3328, 0.7853982
        %vm3330 = vcmp.lt.s32.totalorder %v531, 0
        %v3331 = vand.u32 %v531, 2139095040
        %v3332 = vshrl.u32 %v3331, 23
        %v3333 = vsub.s32 %v3332, 127
        %v3334 = vand.u32 2147483647, %v531
        %v3335 = vand.u32 %v3334, 8388607
        %v3336 = vor.u32 %v3335, 8388608
        %v3337 = vsub.s32 0, %v3336
        %v3338 = vadd.s32 %v3333, 1
        %vm3339 = vcmp.gt.s32.totalorder %v3338, 0
        %v3340 = vsel %vm3339, %v3338, 0
        %v3341 = vshrl.u32 %v3340, 5
        %v3342 = vand.u32 %v3340, 31
        %v3343 = vsub.s32 32, %v3342
        %v3344 = vshrl.u32 683565275, %v3343
        %v3345 = vshll.u32 683565275, %v3342
        %v3346 = vshrl.u32 2475754826, %v3343
        %v3347 = vor.u32 %v3345, %v3346
        %v3348 = vshll.u32 2475754826, %v3342
        %v3349 = vshrl.u32 2131351028, %v3343
        %v3350 = vor.u32 %v3348, %v3349
        %v3351 = vshll.u32 2131351028, %v3342
        %v3352 = vshrl.u32 2102212464, %v3343
        %v3353 = vor.u32 %v3351, %v3352
        %v3354 = vshll.u32 2102212464, %v3342
        %v3355 = vshrl.u32 920167782, %v3343
        %v3356 = vor.u32 %v3354, %v3355
        %v3357 = vshll.u32 920167782, %v3342
        %v3358 = vshrl.u32 1326507024, %v3343
        %v3359 = vor.u32 %v3357, %v3358
        %vm3360 = vcmp.lt.s32.totalorder %v3341, 1
        %vm3361 = vcmp.lt.s32.totalorder %v3341, 2
        %vm3362 = vcmp.lt.s32.totalorder %v3341, 3
        %vm3363 = vcmp.lt.s32.totalorder %v3341, 4
        %v3364 = vsel %vm3360, %v3344, %v3347
        %v3365 = vsel %vm3363, %v3353, 2102212464
        %v3366 = vsel %vm3362, %v3350, %v3365
        %v3367 = vsel %vm3361, %v3364, %v3366
        %v3368 = vsel %vm3360, %v3347, %v3350
        %v3369 = vsel %vm3363, %v3356, 920167782
        %v3370 = vsel %vm3362, %v3353, %v3369
        %v3371 = vsel %vm3361, %v3368, %v3370
        %v3372 = vsel %vm3360, %v3350, %v3353
        %v3373 = vsel %vm3363, %v3359, 1326507024
        %v3374 = vsel %vm3362, %v3356, %v3373
        %v3375 = vsel %vm3361, %v3372, %v3374
        %v3376 = vshll.u32 %v3336, 8
        %v3377 = vmul.u32.u64.compose %v3376, %v3375
        %v3378 = vextract.low.u32 %v3377
        %v3379 = vextract.high.u32 %v3377
        %v3380 = vmul.u32.u64.compose %v3376, %v3371
        %v3381 = vextract.low.u32 %v3380
        %v3382 = vextract.high.u32 %v3380
        %v3383 = vmul.u32 %v3376, %v3367
        %v3384 = vadd.s32 %v3379, %v3381
        %vm3385 = vc.u32 %v3379, %v3381
        %v3386 = vadd.s32 %v3382, 1
        %v3387 = vsel %vm3385, %v3386, %v3382
        %v3388 = vadd.s32 %v3383, %v3387
        %v3389 = vadd.s32 %v3388, 536870912
        %v3390 = vshrl.u32 %v3389, 30
        %v3391 = vshll.u32 %v3390, 30
        %v3392 = vsub.s32 %v3388, %v3391
        %vm3393 = vcmp.lt.s32.totalorder %v3392, 0
        %v3394 = vsub.s32 0, %v3392
        %v3395 = vsel %vm3393, %v3394, %v3392
        %v3396 = vclz %v3395
        %v3397 = vsub.s32 %v3396, 2
        %vm3398 = vcmp.gt.s32.totalorder 0, %v3397
        %v3399 = vsel %vm3398, 0, %v3397
        %v3400 = vsub.s32 32, %v3399
        %v3401 = vshll.u32 %v3392, %v3399
        %v3402 = vshrl.u32 %v3384, %v3400
        %v3403 = vor.u32 %v3401, %v3402
        %v3404 = vsub.s32 4294967266, %v3399
        %v3405 = vadd.s32 %v3404, 127
        %v3406 = vshll.u32 %v3405, 23
        %v3407 = vor.u32 4788187, %v3406
        %v3408 = vand.u32 2147483647, %v3407
        %v3410 = vcvt.s32.f32 %v3403
        %v3411 = vmul.f32 %v3410, %v3408
        %v3412 = vxor.u32 %v3411, 2147483648
        %v3413 = vsel %vm3330, %v3412, %v3411
        %v3414 = vsub.s32 4, %v3390
        %v3415 = vsel %vm3330, %v3414, %v3390
        %v3416 = vsel %vm3329, %v531, %v3413
        %v3417 = vsel %vm3329, 0, %v3415
        %v3418 = vcosq.f32.pop %v3416
        %v3419 = vsinq.f32.pop %v3416
        %vm3420 = vweird.f32 %v531
        %v3421 = vadd.s32 %v3417, 3
        %v3422 = vand.u32 %v3421, 3
        %vm3423 = vcmp.lt.s32.totalorder %v3422, 2
        %vm3424 = vcmp.eq.s32.totalorder %v3422, 0
        %v3425 = vxor.u32 %v3419, 2147483648
        %v3426 = vsel %vm3424, %v3418, %v3425
        %vm3427 = vcmp.eq.s32.totalorder %v3422, 2
        %v3428 = vxor.u32 %v3418, 2147483648
        %v3429 = vsel %vm3427, %v3428, %v3419
        %v3430 = vsel %vm3423, %v3426, %v3429
        %v3431 = vsel %vm3420, nan, %v3430
        %v3432 = vand.u32 2147483647, %v532
        %vm3433 = vcmp.le.f32.partialorder %v3432, 0.7853982
        %vm3434 = vcmp.lt.s32.totalorder %v532, 0
        %v3435 = vand.u32 %v532, 2139095040
        %v3436 = vshrl.u32 %v3435, 23
        %v3437 = vsub.s32 %v3436, 127
        %v3438 = vand.u32 2147483647, %v532
        %v3439 = vand.u32 %v3438, 8388607
        %v3440 = vor.u32 %v3439, 8388608
        %v3441 = vsub.s32 0, %v3440
        %v3442 = vadd.s32 %v3437, 1
        %vm3443 = vcmp.gt.s32.totalorder %v3442, 0
        %v3444 = vsel %vm3443, %v3442, 0
        %v3445 = vshrl.u32 %v3444, 5
        %v3446 = vand.u32 %v3444, 31
        %v3447 = vsub.s32 32, %v3446
        %v3448 = vshrl.u32 683565275, %v3447
        %v3449 = vshll.u32 683565275, %v3446
        %v3450 = vshrl.u32 2475754826, %v3447
        %v3451 = vor.u32 %v3449, %v3450
        %v3452 = vshll.u32 2475754826, %v3446
        %v3453 = vshrl.u32 2131351028, %v3447
        %v3454 = vor.u32 %v3452, %v3453
        %v3455 = vshll.u32 2131351028, %v3446
        %v3456 = vshrl.u32 2102212464, %v3447
        %v3457 = vor.u32 %v3455, %v3456
        %v3458 = vshll.u32 2102212464, %v3446
        %v3459 = vshrl.u32 920167782, %v3447
        %v3460 = vor.u32 %v3458, %v3459
        %v3461 = vshll.u32 920167782, %v3446
        %v3462 = vshrl.u32 1326507024, %v3447
        %v3463 = vor.u32 %v3461, %v3462
        %vm3464 = vcmp.lt.s32.totalorder %v3445, 1
        %vm3465 = vcmp.lt.s32.totalorder %v3445, 2
        %vm3466 = vcmp.lt.s32.totalorder %v3445, 3
        %vm3467 = vcmp.lt.s32.totalorder %v3445, 4
        %v3468 = vsel %vm3464, %v3448, %v3451
        %v3469 = vsel %vm3467, %v3457, 2102212464
        %v3470 = vsel %vm3466, %v3454, %v3469
        %v3471 = vsel %vm3465, %v3468, %v3470
        %v3472 = vsel %vm3464, %v3451, %v3454
        %v3473 = vsel %vm3467, %v3460, 920167782
        %v3474 = vsel %vm3466, %v3457, %v3473
        %v3475 = vsel %vm3465, %v3472, %v3474
        %v3476 = vsel %vm3464, %v3454, %v3457
        %v3477 = vsel %vm3467, %v3463, 1326507024
        %v3478 = vsel %vm3466, %v3460, %v3477
        %v3479 = vsel %vm3465, %v3476, %v3478
        %v3480 = vshll.u32 %v3440, 8
        %v3481 = vmul.u32.u64.compose %v3480, %v3479
        %v3482 = vextract.low.u32 %v3481
        %v3483 = vextract.high.u32 %v3481
        %v3484 = vmul.u32.u64.compose %v3480, %v3475
        %v3485 = vextract.low.u32 %v3484
        %v3486 = vextract.high.u32 %v3484
        %v3487 = vmul.u32 %v3480, %v3471
        %v3488 = vadd.s32 %v3483, %v3485
        %vm3489 = vc.u32 %v3483, %v3485
        %v3490 = vadd.s32 %v3486, 1
        %v3491 = vsel %vm3489, %v3490, %v3486
        %v3492 = vadd.s32 %v3487, %v3491
        %v3493 = vadd.s32 %v3492, 536870912
        %v3494 = vshrl.u32 %v3493, 30
        %v3495 = vshll.u32 %v3494, 30
        %v3496 = vsub.s32 %v3492, %v3495
        %vm3497 = vcmp.lt.s32.totalorder %v3496, 0
        %v3498 = vsub.s32 0, %v3496
        %v3499 = vsel %vm3497, %v3498, %v3496
        %v3500 = vclz %v3499
        %v3501 = vsub.s32 %v3500, 2
        %vm3502 = vcmp.gt.s32.totalorder 0, %v3501
        %v3503 = vsel %vm3502, 0, %v3501
        %v3504 = vsub.s32 32, %v3503
        %v3505 = vshll.u32 %v3496, %v3503
        %v3506 = vshrl.u32 %v3488, %v3504
        %v3507 = vor.u32 %v3505, %v3506
        %v3508 = vsub.s32 4294967266, %v3503
        %v3509 = vadd.s32 %v3508, 127
        %v3510 = vshll.u32 %v3509, 23
        %v3511 = vor.u32 4788187, %v3510
        %v3512 = vand.u32 2147483647, %v3511
        %v3514 = vcvt.s32.f32 %v3507
        %v3515 = vmul.f32 %v3514, %v3512
        %v3516 = vxor.u32 %v3515, 2147483648
        %v3517 = vsel %vm3434, %v3516, %v3515
        %v3518 = vsub.s32 4, %v3494
        %v3519 = vsel %vm3434, %v3518, %v3494
        %v3520 = vsel %vm3433, %v532, %v3517
        %v3521 = vsel %vm3433, 0, %v3519
        %v3522 = vcosq.f32.pop %v3520
        %v3523 = vsinq.f32.pop %v3520
        %vm3524 = vweird.f32 %v532
        %v3525 = vadd.s32 %v3521, 3
        %v3526 = vand.u32 %v3525, 3
        %vm3527 = vcmp.lt.s32.totalorder %v3526, 2
        %vm3528 = vcmp.eq.s32.totalorder %v3526, 0
        %v3529 = vxor.u32 %v3523, 2147483648
        %v3530 = vsel %vm3528, %v3522, %v3529
        %vm3531 = vcmp.eq.s32.totalorder %v3526, 2
        %v3532 = vxor.u32 %v3522, 2147483648
        %v3533 = vsel %vm3531, %v3532, %v3523
        %v3534 = vsel %vm3527, %v3530, %v3533
        %v3535 = vsel %vm3524, nan, %v3534
        %v3536 = vand.u32 2147483647, %v533
        %vm3537 = vcmp.le.f32.partialorder %v3536, 0.7853982
        %vm3538 = vcmp.lt.s32.totalorder %v533, 0
        %v3539 = vand.u32 %v533, 2139095040
        %v3540 = vshrl.u32 %v3539, 23
        %v3541 = vsub.s32 %v3540, 127
        %v3542 = vand.u32 2147483647, %v533
        %v3543 = vand.u32 %v3542, 8388607
        %v3544 = vor.u32 %v3543, 8388608
        %v3545 = vsub.s32 0, %v3544
        %v3546 = vadd.s32 %v3541, 1
        %vm3547 = vcmp.gt.s32.totalorder %v3546, 0
        %v3548 = vsel %vm3547, %v3546, 0
        %v3549 = vshrl.u32 %v3548, 5
        %v3550 = vand.u32 %v3548, 31
        %v3551 = vsub.s32 32, %v3550
        %v3552 = vshrl.u32 683565275, %v3551
        %v3553 = vshll.u32 683565275, %v3550
        %v3554 = vshrl.u32 2475754826, %v3551
        %v3555 = vor.u32 %v3553, %v3554
        %v3556 = vshll.u32 2475754826, %v3550
        %v3557 = vshrl.u32 2131351028, %v3551
        %v3558 = vor.u32 %v3556, %v3557
        %v3559 = vshll.u32 2131351028, %v3550
        %v3560 = vshrl.u32 2102212464, %v3551
        %v3561 = vor.u32 %v3559, %v3560
        %v3562 = vshll.u32 2102212464, %v3550
        %v3563 = vshrl.u32 920167782, %v3551
        %v3564 = vor.u32 %v3562, %v3563
        %v3565 = vshll.u32 920167782, %v3550
        %v3566 = vshrl.u32 1326507024, %v3551
        %v3567 = vor.u32 %v3565, %v3566
        %vm3568 = vcmp.lt.s32.totalorder %v3549, 1
        %vm3569 = vcmp.lt.s32.totalorder %v3549, 2
        %vm3570 = vcmp.lt.s32.totalorder %v3549, 3
        %vm3571 = vcmp.lt.s32.totalorder %v3549, 4
        %v3572 = vsel %vm3568, %v3552, %v3555
        %v3573 = vsel %vm3571, %v3561, 2102212464
        %v3574 = vsel %vm3570, %v3558, %v3573
        %v3575 = vsel %vm3569, %v3572, %v3574
        %v3576 = vsel %vm3568, %v3555, %v3558
        %v3577 = vsel %vm3571, %v3564, 920167782
        %v3578 = vsel %vm3570, %v3561, %v3577
        %v3579 = vsel %vm3569, %v3576, %v3578
        %v3580 = vsel %vm3568, %v3558, %v3561
        %v3581 = vsel %vm3571, %v3567, 1326507024
        %v3582 = vsel %vm3570, %v3564, %v3581
        %v3583 = vsel %vm3569, %v3580, %v3582
        %v3584 = vshll.u32 %v3544, 8
        %v3585 = vmul.u32.u64.compose %v3584, %v3583
        %v3586 = vextract.low.u32 %v3585
        %v3587 = vextract.high.u32 %v3585
        %v3588 = vmul.u32.u64.compose %v3584, %v3579
        %v3589 = vextract.low.u32 %v3588
        %v3590 = vextract.high.u32 %v3588
        %v3591 = vmul.u32 %v3584, %v3575
        %v3592 = vadd.s32 %v3587, %v3589
        %vm3593 = vc.u32 %v3587, %v3589
        %v3594 = vadd.s32 %v3590, 1
        %v3595 = vsel %vm3593, %v3594, %v3590
        %v3596 = vadd.s32 %v3591, %v3595
        %v3597 = vadd.s32 %v3596, 536870912
        %v3598 = vshrl.u32 %v3597, 30
        %v3599 = vshll.u32 %v3598, 30
        %v3600 = vsub.s32 %v3596, %v3599
        %vm3601 = vcmp.lt.s32.totalorder %v3600, 0
        %v3602 = vsub.s32 0, %v3600
        %v3603 = vsel %vm3601, %v3602, %v3600
        %v3604 = vclz %v3603
        %v3605 = vsub.s32 %v3604, 2
        %vm3606 = vcmp.gt.s32.totalorder 0, %v3605
        %v3607 = vsel %vm3606, 0, %v3605
        %v3608 = vsub.s32 32, %v3607
        %v3609 = vshll.u32 %v3600, %v3607
        %v3610 = vshrl.u32 %v3592, %v3608
        %v3611 = vor.u32 %v3609, %v3610
        %v3612 = vsub.s32 4294967266, %v3607
        %v3613 = vadd.s32 %v3612, 127
        %v3614 = vshll.u32 %v3613, 23
        %v3615 = vor.u32 4788187, %v3614
        %v3616 = vand.u32 2147483647, %v3615
        %v3618 = vcvt.s32.f32 %v3611
        %v3619 = vmul.f32 %v3618, %v3616
        %v3620 = vxor.u32 %v3619, 2147483648
        %v3621 = vsel %vm3538, %v3620, %v3619
        %v3622 = vsub.s32 4, %v3598
        %v3623 = vsel %vm3538, %v3622, %v3598
        %v3624 = vsel %vm3537, %v533, %v3621
        %v3625 = vsel %vm3537, 0, %v3623
        %v3626 = vcosq.f32.pop %v3624
        %v3627 = vsinq.f32.pop %v3624
        %vm3628 = vweird.f32 %v533
        %v3629 = vadd.s32 %v3625, 3
        %v3630 = vand.u32 %v3629, 3
        %vm3631 = vcmp.lt.s32.totalorder %v3630, 2
        %vm3632 = vcmp.eq.s32.totalorder %v3630, 0
        %v3633 = vxor.u32 %v3627, 2147483648
        %v3634 = vsel %vm3632, %v3626, %v3633
        %vm3635 = vcmp.eq.s32.totalorder %v3630, 2
        %v3636 = vxor.u32 %v3626, 2147483648
        %v3637 = vsel %vm3635, %v3636, %v3627
        %v3638 = vsel %vm3631, %v3634, %v3637
        %v3639 = vsel %vm3628, nan, %v3638
        %v3640 = vand.u32 2147483647, %v534
        %vm3641 = vcmp.le.f32.partialorder %v3640, 0.7853982
        %vm3642 = vcmp.lt.s32.totalorder %v534, 0
        %v3643 = vand.u32 %v534, 2139095040
        %v3644 = vshrl.u32 %v3643, 23
        %v3645 = vsub.s32 %v3644, 127
        %v3646 = vand.u32 2147483647, %v534
        %v3647 = vand.u32 %v3646, 8388607
        %v3648 = vor.u32 %v3647, 8388608
        %v3649 = vsub.s32 0, %v3648
        %v3650 = vadd.s32 %v3645, 1
        %vm3651 = vcmp.gt.s32.totalorder %v3650, 0
        %v3652 = vsel %vm3651, %v3650, 0
        %v3653 = vshrl.u32 %v3652, 5
        %v3654 = vand.u32 %v3652, 31
        %v3655 = vsub.s32 32, %v3654
        %v3656 = vshrl.u32 683565275, %v3655
        %v3657 = vshll.u32 683565275, %v3654
        %v3658 = vshrl.u32 2475754826, %v3655
        %v3659 = vor.u32 %v3657, %v3658
        %v3660 = vshll.u32 2475754826, %v3654
        %v3661 = vshrl.u32 2131351028, %v3655
        %v3662 = vor.u32 %v3660, %v3661
        %v3663 = vshll.u32 2131351028, %v3654
        %v3664 = vshrl.u32 2102212464, %v3655
        %v3665 = vor.u32 %v3663, %v3664
        %v3666 = vshll.u32 2102212464, %v3654
        %v3667 = vshrl.u32 920167782, %v3655
        %v3668 = vor.u32 %v3666, %v3667
        %v3669 = vshll.u32 920167782, %v3654
        %v3670 = vshrl.u32 1326507024, %v3655
        %v3671 = vor.u32 %v3669, %v3670
        %vm3672 = vcmp.lt.s32.totalorder %v3653, 1
        %vm3673 = vcmp.lt.s32.totalorder %v3653, 2
        %vm3674 = vcmp.lt.s32.totalorder %v3653, 3
        %vm3675 = vcmp.lt.s32.totalorder %v3653, 4
        %v3676 = vsel %vm3672, %v3656, %v3659
        %v3677 = vsel %vm3675, %v3665, 2102212464
        %v3678 = vsel %vm3674, %v3662, %v3677
        %v3679 = vsel %vm3673, %v3676, %v3678
        %v3680 = vsel %vm3672, %v3659, %v3662
        %v3681 = vsel %vm3675, %v3668, 920167782
        %v3682 = vsel %vm3674, %v3665, %v3681
        %v3683 = vsel %vm3673, %v3680, %v3682
        %v3684 = vsel %vm3672, %v3662, %v3665
        %v3685 = vsel %vm3675, %v3671, 1326507024
        %v3686 = vsel %vm3674, %v3668, %v3685
        %v3687 = vsel %vm3673, %v3684, %v3686
        %v3688 = vshll.u32 %v3648, 8
        %v3689 = vmul.u32.u64.compose %v3688, %v3687
        %v3690 = vextract.low.u32 %v3689
        %v3691 = vextract.high.u32 %v3689
        %v3692 = vmul.u32.u64.compose %v3688, %v3683
        %v3693 = vextract.low.u32 %v3692
        %v3694 = vextract.high.u32 %v3692
        %v3695 = vmul.u32 %v3688, %v3679
        %v3696 = vadd.s32 %v3691, %v3693
        %vm3697 = vc.u32 %v3691, %v3693
        %v3698 = vadd.s32 %v3694, 1
        %v3699 = vsel %vm3697, %v3698, %v3694
        %v3700 = vadd.s32 %v3695, %v3699
        %v3701 = vadd.s32 %v3700, 536870912
        %v3702 = vshrl.u32 %v3701, 30
        %v3703 = vshll.u32 %v3702, 30
        %v3704 = vsub.s32 %v3700, %v3703
        %vm3705 = vcmp.lt.s32.totalorder %v3704, 0
        %v3706 = vsub.s32 0, %v3704
        %v3707 = vsel %vm3705, %v3706, %v3704
        %v3708 = vclz %v3707
        %v3709 = vsub.s32 %v3708, 2
        %vm3710 = vcmp.gt.s32.totalorder 0, %v3709
        %v3711 = vsel %vm3710, 0, %v3709
        %v3712 = vsub.s32 32, %v3711
        %v3713 = vshll.u32 %v3704, %v3711
        %v3714 = vshrl.u32 %v3696, %v3712
        %v3715 = vor.u32 %v3713, %v3714
        %v3716 = vsub.s32 4294967266, %v3711
        %v3717 = vadd.s32 %v3716, 127
        %v3718 = vshll.u32 %v3717, 23
        %v3719 = vor.u32 4788187, %v3718
        %v3720 = vand.u32 2147483647, %v3719
        %v3722 = vcvt.s32.f32 %v3715
        %v3723 = vmul.f32 %v3722, %v3720
        %v3724 = vxor.u32 %v3723, 2147483648
        %v3725 = vsel %vm3642, %v3724, %v3723
        %v3726 = vsub.s32 4, %v3702
        %v3727 = vsel %vm3642, %v3726, %v3702
        %v3728 = vsel %vm3641, %v534, %v3725
        %v3729 = vsel %vm3641, 0, %v3727
        %v3730 = vcosq.f32.pop %v3728
        %v3731 = vsinq.f32.pop %v3728
        %vm3732 = vweird.f32 %v534
        %v3733 = vadd.s32 %v3729, 3
        %v3734 = vand.u32 %v3733, 3
        %vm3735 = vcmp.lt.s32.totalorder %v3734, 2
        %vm3736 = vcmp.eq.s32.totalorder %v3734, 0
        %v3737 = vxor.u32 %v3731, 2147483648
        %v3738 = vsel %vm3736, %v3730, %v3737
        %vm3739 = vcmp.eq.s32.totalorder %v3734, 2
        %v3740 = vxor.u32 %v3730, 2147483648
        %v3741 = vsel %vm3739, %v3740, %v3731
        %v3742 = vsel %vm3735, %v3738, %v3741
        %v3743 = vsel %vm3732, nan, %v3742
        %v3744 = vand.u32 2147483647, %v535
        %vm3745 = vcmp.le.f32.partialorder %v3744, 0.7853982
        %vm3746 = vcmp.lt.s32.totalorder %v535, 0
        %v3747 = vand.u32 %v535, 2139095040
        %v3748 = vshrl.u32 %v3747, 23
        %v3749 = vsub.s32 %v3748, 127
        %v3750 = vand.u32 2147483647, %v535
        %v3751 = vand.u32 %v3750, 8388607
        %v3752 = vor.u32 %v3751, 8388608
        %v3753 = vsub.s32 0, %v3752
        %v3754 = vadd.s32 %v3749, 1
        %vm3755 = vcmp.gt.s32.totalorder %v3754, 0
        %v3756 = vsel %vm3755, %v3754, 0
        %v3757 = vshrl.u32 %v3756, 5
        %v3758 = vand.u32 %v3756, 31
        %v3759 = vsub.s32 32, %v3758
        %v3760 = vshrl.u32 683565275, %v3759
        %v3761 = vshll.u32 683565275, %v3758
        %v3762 = vshrl.u32 2475754826, %v3759
        %v3763 = vor.u32 %v3761, %v3762
        %v3764 = vshll.u32 2475754826, %v3758
        %v3765 = vshrl.u32 2131351028, %v3759
        %v3766 = vor.u32 %v3764, %v3765
        %v3767 = vshll.u32 2131351028, %v3758
        %v3768 = vshrl.u32 2102212464, %v3759
        %v3769 = vor.u32 %v3767, %v3768
        %v3770 = vshll.u32 2102212464, %v3758
        %v3771 = vshrl.u32 920167782, %v3759
        %v3772 = vor.u32 %v3770, %v3771
        %v3773 = vshll.u32 920167782, %v3758
        %v3774 = vshrl.u32 1326507024, %v3759
        %v3775 = vor.u32 %v3773, %v3774
        %vm3776 = vcmp.lt.s32.totalorder %v3757, 1
        %vm3777 = vcmp.lt.s32.totalorder %v3757, 2
        %vm3778 = vcmp.lt.s32.totalorder %v3757, 3
        %vm3779 = vcmp.lt.s32.totalorder %v3757, 4
        %v3780 = vsel %vm3776, %v3760, %v3763
        %v3781 = vsel %vm3779, %v3769, 2102212464
        %v3782 = vsel %vm3778, %v3766, %v3781
        %v3783 = vsel %vm3777, %v3780, %v3782
        %v3784 = vsel %vm3776, %v3763, %v3766
        %v3785 = vsel %vm3779, %v3772, 920167782
        %v3786 = vsel %vm3778, %v3769, %v3785
        %v3787 = vsel %vm3777, %v3784, %v3786
        %v3788 = vsel %vm3776, %v3766, %v3769
        %v3789 = vsel %vm3779, %v3775, 1326507024
        %v3790 = vsel %vm3778, %v3772, %v3789
        %v3791 = vsel %vm3777, %v3788, %v3790
        %v3792 = vshll.u32 %v3752, 8
        %v3793 = vmul.u32.u64.compose %v3792, %v3791
        %v3794 = vextract.low.u32 %v3793
        %v3795 = vextract.high.u32 %v3793
        %v3796 = vmul.u32.u64.compose %v3792, %v3787
        %v3797 = vextract.low.u32 %v3796
        %v3798 = vextract.high.u32 %v3796
        %v3799 = vmul.u32 %v3792, %v3783
        %v3800 = vadd.s32 %v3795, %v3797
        %vm3801 = vc.u32 %v3795, %v3797
        %v3802 = vadd.s32 %v3798, 1
        %v3803 = vsel %vm3801, %v3802, %v3798
        %v3804 = vadd.s32 %v3799, %v3803
        %v3805 = vadd.s32 %v3804, 536870912
        %v3806 = vshrl.u32 %v3805, 30
        %v3807 = vshll.u32 %v3806, 30
        %v3808 = vsub.s32 %v3804, %v3807
        %vm3809 = vcmp.lt.s32.totalorder %v3808, 0
        %v3810 = vsub.s32 0, %v3808
        %v3811 = vsel %vm3809, %v3810, %v3808
        %v3812 = vclz %v3811
        %v3813 = vsub.s32 %v3812, 2
        %vm3814 = vcmp.gt.s32.totalorder 0, %v3813
        %v3815 = vsel %vm3814, 0, %v3813
        %v3816 = vsub.s32 32, %v3815
        %v3817 = vshll.u32 %v3808, %v3815
        %v3818 = vshrl.u32 %v3800, %v3816
        %v3819 = vor.u32 %v3817, %v3818
        %v3820 = vsub.s32 4294967266, %v3815
        %v3821 = vadd.s32 %v3820, 127
        %v3822 = vshll.u32 %v3821, 23
        %v3823 = vor.u32 4788187, %v3822
        %v3824 = vand.u32 2147483647, %v3823
        %v3826 = vcvt.s32.f32 %v3819
        %v3827 = vmul.f32 %v3826, %v3824
        %v3828 = vxor.u32 %v3827, 2147483648
        %v3829 = vsel %vm3746, %v3828, %v3827
        %v3830 = vsub.s32 4, %v3806
        %v3831 = vsel %vm3746, %v3830, %v3806
        %v3832 = vsel %vm3745, %v535, %v3829
        %v3833 = vsel %vm3745, 0, %v3831
        %v3834 = vcosq.f32.pop %v3832
        %v3835 = vsinq.f32.pop %v3832
        %vm3836 = vweird.f32 %v535
        %v3837 = vadd.s32 %v3833, 3
        %v3838 = vand.u32 %v3837, 3
        %vm3839 = vcmp.lt.s32.totalorder %v3838, 2
        %vm3840 = vcmp.eq.s32.totalorder %v3838, 0
        %v3841 = vxor.u32 %v3835, 2147483648
        %v3842 = vsel %vm3840, %v3834, %v3841
        %vm3843 = vcmp.eq.s32.totalorder %v3838, 2
        %v3844 = vxor.u32 %v3834, 2147483648
        %v3845 = vsel %vm3843, %v3844, %v3835
        %v3846 = vsel %vm3839, %v3842, %v3845
        %v3847 = vsel %vm3836, nan, %v3846
        %v3848 = vld [vmem:[%s362] sm:$0xff]
        %v3849 = vld [vmem:[%s362 + $0x8] sm:$0xff]
        %v3850 = vld [vmem:[%s362 + $0x10] sm:$0xff]
        %v3851 = vld [vmem:[%s362 + $0x18] sm:$0xff]
        %v3852 = vld [vmem:[%s362 + $0x20] sm:$0xff]
        %v3853 = vld [vmem:[%s362 + $0x28] sm:$0xff]
        %v3854 = vld [vmem:[%s362 + $0x30] sm:$0xff]
        %v3855 = vld [vmem:[%s362 + $0x38] sm:$0xff]
        %v3856 = vld [vmem:[%s362 + $0x40] sm:$0xff]
        %v3857 = vld [vmem:[%s362 + $0x48] sm:$0xff]
        %v3858 = vld [vmem:[%s362 + $0x50] sm:$0xff]
        %v3859 = vld [vmem:[%s362 + $0x58] sm:$0xff]
        %v3860 = vld [vmem:[%s362 + $0x60] sm:$0xff]
        %v3861 = vld [vmem:[%s362 + $0x68] sm:$0xff]
        %v3862 = vld [vmem:[%s362 + $0x70] sm:$0xff]
        %v3863 = vld [vmem:[%s362 + $0x78] sm:$0xff]
        %v3864 = vld [vmem:[%s371] sm:$0xff]
        %v3865 = vld [vmem:[%s371 + $0x8] sm:$0xff]
        %v3866 = vld [vmem:[%s371 + $0x10] sm:$0xff]
        %v3867 = vld [vmem:[%s371 + $0x18] sm:$0xff]
        %v3868 = vld [vmem:[%s371 + $0x20] sm:$0xff]
        %v3869 = vld [vmem:[%s371 + $0x28] sm:$0xff]
        %v3870 = vld [vmem:[%s371 + $0x30] sm:$0xff]
        %v3871 = vld [vmem:[%s371 + $0x38] sm:$0xff]
        %v3872 = vld [vmem:[%s371 + $0x40] sm:$0xff]
        %v3873 = vld [vmem:[%s371 + $0x48] sm:$0xff]
        %v3874 = vld [vmem:[%s371 + $0x50] sm:$0xff]
        %v3875 = vld [vmem:[%s371 + $0x58] sm:$0xff]
        %v3876 = vld [vmem:[%s371 + $0x60] sm:$0xff]
        %v3877 = vld [vmem:[%s371 + $0x68] sm:$0xff]
        %v3878 = vld [vmem:[%s371 + $0x70] sm:$0xff]
        %v3879 = vld [vmem:[%s371 + $0x78] sm:$0xff]
        %v3880 = vmul.f32 %v3848, %v638
        %v3881 = vmul.f32 %v3849, %v741
        %v3882 = vmul.f32 %v3850, %v844
        %v3883 = vmul.f32 %v3851, %v947
        %v3884 = vmul.f32 %v3852, %v1050
        %v3885 = vmul.f32 %v3853, %v1153
        %v3886 = vmul.f32 %v3854, %v1256
        %v3887 = vmul.f32 %v3855, %v1359
        %v3888 = vmul.f32 %v3856, %v1462
        %v3889 = vmul.f32 %v3857, %v1565
        %v3890 = vmul.f32 %v3858, %v1668
        %v3891 = vmul.f32 %v3859, %v1771
        %v3892 = vmul.f32 %v3860, %v1874
        %v3893 = vmul.f32 %v3861, %v1977
        %v3894 = vmul.f32 %v3862, %v2080
        %v3895 = vmul.f32 %v3863, %v2183
        %v3896 = vmul.f32 %v3864, %v2287
        %v3897 = vmul.f32 %v3865, %v2391
        %v3898 = vmul.f32 %v3866, %v2495
        %v3899 = vmul.f32 %v3867, %v2599
        %v3900 = vmul.f32 %v3868, %v2703
        %v3901 = vmul.f32 %v3869, %v2807
        %v3902 = vmul.f32 %v3870, %v2911
        %v3903 = vmul.f32 %v3871, %v3015
        %v3904 = vmul.f32 %v3872, %v3119
        %v3905 = vmul.f32 %v3873, %v3223
        %v3906 = vmul.f32 %v3874, %v3327
        %v3907 = vmul.f32 %v3875, %v3431
        %v3908 = vmul.f32 %v3876, %v3535
        %v3909 = vmul.f32 %v3877, %v3639
        %v3910 = vmul.f32 %v3878, %v3743
        %v3911 = vmul.f32 %v3879, %v3847
        %v3912 = vsub.f32 %v3880, %v3896
        %v3913 = vsub.f32 %v3881, %v3897
        %v3914 = vsub.f32 %v3882, %v3898
        %v3915 = vsub.f32 %v3883, %v3899
        %v3916 = vsub.f32 %v3884, %v3900
        %v3917 = vsub.f32 %v3885, %v3901
        %v3918 = vsub.f32 %v3886, %v3902
        %v3919 = vsub.f32 %v3887, %v3903
        %v3920 = vsub.f32 %v3888, %v3904
        %v3921 = vsub.f32 %v3889, %v3905
        %v3922 = vsub.f32 %v3890, %v3906
        %v3923 = vsub.f32 %v3891, %v3907
        %v3924 = vsub.f32 %v3892, %v3908
        %v3925 = vsub.f32 %v3893, %v3909
        %v3926 = vsub.f32 %v3894, %v3910
        %v3927 = vsub.f32 %v3895, %v3911
        %v3928 = vmul.f32 %v3848, %v2287
        %v3929 = vmul.f32 %v3849, %v2391
        %v3930 = vmul.f32 %v3850, %v2495
        %v3931 = vmul.f32 %v3851, %v2599
        %v3932 = vmul.f32 %v3852, %v2703
        %v3933 = vmul.f32 %v3853, %v2807
        %v3934 = vmul.f32 %v3854, %v2911
        %v3935 = vmul.f32 %v3855, %v3015
        %v3936 = vmul.f32 %v3856, %v3119
        %v3937 = vmul.f32 %v3857, %v3223
        %v3938 = vmul.f32 %v3858, %v3327
        %v3939 = vmul.f32 %v3859, %v3431
        %v3940 = vmul.f32 %v3860, %v3535
        %v3941 = vmul.f32 %v3861, %v3639
        %v3942 = vmul.f32 %v3862, %v3743
        %v3943 = vmul.f32 %v3863, %v3847
        %v3944 = vmul.f32 %v3864, %v638
        %v3945 = vmul.f32 %v3865, %v741
        %v3946 = vmul.f32 %v3866, %v844
        %v3947 = vmul.f32 %v3867, %v947
        %v3948 = vmul.f32 %v3868, %v1050
        %v3949 = vmul.f32 %v3869, %v1153
        %v3950 = vmul.f32 %v3870, %v1256
        %v3951 = vmul.f32 %v3871, %v1359
        %v3952 = vmul.f32 %v3872, %v1462
        %v3953 = vmul.f32 %v3873, %v1565
        %v3954 = vmul.f32 %v3874, %v1668
        %v3955 = vmul.f32 %v3875, %v1771
        %v3956 = vmul.f32 %v3876, %v1874
        %v3957 = vmul.f32 %v3877, %v1977
        %v3958 = vmul.f32 %v3878, %v2080
        %v3959 = vmul.f32 %v3879, %v2183
        %v3960 = vadd.f32 %v3928, %v3944
        %v3961 = vadd.f32 %v3929, %v3945
        %v3962 = vadd.f32 %v3930, %v3946
        %v3963 = vadd.f32 %v3931, %v3947
        %v3964 = vadd.f32 %v3932, %v3948
        %v3965 = vadd.f32 %v3933, %v3949
        %v3966 = vadd.f32 %v3934, %v3950
        %v3967 = vadd.f32 %v3935, %v3951
        %v3968 = vadd.f32 %v3936, %v3952
        %v3969 = vadd.f32 %v3937, %v3953
        %v3970 = vadd.f32 %v3938, %v3954
        %v3971 = vadd.f32 %v3939, %v3955
        %v3972 = vadd.f32 %v3940, %v3956
        %v3973 = vadd.f32 %v3941, %v3957
        %v3974 = vadd.f32 %v3942, %v3958
        %v3975 = vadd.f32 %v3943, %v3959
        %v3976 = vpack.c.bf16 %v3913, %v3912
        %v3977 = vpack.c.bf16 %v3915, %v3914
        %v3978 = vpack.c.bf16 %v3917, %v3916
        %v3979 = vpack.c.bf16 %v3919, %v3918
        %v3980 = vpack.c.bf16 %v3921, %v3920
        %v3981 = vpack.c.bf16 %v3923, %v3922
        %v3982 = vpack.c.bf16 %v3925, %v3924
        %v3983 = vpack.c.bf16 %v3927, %v3926
        %v3984 = vpack.c.bf16 %v3961, %v3960
        %v3985 = vpack.c.bf16 %v3963, %v3962
        %v3986 = vpack.c.bf16 %v3965, %v3964
        %v3987 = vpack.c.bf16 %v3967, %v3966
        %v3988 = vpack.c.bf16 %v3969, %v3968
        %v3989 = vpack.c.bf16 %v3971, %v3970
        %v3990 = vpack.c.bf16 %v3973, %v3972
        %v3991 = vpack.c.bf16 %v3975, %v3974
        %v3992 = vadd.f32 %v3912, %v3960
        %v3993 = vadd.f32 %v3913, %v3961
        %v3994 = vadd.f32 %v3914, %v3962
        %v3995 = vadd.f32 %v3915, %v3963
        %v3996 = vadd.f32 %v3916, %v3964
        %v3997 = vadd.f32 %v3917, %v3965
        %v3998 = vadd.f32 %v3918, %v3966
        %v3999 = vadd.f32 %v3919, %v3967
        %v4000 = vadd.f32 %v3920, %v3968
        %v4001 = vadd.f32 %v3921, %v3969
        %v4002 = vadd.f32 %v3922, %v3970
        %v4003 = vadd.f32 %v3923, %v3971
        %v4004 = vadd.f32 %v3924, %v3972
        %v4005 = vadd.f32 %v3925, %v3973
        %v4006 = vadd.f32 %v3926, %v3974
        %v4007 = vadd.f32 %v3927, %v3975
        %v4008 = vpack.c.bf16 %v3993, %v3992
        %v4009 = vpack.c.bf16 %v3995, %v3994
        %v4010 = vpack.c.bf16 %v3997, %v3996
        %v4011 = vpack.c.bf16 %v3999, %v3998
        %v4012 = vpack.c.bf16 %v4001, %v4000
        %v4013 = vpack.c.bf16 %v4003, %v4002
        %v4014 = vpack.c.bf16 %v4005, %v4004
        %v4015 = vpack.c.bf16 %v4007, %v4006
        %v4016 = vld [vmem:[#allocation8] sm:$0xf]
        %v4017 = vld [vmem:[#allocation8 + $0x4] sm:$0xf]
        %v4018 = vld [vmem:[#allocation8 + $0x8] sm:$0xf]
        %v4019 = vld [vmem:[#allocation8 + $0xc] sm:$0xf]
        %v4020 = vld [vmem:[#allocation8 + $0x10] sm:$0xf]
        %v4021 = vld [vmem:[#allocation8 + $0x14] sm:$0xf]
        %v4022 = vld [vmem:[#allocation8 + $0x18] sm:$0xf]
        %v4023 = vld [vmem:[#allocation8 + $0x1c] sm:$0xf]
        %v4024 = vld [vmem:[#allocation8 + $0x20] sm:$0xf]
        %v4025 = vld [vmem:[#allocation8 + $0x24] sm:$0xf]
        %v4026 = vld [vmem:[#allocation8 + $0x28] sm:$0xf]
        %v4027 = vld [vmem:[#allocation8 + $0x2c] sm:$0xf]
        %v4028 = vld [vmem:[#allocation8 + $0x30] sm:$0xf]
        %v4029 = vld [vmem:[#allocation8 + $0x34] sm:$0xf]
        %v4030 = vld [vmem:[#allocation8 + $0x38] sm:$0xf]
        %v4031 = vld [vmem:[#allocation8 + $0x3c] sm:$0xf]
        %v4032 = vld [vmem:[#allocation10] sm:$0xf]
        %v4033 = vld [vmem:[#allocation10 + $0x4] sm:$0xf]
        %v4034 = vld [vmem:[#allocation10 + $0x8] sm:$0xf]
        %v4035 = vld [vmem:[#allocation10 + $0xc] sm:$0xf]
        %v4036 = vld [vmem:[#allocation10 + $0x10] sm:$0xf]
        %v4037 = vld [vmem:[#allocation10 + $0x14] sm:$0xf]
        %v4038 = vld [vmem:[#allocation10 + $0x18] sm:$0xf]
        %v4039 = vld [vmem:[#allocation10 + $0x1c] sm:$0xf]
        %v4040 = vld [vmem:[#allocation10 + $0x20] sm:$0xf]
        %v4041 = vld [vmem:[#allocation10 + $0x24] sm:$0xf]
        %v4042 = vld [vmem:[#allocation10 + $0x28] sm:$0xf]
        %v4043 = vld [vmem:[#allocation10 + $0x2c] sm:$0xf]
        %v4044 = vld [vmem:[#allocation10 + $0x30] sm:$0xf]
        %v4045 = vld [vmem:[#allocation10 + $0x34] sm:$0xf]
        %v4046 = vld [vmem:[#allocation10 + $0x38] sm:$0xf]
        %v4047 = vld [vmem:[#allocation10 + $0x3c] sm:$0xf]
        %v4048 = vld [vmem:[#allocation11] sm:$0xf]
        %v4049 = vld [vmem:[#allocation11 + $0x4] sm:$0xf]
        %v4050 = vld [vmem:[#allocation11 + $0x8] sm:$0xf]
        %v4051 = vld [vmem:[#allocation11 + $0xc] sm:$0xf]
        %v4052 = vld [vmem:[#allocation11 + $0x10] sm:$0xf]
        %v4053 = vld [vmem:[#allocation11 + $0x14] sm:$0xf]
        %v4054 = vld [vmem:[#allocation11 + $0x18] sm:$0xf]
        %v4055 = vld [vmem:[#allocation11 + $0x1c] sm:$0xf]
        %v4056 = vld [vmem:[#allocation11 + $0x20] sm:$0xf]
        %v4057 = vld [vmem:[#allocation11 + $0x24] sm:$0xf]
        %v4058 = vld [vmem:[#allocation11 + $0x28] sm:$0xf]
        %v4059 = vld [vmem:[#allocation11 + $0x2c] sm:$0xf]
        %v4060 = vld [vmem:[#allocation11 + $0x30] sm:$0xf]
        %v4061 = vld [vmem:[#allocation11 + $0x34] sm:$0xf]
        %v4062 = vld [vmem:[#allocation11 + $0x38] sm:$0xf]
        %v4063 = vld [vmem:[#allocation11 + $0x3c] sm:$0xf]
        %v4080 = vunpack.c.l.b16 %v4016
        %v4081 = vunpack.c.l.b16 %v4017
        %v4082 = vunpack.c.l.b16 %v4018
        %v4083 = vunpack.c.l.b16 %v4019
        %v4084 = vunpack.c.l.b16 %v4020
        %v4085 = vunpack.c.l.b16 %v4021
        %v4086 = vunpack.c.l.b16 %v4022
        %v4087 = vunpack.c.l.b16 %v4023
        %v4088 = vunpack.c.l.b16 %v4024
        %v4089 = vunpack.c.l.b16 %v4025
        %v4090 = vunpack.c.l.b16 %v4026
        %v4091 = vunpack.c.l.b16 %v4027
        %v4092 = vunpack.c.l.b16 %v4028
        %v4093 = vunpack.c.l.b16 %v4029
        %v4094 = vunpack.c.l.b16 %v4030
        %v4095 = vunpack.c.l.b16 %v4031
        %v4096 = vpack.c.b16 %v4081, %v4080
        %v4097 = vpack.c.b16 %v4083, %v4082
        %v4098 = vpack.c.b16 %v4085, %v4084
        %v4099 = vpack.c.b16 %v4087, %v4086
        %v4100 = vpack.c.b16 %v4089, %v4088
        %v4101 = vpack.c.b16 %v4091, %v4090
        %v4102 = vpack.c.b16 %v4093, %v4092
        %v4103 = vpack.c.b16 %v4095, %v4094
        %4112 = vmatprep.subr.bf16.mxu0 0
        %4113 = vmatpush1.bf16.msra.mxu0 %v3976
        %4114 = vmatprep.subr.bf16.mxu0 0
        %4115 = vmatpush1.bf16.msra.mxu0 %v3977
        %4116 = vmatprep.subr.bf16.mxu0 0
        %4117 = vmatpush1.bf16.msra.mxu0 %v3978
        %4118 = vmatprep.subr.bf16.mxu0 0
        %4119 = vmatpush1.bf16.msra.mxu0 %v3979
        %4120 = vmatprep.subr.bf16.mxu0 0
        %4121 = vmatpush1.bf16.msra.mxu0 %v3980
        %4122 = vmatprep.subr.bf16.mxu0 0
        %4123 = vmatpush1.bf16.msra.mxu0 %v3981
        %4124 = vmatprep.subr.bf16.mxu0 0
        %4125 = vmatpush1.bf16.msra.mxu0 %v3982
        %4126 = vmatprep.subr.bf16.mxu0 0
        %4127 = vmatpush1.bf16.msra.mxu0 %v3983
        %4128 = vmatprep.subr.bf16.mxu0 0
        %4129 = vmatpush1.bf16.msra.mxu0 0
        %4130 = vmatprep.subr.bf16.mxu0 0
        %4131 = vmatpush1.bf16.msra.mxu0 0
        %4132 = vmatprep.subr.bf16.mxu0 0
        %4133 = vmatpush1.bf16.msra.mxu0 0
        %4134 = vmatprep.subr.bf16.mxu0 0
        %4135 = vmatpush1.bf16.msra.mxu0 0
        %4136 = vmatprep.subr.bf16.mxu0 0
        %4137 = vmatpush1.bf16.msra.mxu0 0
        %4138 = vmatprep.subr.bf16.mxu0 0
        %4139 = vmatpush1.bf16.msra.mxu0 0
        %4140 = vmatprep.subr.bf16.mxu0 0
        %4141 = vmatpush1.bf16.msra.mxu0 0
        %4142 = vmatprep.subr.bf16.mxu0 0
        %4143 = vmatpush1.bf16.msra.mxu0 0
        %4144 = vmatprep.mubr.bf16.mxu0 0
        %4145 = vmatmul.mubr.bf16.gmra.mrb[0].mxu0 %v4096
        %v4146 = vpop.f32.mrb[0].mxu0
        %v4147 = vadd.f32 0.0, %v4146
        %v4148 = vpop.f32.mrb[0].mxu0
        %v4149 = vpop.f32.mrb[0].mxu0
        %v4150 = vadd.f32 0.0, %v4149
        %v4151 = vpop.f32.mrb[0].mxu0
        %4152 = vmatprep.mubr.bf16.mxu0 0
        %4153 = vmatmul.mubr.bf16.gmra.mrb[0].mxu0 %v4097
        %v4154 = vpop.f32.mrb[0].mxu0
        %v4155 = vadd.f32 0.0, %v4154
        %v4156 = vpop.f32.mrb[0].mxu0
        %v4157 = vpop.f32.mrb[0].mxu0
        %v4158 = vadd.f32 0.0, %v4157
        %v4159 = vpop.f32.mrb[0].mxu0
        %4160 = vmatprep.mubr.bf16.mxu0 0
        %4161 = vmatmul.mubr.bf16.gmra.mrb[0].mxu0 %v4098
        %v4162 = vpop.f32.mrb[0].mxu0
        %v4163 = vadd.f32 0.0, %v4162
        %v4164 = vpop.f32.mrb[0].mxu0
        %v4165 = vpop.f32.mrb[0].mxu0
        %v4166 = vadd.f32 0.0, %v4165
        %v4167 = vpop.f32.mrb[0].mxu0
        %4168 = vmatprep.mubr.bf16.mxu0 0
        %4169 = vmatmul.mubr.bf16.gmra.mrb[0].mxu0 %v4099
        %v4170 = vpop.f32.mrb[0].mxu0
        %v4171 = vadd.f32 0.0, %v4170
        %v4172 = vpop.f32.mrb[0].mxu0
        %v4173 = vpop.f32.mrb[0].mxu0
        %v4174 = vadd.f32 0.0, %v4173
        %v4175 = vpop.f32.mrb[0].mxu0
        %4176 = vmatprep.mubr.bf16.mxu0 0
        %4177 = vmatmul.mubr.bf16.gmra.mrb[0].mxu0 %v4100
        %v4178 = vpop.f32.mrb[0].mxu0
        %v4179 = vadd.f32 0.0, %v4178
        %v4180 = vpop.f32.mrb[0].mxu0
        %v4181 = vpop.f32.mrb[0].mxu0
        %v4182 = vadd.f32 0.0, %v4181
        %v4183 = vpop.f32.mrb[0].mxu0
        %4184 = vmatprep.mubr.bf16.mxu0 0
        %4185 = vmatmul.mubr.bf16.gmra.mrb[0].mxu0 %v4101
        %v4186 = vpop.f32.mrb[0].mxu0
        %v4187 = vadd.f32 0.0, %v4186
        %v4188 = vpop.f32.mrb[0].mxu0
        %v4189 = vpop.f32.mrb[0].mxu0
        %v4190 = vadd.f32 0.0, %v4189
        %v4191 = vpop.f32.mrb[0].mxu0
        %4192 = vmatprep.mubr.bf16.mxu0 0
        %4193 = vmatmul.mubr.bf16.gmra.mrb[0].mxu0 %v4102
        %v4194 = vpop.f32.mrb[0].mxu0
        %v4195 = vadd.f32 0.0, %v4194
        %v4196 = vpop.f32.mrb[0].mxu0
        %v4197 = vpop.f32.mrb[0].mxu0
        %v4198 = vadd.f32 0.0, %v4197
        %v4199 = vpop.f32.mrb[0].mxu0
        %4200 = vmatprep.mubr.bf16.mxu0 0
        %4201 = vmatmul.mubr.bf16.gmra.mrb[0].mxu0 %v4103
        %v4202 = vpop.f32.mrb[0].mxu0
        %v4203 = vadd.f32 0.0, %v4202
        %v4204 = vpop.f32.mrb[0].mxu0
        %v4205 = vpop.f32.mrb[0].mxu0
        %v4206 = vadd.f32 0.0, %v4205
        %v4207 = vpop.f32.mrb[0].mxu0
        %4208 = vdwg.mxu0
        %v4225 = vunpack.c.l.b16 %v4032
        %v4226 = vunpack.c.l.b16 %v4033
        %v4227 = vunpack.c.l.b16 %v4034
        %v4228 = vunpack.c.l.b16 %v4035
        %v4229 = vunpack.c.l.b16 %v4036
        %v4230 = vunpack.c.l.b16 %v4037
        %v4231 = vunpack.c.l.b16 %v4038
        %v4232 = vunpack.c.l.b16 %v4039
        %v4233 = vunpack.c.l.b16 %v4040
        %v4234 = vunpack.c.l.b16 %v4041
        %v4235 = vunpack.c.l.b16 %v4042
        %v4236 = vunpack.c.l.b16 %v4043
        %v4237 = vunpack.c.l.b16 %v4044
        %v4238 = vunpack.c.l.b16 %v4045
        %v4239 = vunpack.c.l.b16 %v4046
        %v4240 = vunpack.c.l.b16 %v4047
        %v4241 = vpack.c.b16 %v4226, %v4225
        %v4242 = vpack.c.b16 %v4228, %v4227
        %v4243 = vpack.c.b16 %v4230, %v4229
        %v4244 = vpack.c.b16 %v4232, %v4231
        %v4245 = vpack.c.b16 %v4234, %v4233
        %v4246 = vpack.c.b16 %v4236, %v4235
        %v4247 = vpack.c.b16 %v4238, %v4237
        %v4248 = vpack.c.b16 %v4240, %v4239
        %4257 = vmatprep.subr.bf16.mxu0 0
        %4258 = vmatpush1.bf16.msra.mxu0 %v3984
        %4259 = vmatprep.subr.bf16.mxu0 0
        %4260 = vmatpush1.bf16.msra.mxu0 %v3985
        %4261 = vmatprep.subr.bf16.mxu0 0
        %4262 = vmatpush1.bf16.msra.mxu0 %v3986
        %4263 = vmatprep.subr.bf16.mxu0 0
        %4264 = vmatpush1.bf16.msra.mxu0 %v3987
        %4265 = vmatprep.subr.bf16.mxu0 0
        %4266 = vmatpush1.bf16.msra.mxu0 %v3988
        %4267 = vmatprep.subr.bf16.mxu0 0
        %4268 = vmatpush1.bf16.msra.mxu0 %v3989
        %4269 = vmatprep.subr.bf16.mxu0 0
        %4270 = vmatpush1.bf16.msra.mxu0 %v3990
        %4271 = vmatprep.subr.bf16.mxu0 0
        %4272 = vmatpush1.bf16.msra.mxu0 %v3991
        %4273 = vmatprep.subr.bf16.mxu0 0
        %4274 = vmatpush1.bf16.msra.mxu0 0
        %4275 = vmatprep.subr.bf16.mxu0 0
        %4276 = vmatpush1.bf16.msra.mxu0 0
        %4277 = vmatprep.subr.bf16.mxu0 0
        %4278 = vmatpush1.bf16.msra.mxu0 0
        %4279 = vmatprep.subr.bf16.mxu0 0
        %4280 = vmatpush1.bf16.msra.mxu0 0
        %4281 = vmatprep.subr.bf16.mxu0 0
        %4282 = vmatpush1.bf16.msra.mxu0 0
        %4283 = vmatprep.subr.bf16.mxu0 0
        %4284 = vmatpush1.bf16.msra.mxu0 0
        %4285 = vmatprep.subr.bf16.mxu0 0
        %4286 = vmatpush1.bf16.msra.mxu0 0
        %4287 = vmatprep.subr.bf16.mxu0 0
        %4288 = vmatpush1.bf16.msra.mxu0 0
        %4289 = vmatprep.mubr.bf16.mxu0 0
        %4290 = vmatmul.mubr.bf16.gmra.mrb[0].mxu0 %v4241
        %v4291 = vpop.f32.mrb[0].mxu0
        %v4292 = vadd.f32 0.0, %v4291
        %v4293 = vpop.f32.mrb[0].mxu0
        %v4294 = vpop.f32.mrb[0].mxu0
        %v4295 = vadd.f32 0.0, %v4294
        %v4296 = vpop.f32.mrb[0].mxu0
        %4297 = vmatprep.mubr.bf16.mxu0 0
        %4298 = vmatmul.mubr.bf16.gmra.mrb[0].mxu0 %v4242
        %v4299 = vpop.f32.mrb[0].mxu0
        %v4300 = vadd.f32 0.0, %v4299
        %v4301 = vpop.f32.mrb[0].mxu0
        %v4302 = vpop.f32.mrb[0].mxu0
        %v4303 = vadd.f32 0.0, %v4302
        %v4304 = vpop.f32.mrb[0].mxu0
        %4305 = vmatprep.mubr.bf16.mxu0 0
        %4306 = vmatmul.mubr.bf16.gmra.mrb[0].mxu0 %v4243
        %v4307 = vpop.f32.mrb[0].mxu0
        %v4308 = vadd.f32 0.0, %v4307
        %v4309 = vpop.f32.mrb[0].mxu0
        %v4310 = vpop.f32.mrb[0].mxu0
        %v4311 = vadd.f32 0.0, %v4310
        %v4312 = vpop.f32.mrb[0].mxu0
        %4313 = vmatprep.mubr.bf16.mxu0 0
        %4314 = vmatmul.mubr.bf16.gmra.mrb[0].mxu0 %v4244
        %v4315 = vpop.f32.mrb[0].mxu0
        %v4316 = vadd.f32 0.0, %v4315
        %v4317 = vpop.f32.mrb[0].mxu0
        %v4318 = vpop.f32.mrb[0].mxu0
        %v4319 = vadd.f32 0.0, %v4318
        %v4320 = vpop.f32.mrb[0].mxu0
        %4321 = vmatprep.mubr.bf16.mxu0 0
        %4322 = vmatmul.mubr.bf16.gmra.mrb[0].mxu0 %v4245
        %v4323 = vpop.f32.mrb[0].mxu0
        %v4324 = vadd.f32 0.0, %v4323
        %v4325 = vpop.f32.mrb[0].mxu0
        %v4326 = vpop.f32.mrb[0].mxu0
        %v4327 = vadd.f32 0.0, %v4326
        %v4328 = vpop.f32.mrb[0].mxu0
        %4329 = vmatprep.mubr.bf16.mxu0 0
        %4330 = vmatmul.mubr.bf16.gmra.mrb[0].mxu0 %v4246
        %v4331 = vpop.f32.mrb[0].mxu0
        %v4332 = vadd.f32 0.0, %v4331
        %v4333 = vpop.f32.mrb[0].mxu0
        %v4334 = vpop.f32.mrb[0].mxu0
        %v4335 = vadd.f32 0.0, %v4334
        %v4336 = vpop.f32.mrb[0].mxu0
        %4337 = vmatprep.mubr.bf16.mxu0 0
        %4338 = vmatmul.mubr.bf16.gmra.mrb[0].mxu0 %v4247
        %v4339 = vpop.f32.mrb[0].mxu0
        %v4340 = vadd.f32 0.0, %v4339
        %v4341 = vpop.f32.mrb[0].mxu0
        %v4342 = vpop.f32.mrb[0].mxu0
        %v4343 = vadd.f32 0.0, %v4342
        %v4344 = vpop.f32.mrb[0].mxu0
        %4345 = vmatprep.mubr.bf16.mxu0 0
        %4346 = vmatmul.mubr.bf16.gmra.mrb[0].mxu0 %v4248
        %v4347 = vpop.f32.mrb[0].mxu0
        %v4348 = vadd.f32 0.0, %v4347
        %v4349 = vpop.f32.mrb[0].mxu0
        %v4350 = vpop.f32.mrb[0].mxu0
        %v4351 = vadd.f32 0.0, %v4350
        %v4352 = vpop.f32.mrb[0].mxu0
        %4353 = vdwg.mxu0
        %v4370 = vunpack.c.l.b16 %v4048
        %v4371 = vunpack.c.l.b16 %v4049
        %v4372 = vunpack.c.l.b16 %v4050
        %v4373 = vunpack.c.l.b16 %v4051
        %v4374 = vunpack.c.l.b16 %v4052
        %v4375 = vunpack.c.l.b16 %v4053
        %v4376 = vunpack.c.l.b16 %v4054
        %v4377 = vunpack.c.l.b16 %v4055
        %v4378 = vunpack.c.l.b16 %v4056
        %v4379 = vunpack.c.l.b16 %v4057
        %v4380 = vunpack.c.l.b16 %v4058
        %v4381 = vunpack.c.l.b16 %v4059
        %v4382 = vunpack.c.l.b16 %v4060
        %v4383 = vunpack.c.l.b16 %v4061
        %v4384 = vunpack.c.l.b16 %v4062
        %v4385 = vunpack.c.l.b16 %v4063
        %v4386 = vpack.c.b16 %v4371, %v4370
        %v4387 = vpack.c.b16 %v4373, %v4372
        %v4388 = vpack.c.b16 %v4375, %v4374
        %v4389 = vpack.c.b16 %v4377, %v4376
        %v4390 = vpack.c.b16 %v4379, %v4378
        %v4391 = vpack.c.b16 %v4381, %v4380
        %v4392 = vpack.c.b16 %v4383, %v4382
        %v4393 = vpack.c.b16 %v4385, %v4384
        %4402 = vmatprep.subr.bf16.mxu0 0
        %4403 = vmatpush1.bf16.msra.mxu0 %v4008
        %4404 = vmatprep.subr.bf16.mxu0 0
        %4405 = vmatpush1.bf16.msra.mxu0 %v4009
        %4406 = vmatprep.subr.bf16.mxu0 0
        %4407 = vmatpush1.bf16.msra.mxu0 %v4010
        %4408 = vmatprep.subr.bf16.mxu0 0
        %4409 = vmatpush1.bf16.msra.mxu0 %v4011
        %4410 = vmatprep.subr.bf16.mxu0 0
        %4411 = vmatpush1.bf16.msra.mxu0 %v4012
        %4412 = vmatprep.subr.bf16.mxu0 0
        %4413 = vmatpush1.bf16.msra.mxu0 %v4013
        %4414 = vmatprep.subr.bf16.mxu0 0
        %4415 = vmatpush1.bf16.msra.mxu0 %v4014
        %4416 = vmatprep.subr.bf16.mxu0 0
        %4417 = vmatpush1.bf16.msra.mxu0 %v4015
        %4418 = vmatprep.subr.bf16.mxu0 0
        %4419 = vmatpush1.bf16.msra.mxu0 0
        %4420 = vmatprep.subr.bf16.mxu0 0
        %4421 = vmatpush1.bf16.msra.mxu0 0
        %4422 = vmatprep.subr.bf16.mxu0 0
        %4423 = vmatpush1.bf16.msra.mxu0 0
        %4424 = vmatprep.subr.bf16.mxu0 0
        %4425 = vmatpush1.bf16.msra.mxu0 0
        %4426 = vmatprep.subr.bf16.mxu0 0
        %4427 = vmatpush1.bf16.msra.mxu0 0
        %4428 = vmatprep.subr.bf16.mxu0 0
        %4429 = vmatpush1.bf16.msra.mxu0 0
        %4430 = vmatprep.subr.bf16.mxu0 0
        %4431 = vmatpush1.bf16.msra.mxu0 0
        %4432 = vmatprep.subr.bf16.mxu0 0
        %4433 = vmatpush1.bf16.msra.mxu0 0
        %4434 = vmatprep.mubr.bf16.mxu0 0
        %4435 = vmatmul.mubr.bf16.gmra.mrb[0].mxu0 %v4386
        %v4436 = vpop.f32.mrb[0].mxu0
        %v4437 = vadd.f32 0.0, %v4436
        %v4438 = vpop.f32.mrb[0].mxu0
        %v4439 = vpop.f32.mrb[0].mxu0
        %v4440 = vadd.f32 0.0, %v4439
        %v4441 = vpop.f32.mrb[0].mxu0
        %4442 = vmatprep.mubr.bf16.mxu0 0
        %4443 = vmatmul.mubr.bf16.gmra.mrb[0].mxu0 %v4387
        %v4444 = vpop.f32.mrb[0].mxu0
        %v4445 = vadd.f32 0.0, %v4444
        %v4446 = vpop.f32.mrb[0].mxu0
        %v4447 = vpop.f32.mrb[0].mxu0
        %v4448 = vadd.f32 0.0, %v4447
        %v4449 = vpop.f32.mrb[0].mxu0
        %4450 = vmatprep.mubr.bf16.mxu0 0
        %4451 = vmatmul.mubr.bf16.gmra.mrb[0].mxu0 %v4388
        %v4452 = vpop.f32.mrb[0].mxu0
        %v4453 = vadd.f32 0.0, %v4452
        %v4454 = vpop.f32.mrb[0].mxu0
        %v4455 = vpop.f32.mrb[0].mxu0
        %v4456 = vadd.f32 0.0, %v4455
        %v4457 = vpop.f32.mrb[0].mxu0
        %4458 = vmatprep.mubr.bf16.mxu0 0
        %4459 = vmatmul.mubr.bf16.gmra.mrb[0].mxu0 %v4389
        %v4460 = vpop.f32.mrb[0].mxu0
        %v4461 = vadd.f32 0.0, %v4460
        %v4462 = vpop.f32.mrb[0].mxu0
        %v4463 = vpop.f32.mrb[0].mxu0
        %v4464 = vadd.f32 0.0, %v4463
        %v4465 = vpop.f32.mrb[0].mxu0
        %4466 = vmatprep.mubr.bf16.mxu0 0
        %4467 = vmatmul.mubr.bf16.gmra.mrb[0].mxu0 %v4390
        %v4468 = vpop.f32.mrb[0].mxu0
        %v4469 = vadd.f32 0.0, %v4468
        %v4470 = vpop.f32.mrb[0].mxu0
        %v4471 = vpop.f32.mrb[0].mxu0
        %v4472 = vadd.f32 0.0, %v4471
        %v4473 = vpop.f32.mrb[0].mxu0
        %4474 = vmatprep.mubr.bf16.mxu0 0
        %4475 = vmatmul.mubr.bf16.gmra.mrb[0].mxu0 %v4391
        %v4476 = vpop.f32.mrb[0].mxu0
        %v4477 = vadd.f32 0.0, %v4476
        %v4478 = vpop.f32.mrb[0].mxu0
        %v4479 = vpop.f32.mrb[0].mxu0
        %v4480 = vadd.f32 0.0, %v4479
        %v4481 = vpop.f32.mrb[0].mxu0
        %4482 = vmatprep.mubr.bf16.mxu0 0
        %4483 = vmatmul.mubr.bf16.gmra.mrb[0].mxu0 %v4392
        %v4484 = vpop.f32.mrb[0].mxu0
        %v4485 = vadd.f32 0.0, %v4484
        %v4486 = vpop.f32.mrb[0].mxu0
        %v4487 = vpop.f32.mrb[0].mxu0
        %v4488 = vadd.f32 0.0, %v4487
        %v4489 = vpop.f32.mrb[0].mxu0
        %4490 = vmatprep.mubr.bf16.mxu0 0
        %4491 = vmatmul.mubr.bf16.gmra.mrb[0].mxu0 %v4393
        %v4492 = vpop.f32.mrb[0].mxu0
        %v4493 = vadd.f32 0.0, %v4492
        %v4494 = vpop.f32.mrb[0].mxu0
        %v4495 = vpop.f32.mrb[0].mxu0
        %v4496 = vadd.f32 0.0, %v4495
        %v4497 = vpop.f32.mrb[0].mxu0
        %4498 = vdwg.mxu0
        %v4499 = vsub.f32 %v4147, %v4292
        %v4500 = vsub.f32 %v4150, %v4295
        %v4501 = vsub.f32 %v4155, %v4300
        %v4502 = vsub.f32 %v4158, %v4303
        %v4503 = vsub.f32 %v4163, %v4308
        %v4504 = vsub.f32 %v4166, %v4311
        %v4505 = vsub.f32 %v4171, %v4316
        %v4506 = vsub.f32 %v4174, %v4319
        %v4507 = vsub.f32 %v4179, %v4324
        %v4508 = vsub.f32 %v4182, %v4327
        %v4509 = vsub.f32 %v4187, %v4332
        %v4510 = vsub.f32 %v4190, %v4335
        %v4511 = vsub.f32 %v4195, %v4340
        %v4512 = vsub.f32 %v4198, %v4343
        %v4513 = vsub.f32 %v4203, %v4348
        %v4514 = vsub.f32 %v4206, %v4351
        %v4515 = vsub.f32 %v4437, %v4147
        %v4516 = vsub.f32 %v4440, %v4150
        %v4517 = vsub.f32 %v4445, %v4155
        %v4518 = vsub.f32 %v4448, %v4158
        %v4519 = vsub.f32 %v4453, %v4163
        %v4520 = vsub.f32 %v4456, %v4166
        %v4521 = vsub.f32 %v4461, %v4171
        %v4522 = vsub.f32 %v4464, %v4174
        %v4523 = vsub.f32 %v4469, %v4179
        %v4524 = vsub.f32 %v4472, %v4182
        %v4525 = vsub.f32 %v4477, %v4187
        %v4526 = vsub.f32 %v4480, %v4190
        %v4527 = vsub.f32 %v4485, %v4195
        %v4528 = vsub.f32 %v4488, %v4198
        %v4529 = vsub.f32 %v4493, %v4203
        %v4530 = vsub.f32 %v4496, %v4206
        %v4531 = vsub.f32 %v4515, %v4292
        %v4532 = vsub.f32 %v4516, %v4295
        %v4533 = vsub.f32 %v4517, %v4300
        %v4534 = vsub.f32 %v4518, %v4303
        %v4535 = vsub.f32 %v4519, %v4308
        %v4536 = vsub.f32 %v4520, %v4311
        %v4537 = vsub.f32 %v4521, %v4316
        %v4538 = vsub.f32 %v4522, %v4319
        %v4539 = vsub.f32 %v4523, %v4324
        %v4540 = vsub.f32 %v4524, %v4327
        %v4541 = vsub.f32 %v4525, %v4332
        %v4542 = vsub.f32 %v4526, %v4335
        %v4543 = vsub.f32 %v4527, %v4340
        %v4544 = vsub.f32 %v4528, %v4343
        %v4545 = vsub.f32 %v4529, %v4348
        %v4546 = vsub.f32 %v4530, %v4351
        %v4547 = vpack.c.bf16 %v4500, %v4499
        %v4548 = vpack.c.bf16 %v4502, %v4501
        %v4549 = vpack.c.bf16 %v4504, %v4503
        %v4550 = vpack.c.bf16 %v4506, %v4505
        %v4551 = vpack.c.bf16 %v4508, %v4507
        %v4552 = vpack.c.bf16 %v4510, %v4509
        %v4553 = vpack.c.bf16 %v4512, %v4511
        %v4554 = vpack.c.bf16 %v4514, %v4513
        %v4555 = vpack.c.bf16 %v4532, %v4531
        %v4556 = vpack.c.bf16 %v4534, %v4533
        %v4557 = vpack.c.bf16 %v4536, %v4535
        %v4558 = vpack.c.bf16 %v4538, %v4537
        %v4559 = vpack.c.bf16 %v4540, %v4539
        %v4560 = vpack.c.bf16 %v4542, %v4541
        %v4561 = vpack.c.bf16 %v4544, %v4543
        %v4562 = vpack.c.bf16 %v4546, %v4545
        %v4563 = vadd.f32 %v4499, %v4531
        %v4564 = vadd.f32 %v4500, %v4532
        %v4565 = vadd.f32 %v4501, %v4533
        %v4566 = vadd.f32 %v4502, %v4534
        %v4567 = vadd.f32 %v4503, %v4535
        %v4568 = vadd.f32 %v4504, %v4536
        %v4569 = vadd.f32 %v4505, %v4537
        %v4570 = vadd.f32 %v4506, %v4538
        %v4571 = vadd.f32 %v4507, %v4539
        %v4572 = vadd.f32 %v4508, %v4540
        %v4573 = vadd.f32 %v4509, %v4541
        %v4574 = vadd.f32 %v4510, %v4542
        %v4575 = vadd.f32 %v4511, %v4543
        %v4576 = vadd.f32 %v4512, %v4544
        %v4577 = vadd.f32 %v4513, %v4545
        %v4578 = vadd.f32 %v4514, %v4546
        %v4579 = vpack.c.bf16 %v4564, %v4563
        %v4580 = vpack.c.bf16 %v4566, %v4565
        %v4581 = vpack.c.bf16 %v4568, %v4567
        %v4582 = vpack.c.bf16 %v4570, %v4569
        %v4583 = vpack.c.bf16 %v4572, %v4571
        %v4584 = vpack.c.bf16 %v4574, %v4573
        %v4585 = vpack.c.bf16 %v4576, %v4575
        %v4586 = vpack.c.bf16 %v4578, %v4577
        %4587 = vmatprep.subr.bf16.mxu0 0
        %4588 = vmatpush1.bf16.msra.mxu0 %v4096
        %4589 = vmatprep.subr.bf16.mxu0 0
        %4590 = vmatpush1.bf16.msra.mxu0 %v4097
        %4591 = vmatprep.subr.bf16.mxu0 0
        %4592 = vmatpush1.bf16.msra.mxu0 %v4098
        %4593 = vmatprep.subr.bf16.mxu0 0
        %4594 = vmatpush1.bf16.msra.mxu0 %v4099
        %4595 = vmatprep.subr.bf16.mxu0 0
        %4596 = vmatpush1.bf16.msra.mxu0 %v4100
        %4597 = vmatprep.subr.bf16.mxu0 0
        %4598 = vmatpush1.bf16.msra.mxu0 %v4101
        %4599 = vmatprep.subr.bf16.mxu0 0
        %4600 = vmatpush1.bf16.msra.mxu0 %v4102
        %4601 = vmatprep.subr.bf16.mxu0 0
        %4602 = vmatpush1.bf16.msra.mxu0 %v4103
        %4603 = vmatprep.subr.bf16.mxu0 0
        %4604 = vmatpush1.bf16.msra.mxu0 0
        %4605 = vmatprep.subr.bf16.mxu0 0
        %4606 = vmatpush1.bf16.msra.mxu0 0
        %4607 = vmatprep.subr.bf16.mxu0 0
        %4608 = vmatpush1.bf16.msra.mxu0 0
        %4609 = vmatprep.subr.bf16.mxu0 0
        %4610 = vmatpush1.bf16.msra.mxu0 0
        %4611 = vmatprep.subr.bf16.mxu0 0
        %4612 = vmatpush1.bf16.msra.mxu0 0
        %4613 = vmatprep.subr.bf16.mxu0 0
        %4614 = vmatpush1.bf16.msra.mxu0 0
        %4615 = vmatprep.subr.bf16.mxu0 0
        %4616 = vmatpush1.bf16.msra.mxu0 0
        %4617 = vmatprep.subr.bf16.mxu0 0
        %4618 = vmatpush1.bf16.msra.mxu0 0
        %4619 = vmatprep.mubr.bf16.mxu0 0
        %4620 = vmatmul.mubr.bf16.gmra.mrb[0].mxu0 %v4547
        %v4621 = vpop.f32.mrb[0].mxu0
        %v4622 = vadd.f32 0.0, %v4621
        %v4623 = vpop.f32.mrb[0].mxu0
        %v4624 = vpop.f32.mrb[0].mxu0
        %v4625 = vadd.f32 0.0, %v4624
        %v4626 = vpop.f32.mrb[0].mxu0
        %4627 = vmatprep.mubr.bf16.mxu0 0
        %4628 = vmatmul.mubr.bf16.gmra.mrb[0].mxu0 %v4548
        %v4629 = vpop.f32.mrb[0].mxu0
        %v4630 = vadd.f32 0.0, %v4629
        %v4631 = vpop.f32.mrb[0].mxu0
        %v4632 = vpop.f32.mrb[0].mxu0
        %v4633 = vadd.f32 0.0, %v4632
        %v4634 = vpop.f32.mrb[0].mxu0
        %4635 = vmatprep.mubr.bf16.mxu0 0
        %4636 = vmatmul.mubr.bf16.gmra.mrb[0].mxu0 %v4549
        %v4637 = vpop.f32.mrb[0].mxu0
        %v4638 = vadd.f32 0.0, %v4637
        %v4639 = vpop.f32.mrb[0].mxu0
        %v4640 = vpop.f32.mrb[0].mxu0
        %v4641 = vadd.f32 0.0, %v4640
        %v4642 = vpop.f32.mrb[0].mxu0
        %4643 = vmatprep.mubr.bf16.mxu0 0
        %4644 = vmatmul.mubr.bf16.gmra.mrb[0].mxu0 %v4550
        %v4645 = vpop.f32.mrb[0].mxu0
        %v4646 = vadd.f32 0.0, %v4645
        %v4647 = vpop.f32.mrb[0].mxu0
        %v4648 = vpop.f32.mrb[0].mxu0
        %v4649 = vadd.f32 0.0, %v4648
        %v4650 = vpop.f32.mrb[0].mxu0
        %4651 = vmatprep.mubr.bf16.mxu0 0
        %4652 = vmatmul.mubr.bf16.gmra.mrb[0].mxu0 %v4551
        %v4653 = vpop.f32.mrb[0].mxu0
        %v4654 = vadd.f32 0.0, %v4653
        %v4655 = vpop.f32.mrb[0].mxu0
        %v4656 = vpop.f32.mrb[0].mxu0
        %v4657 = vadd.f32 0.0, %v4656
        %v4658 = vpop.f32.mrb[0].mxu0
        %4659 = vmatprep.mubr.bf16.mxu0 0
        %4660 = vmatmul.mubr.bf16.gmra.mrb[0].mxu0 %v4552
        %v4661 = vpop.f32.mrb[0].mxu0
        %v4662 = vadd.f32 0.0, %v4661
        %v4663 = vpop.f32.mrb[0].mxu0
        %v4664 = vpop.f32.mrb[0].mxu0
        %v4665 = vadd.f32 0.0, %v4664
        %v4666 = vpop.f32.mrb[0].mxu0
        %4667 = vmatprep.mubr.bf16.mxu0 0
        %4668 = vmatmul.mubr.bf16.gmra.mrb[0].mxu0 %v4553
        %v4669 = vpop.f32.mrb[0].mxu0
        %v4670 = vadd.f32 0.0, %v4669
        %v4671 = vpop.f32.mrb[0].mxu0
        %v4672 = vpop.f32.mrb[0].mxu0
        %v4673 = vadd.f32 0.0, %v4672
        %v4674 = vpop.f32.mrb[0].mxu0
        %4675 = vmatprep.mubr.bf16.mxu0 0
        %4676 = vmatmul.mubr.bf16.gmra.mrb[0].mxu0 %v4554
        %v4677 = vpop.f32.mrb[0].mxu0
        %v4678 = vadd.f32 0.0, %v4677
        %v4679 = vpop.f32.mrb[0].mxu0
        %v4680 = vpop.f32.mrb[0].mxu0
        %v4681 = vadd.f32 0.0, %v4680
        %v4682 = vpop.f32.mrb[0].mxu0
        %4683 = vdwg.mxu0
        %4684 = vmatprep.subr.bf16.mxu0 0
        %4685 = vmatpush1.bf16.msra.mxu0 %v4241
        %4686 = vmatprep.subr.bf16.mxu0 0
        %4687 = vmatpush1.bf16.msra.mxu0 %v4242
        %4688 = vmatprep.subr.bf16.mxu0 0
        %4689 = vmatpush1.bf16.msra.mxu0 %v4243
        %4690 = vmatprep.subr.bf16.mxu0 0
        %4691 = vmatpush1.bf16.msra.mxu0 %v4244
        %4692 = vmatprep.subr.bf16.mxu0 0
        %4693 = vmatpush1.bf16.msra.mxu0 %v4245
        %4694 = vmatprep.subr.bf16.mxu0 0
        %4695 = vmatpush1.bf16.msra.mxu0 %v4246
        %4696 = vmatprep.subr.bf16.mxu0 0
        %4697 = vmatpush1.bf16.msra.mxu0 %v4247
        %4698 = vmatprep.subr.bf16.mxu0 0
        %4699 = vmatpush1.bf16.msra.mxu0 %v4248
        %4700 = vmatprep.subr.bf16.mxu0 0
        %4701 = vmatpush1.bf16.msra.mxu0 0
        %4702 = vmatprep.subr.bf16.mxu0 0
        %4703 = vmatpush1.bf16.msra.mxu0 0
        %4704 = vmatprep.subr.bf16.mxu0 0
        %4705 = vmatpush1.bf16.msra.mxu0 0
        %4706 = vmatprep.subr.bf16.mxu0 0
        %4707 = vmatpush1.bf16.msra.mxu0 0
        %4708 = vmatprep.subr.bf16.mxu0 0
        %4709 = vmatpush1.bf16.msra.mxu0 0
        %4710 = vmatprep.subr.bf16.mxu0 0
        %4711 = vmatpush1.bf16.msra.mxu0 0
        %4712 = vmatprep.subr.bf16.mxu0 0
        %4713 = vmatpush1.bf16.msra.mxu0 0
        %4714 = vmatprep.subr.bf16.mxu0 0
        %4715 = vmatpush1.bf16.msra.mxu0 0
        %4716 = vmatprep.mubr.bf16.mxu0 0
        %4717 = vmatmul.mubr.bf16.gmra.mrb[0].mxu0 %v4555
        %v4718 = vpop.f32.mrb[0].mxu0
        %v4719 = vadd.f32 0.0, %v4718
        %v4720 = vpop.f32.mrb[0].mxu0
        %v4721 = vpop.f32.mrb[0].mxu0
        %v4722 = vadd.f32 0.0, %v4721
        %v4723 = vpop.f32.mrb[0].mxu0
        %4724 = vmatprep.mubr.bf16.mxu0 0
        %4725 = vmatmul.mubr.bf16.gmra.mrb[0].mxu0 %v4556
        %v4726 = vpop.f32.mrb[0].mxu0
        %v4727 = vadd.f32 0.0, %v4726
        %v4728 = vpop.f32.mrb[0].mxu0
        %v4729 = vpop.f32.mrb[0].mxu0
        %v4730 = vadd.f32 0.0, %v4729
        %v4731 = vpop.f32.mrb[0].mxu0
        %4732 = vmatprep.mubr.bf16.mxu0 0
        %4733 = vmatmul.mubr.bf16.gmra.mrb[0].mxu0 %v4557
        %v4734 = vpop.f32.mrb[0].mxu0
        %v4735 = vadd.f32 0.0, %v4734
        %v4736 = vpop.f32.mrb[0].mxu0
        %v4737 = vpop.f32.mrb[0].mxu0
        %v4738 = vadd.f32 0.0, %v4737
        %v4739 = vpop.f32.mrb[0].mxu0
        %4740 = vmatprep.mubr.bf16.mxu0 0
        %4741 = vmatmul.mubr.bf16.gmra.mrb[0].mxu0 %v4558
        %v4742 = vpop.f32.mrb[0].mxu0
        %v4743 = vadd.f32 0.0, %v4742
        %v4744 = vpop.f32.mrb[0].mxu0
        %v4745 = vpop.f32.mrb[0].mxu0
        %v4746 = vadd.f32 0.0, %v4745
        %v4747 = vpop.f32.mrb[0].mxu0
        %4748 = vmatprep.mubr.bf16.mxu0 0
        %4749 = vmatmul.mubr.bf16.gmra.mrb[0].mxu0 %v4559
        %v4750 = vpop.f32.mrb[0].mxu0
        %v4751 = vadd.f32 0.0, %v4750
        %v4752 = vpop.f32.mrb[0].mxu0
        %v4753 = vpop.f32.mrb[0].mxu0
        %v4754 = vadd.f32 0.0, %v4753
        %v4755 = vpop.f32.mrb[0].mxu0
        %4756 = vmatprep.mubr.bf16.mxu0 0
        %4757 = vmatmul.mubr.bf16.gmra.mrb[0].mxu0 %v4560
        %v4758 = vpop.f32.mrb[0].mxu0
        %v4759 = vadd.f32 0.0, %v4758
        %v4760 = vpop.f32.mrb[0].mxu0
        %v4761 = vpop.f32.mrb[0].mxu0
        %v4762 = vadd.f32 0.0, %v4761
        %v4763 = vpop.f32.mrb[0].mxu0
        %4764 = vmatprep.mubr.bf16.mxu0 0
        %4765 = vmatmul.mubr.bf16.gmra.mrb[0].mxu0 %v4561
        %v4766 = vpop.f32.mrb[0].mxu0
        %v4767 = vadd.f32 0.0, %v4766
        %v4768 = vpop.f32.mrb[0].mxu0
        %v4769 = vpop.f32.mrb[0].mxu0
        %v4770 = vadd.f32 0.0, %v4769
        %v4771 = vpop.f32.mrb[0].mxu0
        %4772 = vmatprep.mubr.bf16.mxu0 0
        %4773 = vmatmul.mubr.bf16.gmra.mrb[0].mxu0 %v4562
        %v4774 = vpop.f32.mrb[0].mxu0
        %v4775 = vadd.f32 0.0, %v4774
        %v4776 = vpop.f32.mrb[0].mxu0
        %v4777 = vpop.f32.mrb[0].mxu0
        %v4778 = vadd.f32 0.0, %v4777
        %v4779 = vpop.f32.mrb[0].mxu0
        %4780 = vdwg.mxu0
        %4781 = vmatprep.subr.bf16.mxu0 0
        %4782 = vmatpush1.bf16.msra.mxu0 %v4386
        %4783 = vmatprep.subr.bf16.mxu0 0
        %4784 = vmatpush1.bf16.msra.mxu0 %v4387
        %4785 = vmatprep.subr.bf16.mxu0 0
        %4786 = vmatpush1.bf16.msra.mxu0 %v4388
        %4787 = vmatprep.subr.bf16.mxu0 0
        %4788 = vmatpush1.bf16.msra.mxu0 %v4389
        %4789 = vmatprep.subr.bf16.mxu0 0
        %4790 = vmatpush1.bf16.msra.mxu0 %v4390
        %4791 = vmatprep.subr.bf16.mxu0 0
        %4792 = vmatpush1.bf16.msra.mxu0 %v4391
        %4793 = vmatprep.subr.bf16.mxu0 0
        %4794 = vmatpush1.bf16.msra.mxu0 %v4392
        %4795 = vmatprep.subr.bf16.mxu0 0
        %4796 = vmatpush1.bf16.msra.mxu0 %v4393
        %4797 = vmatprep.subr.bf16.mxu0 0
        %4798 = vmatpush1.bf16.msra.mxu0 0
        %4799 = vmatprep.subr.bf16.mxu0 0
        %4800 = vmatpush1.bf16.msra.mxu0 0
        %4801 = vmatprep.subr.bf16.mxu0 0
        %4802 = vmatpush1.bf16.msra.mxu0 0
        %4803 = vmatprep.subr.bf16.mxu0 0
        %4804 = vmatpush1.bf16.msra.mxu0 0
        %4805 = vmatprep.subr.bf16.mxu0 0
        %4806 = vmatpush1.bf16.msra.mxu0 0
        %4807 = vmatprep.subr.bf16.mxu0 0
        %4808 = vmatpush1.bf16.msra.mxu0 0
        %4809 = vmatprep.subr.bf16.mxu0 0
        %4810 = vmatpush1.bf16.msra.mxu0 0
        %4811 = vmatprep.subr.bf16.mxu0 0
        %4812 = vmatpush1.bf16.msra.mxu0 0
        %4813 = vmatprep.mubr.bf16.mxu0 0
        %4814 = vmatmul.mubr.bf16.gmra.mrb[0].mxu0 %v4579
        %v4815 = vpop.f32.mrb[0].mxu0
        %v4816 = vadd.f32 0.0, %v4815
        %v4817 = vpop.f32.mrb[0].mxu0
        %v4818 = vpop.f32.mrb[0].mxu0
        %v4819 = vadd.f32 0.0, %v4818
        %v4820 = vpop.f32.mrb[0].mxu0
        %4821 = vmatprep.mubr.bf16.mxu0 0
        %4822 = vmatmul.mubr.bf16.gmra.mrb[0].mxu0 %v4580
        %v4823 = vpop.f32.mrb[0].mxu0
        %v4824 = vadd.f32 0.0, %v4823
        %v4825 = vpop.f32.mrb[0].mxu0
        %v4826 = vpop.f32.mrb[0].mxu0
        %v4827 = vadd.f32 0.0, %v4826
        %v4828 = vpop.f32.mrb[0].mxu0
        %4829 = vmatprep.mubr.bf16.mxu0 0
        %4830 = vmatmul.mubr.bf16.gmra.mrb[0].mxu0 %v4581
        %v4831 = vpop.f32.mrb[0].mxu0
        %v4832 = vadd.f32 0.0, %v4831
        %v4833 = vpop.f32.mrb[0].mxu0
        %v4834 = vpop.f32.mrb[0].mxu0
        %v4835 = vadd.f32 0.0, %v4834
        %v4836 = vpop.f32.mrb[0].mxu0
        %4837 = vmatprep.mubr.bf16.mxu0 0
        %4838 = vmatmul.mubr.bf16.gmra.mrb[0].mxu0 %v4582
        %v4839 = vpop.f32.mrb[0].mxu0
        %v4840 = vadd.f32 0.0, %v4839
        %v4841 = vpop.f32.mrb[0].mxu0
        %v4842 = vpop.f32.mrb[0].mxu0
        %v4843 = vadd.f32 0.0, %v4842
        %v4844 = vpop.f32.mrb[0].mxu0
        %4845 = vmatprep.mubr.bf16.mxu0 0
        %4846 = vmatmul.mubr.bf16.gmra.mrb[0].mxu0 %v4583
        %v4847 = vpop.f32.mrb[0].mxu0
        %v4848 = vadd.f32 0.0, %v4847
        %v4849 = vpop.f32.mrb[0].mxu0
        %v4850 = vpop.f32.mrb[0].mxu0
        %v4851 = vadd.f32 0.0, %v4850
        %v4852 = vpop.f32.mrb[0].mxu0
        %4853 = vmatprep.mubr.bf16.mxu0 0
        %4854 = vmatmul.mubr.bf16.gmra.mrb[0].mxu0 %v4584
        %v4855 = vpop.f32.mrb[0].mxu0
        %v4856 = vadd.f32 0.0, %v4855
        %v4857 = vpop.f32.mrb[0].mxu0
        %v4858 = vpop.f32.mrb[0].mxu0
        %v4859 = vadd.f32 0.0, %v4858
        %v4860 = vpop.f32.mrb[0].mxu0
        %4861 = vmatprep.mubr.bf16.mxu0 0
        %4862 = vmatmul.mubr.bf16.gmra.mrb[0].mxu0 %v4585
        %v4863 = vpop.f32.mrb[0].mxu0
        %v4864 = vadd.f32 0.0, %v4863
        %v4865 = vpop.f32.mrb[0].mxu0
        %v4866 = vpop.f32.mrb[0].mxu0
        %v4867 = vadd.f32 0.0, %v4866
        %v4868 = vpop.f32.mrb[0].mxu0
        %4869 = vmatprep.mubr.bf16.mxu0 0
        %4870 = vmatmul.mubr.bf16.gmra.mrb[0].mxu0 %v4586
        %v4871 = vpop.f32.mrb[0].mxu0
        %v4872 = vadd.f32 0.0, %v4871
        %v4873 = vpop.f32.mrb[0].mxu0
        %v4874 = vpop.f32.mrb[0].mxu0
        %v4875 = vadd.f32 0.0, %v4874
        %v4876 = vpop.f32.mrb[0].mxu0
        %4877 = vdwg.mxu0
        %v4878 = vsub.f32 %v4622, %v4719
        %v4879 = vsub.f32 %v4625, %v4722
        %v4880 = vsub.f32 %v4630, %v4727
        %v4881 = vsub.f32 %v4633, %v4730
        %v4882 = vsub.f32 %v4638, %v4735
        %v4883 = vsub.f32 %v4641, %v4738
        %v4884 = vsub.f32 %v4646, %v4743
        %v4885 = vsub.f32 %v4649, %v4746
        %v4886 = vsub.f32 %v4654, %v4751
        %v4887 = vsub.f32 %v4657, %v4754
        %v4888 = vsub.f32 %v4662, %v4759
        %v4889 = vsub.f32 %v4665, %v4762
        %v4890 = vsub.f32 %v4670, %v4767
        %v4891 = vsub.f32 %v4673, %v4770
        %v4892 = vsub.f32 %v4678, %v4775
        %v4893 = vsub.f32 %v4681, %v4778
        %v4894 = vsub.f32 %v4816, %v4622
        %v4895 = vsub.f32 %v4819, %v4625
        %v4896 = vsub.f32 %v4824, %v4630
        %v4897 = vsub.f32 %v4827, %v4633
        %v4898 = vsub.f32 %v4832, %v4638
        %v4899 = vsub.f32 %v4835, %v4641
        %v4900 = vsub.f32 %v4840, %v4646
        %v4901 = vsub.f32 %v4843, %v4649
        %v4902 = vsub.f32 %v4848, %v4654
        %v4903 = vsub.f32 %v4851, %v4657
        %v4904 = vsub.f32 %v4856, %v4662
        %v4905 = vsub.f32 %v4859, %v4665
        %v4906 = vsub.f32 %v4864, %v4670
        %v4907 = vsub.f32 %v4867, %v4673
        %v4908 = vsub.f32 %v4872, %v4678
        %v4909 = vsub.f32 %v4875, %v4681
        %v4910 = vsub.f32 %v4894, %v4719
        %v4911 = vsub.f32 %v4895, %v4722
        %v4912 = vsub.f32 %v4896, %v4727
        %v4913 = vsub.f32 %v4897, %v4730
        %v4914 = vsub.f32 %v4898, %v4735
        %v4915 = vsub.f32 %v4899, %v4738
        %v4916 = vsub.f32 %v4900, %v4743
        %v4917 = vsub.f32 %v4901, %v4746
        %v4918 = vsub.f32 %v4902, %v4751
        %v4919 = vsub.f32 %v4903, %v4754
        %v4920 = vsub.f32 %v4904, %v4759
        %v4921 = vsub.f32 %v4905, %v4762
        %v4922 = vsub.f32 %v4906, %v4767
        %v4923 = vsub.f32 %v4907, %v4770
        %v4924 = vsub.f32 %v4908, %v4775
        %v4925 = vsub.f32 %v4909, %v4778
        %4926 = vst [vmem:[%s430] sm:$0xff] %v4910
        %4927 = vst [vmem:[%s430 + $0x8] sm:$0xff] %v4911
        %4928 = vst [vmem:[%s430 + $0x10] sm:$0xff] %v4912
        %4929 = vst [vmem:[%s430 + $0x18] sm:$0xff] %v4913
        %4930 = vst [vmem:[%s430 + $0x20] sm:$0xff] %v4914
        %4931 = vst [vmem:[%s430 + $0x28] sm:$0xff] %v4915
        %4932 = vst [vmem:[%s430 + $0x30] sm:$0xff] %v4916
        %4933 = vst [vmem:[%s430 + $0x38] sm:$0xff] %v4917
        %4934 = vst [vmem:[%s430 + $0x40] sm:$0xff] %v4918
        %4935 = vst [vmem:[%s430 + $0x48] sm:$0xff] %v4919
        %4936 = vst [vmem:[%s430 + $0x50] sm:$0xff] %v4920
        %4937 = vst [vmem:[%s430 + $0x58] sm:$0xff] %v4921
        %4938 = vst [vmem:[%s430 + $0x60] sm:$0xff] %v4922
        %4939 = vst [vmem:[%s430 + $0x68] sm:$0xff] %v4923
        %4940 = vst [vmem:[%s430 + $0x70] sm:$0xff] %v4924
        %4941 = vst [vmem:[%s430 + $0x78] sm:$0xff] %v4925
        %v4942 = vsub.f32 0.0, %v4878
        %v4943 = vsub.f32 0.0, %v4879
        %v4944 = vsub.f32 0.0, %v4880
        %v4945 = vsub.f32 0.0, %v4881
        %v4946 = vsub.f32 0.0, %v4882
        %v4947 = vsub.f32 0.0, %v4883
        %v4948 = vsub.f32 0.0, %v4884
        %v4949 = vsub.f32 0.0, %v4885
        %v4950 = vsub.f32 0.0, %v4886
        %v4951 = vsub.f32 0.0, %v4887
        %v4952 = vsub.f32 0.0, %v4888
        %v4953 = vsub.f32 0.0, %v4889
        %v4954 = vsub.f32 0.0, %v4890
        %v4955 = vsub.f32 0.0, %v4891
        %v4956 = vsub.f32 0.0, %v4892
        %v4957 = vsub.f32 0.0, %v4893
        %4958 = vst [vmem:[%s435] sm:$0xff] %v4942
        %4959 = vst [vmem:[%s435 + $0x8] sm:$0xff] %v4943
        %4960 = vst [vmem:[%s435 + $0x10] sm:$0xff] %v4944
        %4961 = vst [vmem:[%s435 + $0x18] sm:$0xff] %v4945
        %4962 = vst [vmem:[%s435 + $0x20] sm:$0xff] %v4946
        %4963 = vst [vmem:[%s435 + $0x28] sm:$0xff] %v4947
        %4964 = vst [vmem:[%s435 + $0x30] sm:$0xff] %v4948
        %4965 = vst [vmem:[%s435 + $0x38] sm:$0xff] %v4949
        %4966 = vst [vmem:[%s435 + $0x40] sm:$0xff] %v4950
        %4967 = vst [vmem:[%s435 + $0x48] sm:$0xff] %v4951
        %4968 = vst [vmem:[%s435 + $0x50] sm:$0xff] %v4952
        %4969 = vst [vmem:[%s435 + $0x58] sm:$0xff] %v4953
        %4970 = vst [vmem:[%s435 + $0x60] sm:$0xff] %v4954
        %4971 = vst [vmem:[%s435 + $0x68] sm:$0xff] %v4955
        %4972 = vst [vmem:[%s435 + $0x70] sm:$0xff] %v4956
        %4973 = vst [vmem:[%s435 + $0x78] sm:$0xff] %v4957
        %p4974 = scmp.lt.s32.totalorder %s27, 1
        %s4975 = scalar_select %p4974, %s27, 1
        %s4976 = smul.addr %s4975, 16
        %s4977 = smul.addr %s4976, 8
        %s4978 = scalar_lea.vmem %s7, %s4977
        %p4979 = scmp.lt.s32.totalorder %s27, 1
        %s4980 = scalar_select %p4979, %s27, 1
        %s4981 = smul.addr %s4980, 16
        %s4982 = smul.addr %s4981, 8
        %s4983 = scalar_lea.vmem %s8, %s4982
        // Predicated region
        $region73: #{optical_forward.1} parent=47 // pred_check
          %p4984 = pneg %p202
        $region74: #{optical_forward.1} parent=47 // pred_check_branch
          %4986 = sbr.rel (%p4984) target = $region76
        $region75: #{optical_forward.1} parent=47 // pred_region
          _
        $region76: #{optical_forward.1} parent=47 // pred_fallthru
          _
        // Predicated region
        $region77: #{optical_forward.1} parent=47 // pred_check
          %p4987 = pneg %p228
        $region78: #{optical_forward.1} parent=47 // pred_check_branch
          %4989 = sbr.rel (%p4987) target = $region80
        $region79: #{optical_forward.1} parent=47 // pred_region
          _
        $region80: #{optical_forward.1} parent=47 // pred_fallthru
          _
      $region48: #{optical_forward.1} parent=5 // pred_fallthru
        _
      %p4990 = scmp.le.s32.totalorder 2, %s22
      // Predicated region
      $region81: #{optical_forward.1} parent=5 // pred_check
        %p4991 = pneg %p4990
      $region82: #{optical_forward.1} parent=5 // pred_check_branch
        %4993 = sbr.rel (%p4991) target = $region84
      $region83: #{optical_forward.1} parent=5 // pred_region
        %s4994 = ssub.s32 %s22, 2
        // Predicated region
        $region85: #{optical_forward.1} parent=83 // pred_check
          %p4995 = pneg %p208
        $region86: #{optical_forward.1} parent=83 // pred_check_branch
          %4997 = sbr.rel (%p4995) target = $region88
        $region87: #{optical_forward.1} parent=83 // pred_region
          %p4998 = scmp.lt.s32.totalorder %s28, 1
          %s4999 = scalar_select %p4998, %s28, 1
          %s5000 = smul.addr %s4999, 16
          %s5001 = smul.addr %s5000, 8
          %s5002 = scalar_lea.vmem %s7, %s5001
        $region88: #{optical_forward.1} parent=83 // pred_fallthru
          _
        // Predicated region
        $region89: #{optical_forward.1} parent=83 // pred_check
          %p5003 = pneg %p234
        $region90: #{optical_forward.1} parent=83 // pred_check_branch
          %5005 = sbr.rel (%p5003) target = $region92
        $region91: #{optical_forward.1} parent=83 // pred_region
          %p5006 = scmp.lt.s32.totalorder %s28, 1
          %s5007 = scalar_select %p5006, %s28, 1
          %s5008 = smul.addr %s5007, 16
          %s5009 = smul.addr %s5008, 8
          %s5010 = scalar_lea.vmem %s8, %s5009
        $region92: #{optical_forward.1} parent=83 // pred_fallthru
          _
      $region84: #{optical_forward.1} parent=5 // pred_fallthru
        _
    $region6: #{optical_forward.1} parent=1 // loop_footer
      %s26 = sadd.s32 1, %s22
    $region7: #{optical_forward.1} parent=1 // loop_footer_branch
      %21 = sbr.rel target = $region3
    $region8: #{optical_forward.1} parent=1 // loop_exit
      _
    %5011 = vsyncpa [#allocation4], 1
    %s5012 = scalar_lea.sflag [#allocation4], 1
    %5013 = vsyncpa %s5012, 1
    %5014 = vsyncpa [#allocation6], 1
    %s5015 = scalar_lea.sflag [#allocation6], 1
    %5016 = vsyncpa %s5015, 1
    %5017 = vsyncpa [#allocation9], 1
    %5018 = vsyncpa [#allocation12], 1

</llo_original>
